<compile_context>
chip_gen: v7x
topology: tpu7x:2x2x1
jax: 0.10.0
libtpu: 0.0.40
codegen_flags: <defaults>
</compile_context>

<pallas_src>
import functools

import jax
import jax.numpy as jnp
from jax import lax
from jax.experimental import pallas as pl
from jax.experimental.pallas import tpu as pltpu


def _lane_shift(a, s):
    """out[..., l] = a[..., l + s] if 0 <= l + s < L else 0 (static shift s)."""
    if s == 0:
        return a
    L = a.shape[-1]
    pad = jnp.zeros(a.shape[:-1] + (min(abs(s), L),), a.dtype)
    if abs(s) >= L:
        return pad
    if s > 0:
        return jnp.concatenate([a[..., s:], pad], axis=-1)
    return jnp.concatenate([pad, a[..., :s]], axis=-1)


def _fused_dwconv_kernel(x_ref, wdw_ref, bdw_ref, wpw_ref, bpw_ref, o_ref,
                         *, C, Co, D, H, W):
    # x_ref  : (C, D, H*W)   VMEM  one batch element, lane axis = H*W
    # wdw_ref: (C*27,)       SMEM  depthwise 3x3x3 weights, index c*27 + kd*9 + kh*3 + kw
    # bdw_ref: (C,)          SMEM
    # wpw_ref: (Co*C,)       SMEM  pointwise 1x1x1 weights, index co*C + c
    # bpw_ref: (Co,)         SMEM
    # o_ref  : (Co, D, H*W)  VMEM
    L = H * W
    f32 = jnp.float32

    # Hoisted constants: W-boundary lane masks (row crossings in the flattened H*W axis)
    # and a zero row for the D halo.  H boundaries are handled by the zero-fill shift.
    w_idx = lax.broadcasted_iota(jnp.int32, (1, L), 1) % W
    mask_w = {
        0: (w_idx >= 1).astype(f32),       # tap reads w-1: invalid at w == 0
        1: None,                           # tap reads w  : always valid
        2: (w_idx <= W - 2).astype(f32),   # tap reads w+1: invalid at w == W-1
    }
    zrow = jnp.zeros((1, L), f32)

    xs = [x_ref[c] for c in range(C)]                  # C loads of (D, L)
    acc = [jnp.zeros((D, L), f32) for _ in range(C)]   # tiny accumulators (stay in vregs)

    # Depthwise 3x3x3 conv, 27 taps, fully unrolled.
    for kh in range(3):
        for kw in range(3):
            s = (kh - 1) * W + (kw - 1)                # lane shift of the flattened H*W axis
            for c in range(C):
                base = _lane_shift(xs[c], s)
                if mask_w[kw] is not None:
                    base = base * mask_w[kw]
                tap = (
                    jnp.concatenate([zrow, base[:D - 1, :]], axis=0),  # kd=0: reads d-1
                    base,                                              # kd=1: reads d
                    jnp.concatenate([base[1:, :], zrow], axis=0),      # kd=2: reads d+1
                )
                for kd in range(3):
                    w_s = wdw_ref[c * 27 + kd * 9 + kh * 3 + kw]       # SMEM scalar weight
                    acc[c] = acc[c] + tap[kd] * w_s

    for c in range(C):
        acc[c] = acc[c] + bdw_ref[c]                   # depthwise bias

    # Pointwise 1x1x1 conv: K=C contraction as VPU scalar FMAs (MXU would be <1% utilized).
    for co in range(Co):
        out = jnp.zeros((D, L), f32) + bpw_ref[co]
        for c in range(C):
            out = out + acc[c] * wpw_ref[co * C + c]   # SMEM scalar weight
        o_ref[co] = out.astype(o_ref.dtype)


def depthwise_conv_forward(x_ncdhw, w_dw, b_dw, w_pw, b_pw):
    """Forward of DepthWiseConv.

    x_ncdhw: (N, C, D, H, W) f32   (PyTorch NCDHW)
    w_dw:    (C, 1, 3, 3, 3), b_dw: (C,)      depthwise Conv3d params
    w_pw:    (Co, C, 1, 1, 1), b_pw: (Co,)    pointwise Conv3d params
    returns: (N, Co, D, H, W) f32
    """
    N, C, D, H, W = x_ncdhw.shape
    Co = w_pw.shape[0]
    L = H * W

    # Free (contiguous) reshape: lane axis = H*W -> dense vregs / dense vst.
    x = x_ncdhw.reshape(N, C, D, L).astype(jnp.float32)
    wdw = w_dw.reshape(C * 27).astype(jnp.float32)
    bdw = b_dw.reshape(C).astype(jnp.float32)
    wpw = w_pw.reshape(Co * C).astype(jnp.float32)
    bpw = b_pw.reshape(Co).astype(jnp.float32)

    kernel = functools.partial(_fused_dwconv_kernel, C=C, Co=Co, D=D, H=H, W=W)
    smem = pl.BlockSpec(memory_space=pltpu.MemorySpace.SMEM)

    out = pl.pallas_call(
        kernel,
        out_shape=jax.ShapeDtypeStruct((N, Co, D, L), jnp.float32),
        grid=(N,),
        in_specs=[
            pl.BlockSpec((None, C, D, L), lambda n: (n, 0, 0, 0)),
            smem, smem, smem, smem,
        ],
        out_specs=pl.BlockSpec((None, Co, D, L), lambda n: (n, 0, 0, 0)),
        compiler_params=pltpu.CompilerParams(
            dimension_semantics=("parallel",),   # v7x: the two TensorCores split the batch
        ),
    )(x, wdw, bdw, wpw, bpw)

    # TODO(synk): for production-size D/H/W/C add a D-tile grid axis with a 1-row halo
    # (and tile Co) so per-step blocks stay inside v7x's 64 MiB VMEM.
    return out.reshape(N, Co, D, H, W)


def _reference(x, w_dw, b_dw, w_pw, b_pw):
    """Pure-JAX reference matching PyTorch Conv3d semantics (NCDHW)."""
    dn = lax.conv_dimension_numbers(x.shape, w_dw.shape, ("NCDHW", "OIDHW", "NCDHW"))
    out = lax.conv_general_dilated(
        x, w_dw, (1, 1, 1), [(1, 1)] * 3,
        dimension_numbers=dn, feature_group_count=x.shape[1],
    ) + b_dw.reshape(1, -1, 1, 1, 1)
    dn2 = lax.conv_dimension_numbers(out.shape, w_pw.shape, ("NCDHW", "OIDHW", "NCDHW"))
    out = lax.conv_general_dilated(
        out, w_pw, (1, 1, 1), [(0, 0)] * 3, dimension_numbers=dn2,
    ) + b_pw.reshape(1, -1, 1, 1, 1)
    return out


if __name__ == "__main__":
    # Module defaults: in_channel=3, out_channel=24; H*W = 128 -> lane-dense.
    N, Cin, Cout = 2, 3, 24
    D, H, W = 4, 8, 16

    key = jax.random.PRNGKey(0)
    k_x, k_wd, k_bd, k_wp, k_bp = jax.random.split(key, 5)

    x = jax.random.normal(k_x, (N, Cin, D, H, W), jnp.float32)
    w_dw = 0.1 * jax.random.normal(k_wd, (Cin, 1, 3, 3, 3), jnp.float32)
    b_dw = 0.1 * jax.random.normal(k_bd, (Cin,), jnp.float32)
    w_pw = 0.1 * jax.random.normal(k_wp, (Cout, Cin, 1, 1, 1), jnp.float32)
    b_pw = 0.1 * jax.random.normal(k_bp, (Cout,), jnp.float32)

    out = jax.block_until_ready(depthwise_conv_forward(x, w_dw, b_dw, w_pw, b_pw))
    ref = jax.block_until_ready(_reference(x, w_dw, b_dw, w_pw, b_pw))

    assert out.shape == (N, Cout, D, H, W), out.shape
    max_err = float(jnp.max(jnp.abs(out - ref)))
    if max_err > 1e-3:
        raise RuntimeError(f"mismatch vs reference, max abs err = {max_err}")

    print("KERNEL_OK")
</pallas_src>

<mosaic_0001>
module attributes {stable_mosaic.version = 11 : i64} {
  func.func @_fused_dwconv_kernel(%arg0: i32, %arg1: memref<1x3x4x128xf32, #tpu.memory_space<vmem>>, %arg2: memref<81xf32, #tpu.memory_space<smem>>, %arg3: memref<3xf32, #tpu.memory_space<smem>>, %arg4: memref<72xf32, #tpu.memory_space<smem>>, %arg5: memref<24xf32, #tpu.memory_space<smem>>, %arg6: memref<1x24x4x128xf32, #tpu.memory_space<vmem>>) attributes {dimension_semantics = [#tpu.dimension_semantics<parallel>], iteration_bounds = array<i64: 2>, scalar_prefetch = 0 : i64, scratch_operands = 0 : i64, tpu.core_type = #tpu.core_type<tc>, window_params = [{transform_indices = @transform_0, window_bounds = array<i64: 1, 3, 4, 128>}, {transform_indices = @transform_1, window_bounds = array<i64: 81>}, {transform_indices = @transform_2, window_bounds = array<i64: 3>}, {transform_indices = @transform_3, window_bounds = array<i64: 72>}, {transform_indices = @transform_4, window_bounds = array<i64: 24>}, {transform_indices = @transform_5, window_bounds = array<i64: 1, 24, 4, 128>}]} {
    %0 = tpu.iota {dimensions = array<i32: 1>} : vector<1x128xi32>
    %c16_i32 = arith.constant 16 : i32
    %c0_i32 = arith.constant 0 : i32
    %1 = arith.cmpi eq, %c16_i32, %c0_i32 : i32
    %c1_i32 = arith.constant 1 : i32
    %2 = arith.select %1, %c1_i32, %c16_i32 : i32
    %3 = vector.broadcast %2 : i32 to vector<1x128xi32>
    %4 = arith.remsi %0, %3 : vector<1x128xi32>
    %c0_i32_0 = arith.constant 0 : i32
    %5 = vector.broadcast %c0_i32_0 : i32 to vector<1x128xi32>
    %6 = arith.cmpi ne, %4, %5 : vector<1x128xi32>
    %c0_i32_1 = arith.constant 0 : i32
    %7 = vector.broadcast %c0_i32_1 : i32 to vector<1x128xi32>
    %8 = arith.cmpi slt, %4, %7 : vector<1x128xi32>
    %c0_i32_2 = arith.constant 0 : i32
    %9 = arith.cmpi slt, %2, %c0_i32_2 : i32
    %10 = vector.broadcast %9 : i1 to vector<1x128xi1>
    %11 = vector.broadcast %10 : vector<1x128xi1> to vector<1x128xi1>
    %12 = arith.xori %8, %11 : vector<1x128xi1>
    %13 = arith.andi %12, %6 : vector<1x128xi1>
    %14 = vector.broadcast %2 : i32 to vector<1x128xi32>
    %15 = arith.addi %4, %14 : vector<1x128xi32>
    %16 = arith.select %13, %15, %4 : vector<1x128xi1>, vector<1x128xi32>
    %c1_i32_3 = arith.constant 1 : i32
    %17 = vector.broadcast %c1_i32_3 : i32 to vector<1x128xi32>
    %18 = arith.cmpi sge, %16, %17 : vector<1x128xi32>
    %19 = arith.extui %18 : vector<1x128xi1> to vector<1x128xi32>
    %20 = arith.sitofp %19 : vector<1x128xi32> to vector<1x128xf32>
    %c14_i32 = arith.constant 14 : i32
    %21 = vector.broadcast %c14_i32 : i32 to vector<1x128xi32>
    %22 = arith.cmpi sle, %16, %21 : vector<1x128xi32>
    %23 = arith.extui %22 : vector<1x128xi1> to vector<1x128xi32>
    %24 = arith.sitofp %23 : vector<1x128xi32> to vector<1x128xf32>
    %cst = arith.constant 0.000000e+00 : f32
    %25 = vector.broadcast %cst : f32 to vector<1x128xf32>
    %c0 = arith.constant 0 : index
    %c0_4 = arith.constant 0 : index
    %c0_5 = arith.constant 0 : index
    %c0_6 = arith.constant 0 : index
    %26 = vector.load %arg1[%c0, %c0_4, %c0_5, %c0_6] : memref<1x3x4x128xf32, #tpu.memory_space<vmem>>, vector<1x1x4x128xf32>
    %27 = vector.shape_cast %26 : vector<1x1x4x128xf32> to vector<4x128xf32>
    %c0_7 = arith.constant 0 : index
    %c1 = arith.constant 1 : index
    %c0_8 = arith.constant 0 : index
    %c0_9 = arith.constant 0 : index
    %28 = vector.load %arg1[%c0_7, %c1, %c0_8, %c0_9] : memref<1x3x4x128xf32, #tpu.memory_space<vmem>>, vector<1x1x4x128xf32>
    %29 = vector.shape_cast %28 : vector<1x1x4x128xf32> to vector<4x128xf32>
    %c0_10 = arith.constant 0 : index
    %c2 = arith.constant 2 : index
    %c0_11 = arith.constant 0 : index
    %c0_12 = arith.constant 0 : index
    %30 = vector.load %arg1[%c0_10, %c2, %c0_11, %c0_12] : memref<1x3x4x128xf32, #tpu.memory_space<vmem>>, vector<1x1x4x128xf32>
    %31 = vector.shape_cast %30 : vector<1x1x4x128xf32> to vector<4x128xf32>
    %cst_13 = arith.constant 0.000000e+00 : f32
    %32 = vector.broadcast %cst_13 : f32 to vector<4x128xf32>
    %cst_14 = arith.constant 0.000000e+00 : f32
    %33 = vector.broadcast %cst_14 : f32 to vector<4x128xf32>
    %cst_15 = arith.constant 0.000000e+00 : f32
    %34 = vector.broadcast %cst_15 : f32 to vector<4x128xf32>
    %cst_16 = arith.constant 0.000000e+00 : f32
    %35 = vector.broadcast %cst_16 : f32 to vector<4x17xf32>
    %36 = vector.extract_strided_slice %27 {offsets = [0, 0], sizes = [4, 111], strides = [1, 1]} : vector<4x128xf32> to vector<4x111xf32>
    %37 = tpu.concatenate %35, %36 in 1 : vector<4x17xf32>, vector<4x111xf32> -> vector<4x128xf32>
    %38 = vector.broadcast %20 : vector<1x128xf32> to vector<4x128xf32>
    %39 = arith.mulf %37, %38 : vector<4x128xf32>
    %40 = vector.extract_strided_slice %39 {offsets = [0, 0], sizes = [3, 128], strides = [1, 1]} : vector<4x128xf32> to vector<3x128xf32>
    %41 = tpu.concatenate %25, %40 in 0 : vector<1x128xf32>, vector<3x128xf32> -> vector<4x128xf32>
    %42 = vector.extract_strided_slice %39 {offsets = [1, 0], sizes = [3, 128], strides = [1, 1]} : vector<4x128xf32> to vector<3x128xf32>
    %43 = tpu.concatenate %42, %25 in 0 : vector<3x128xf32>, vector<1x128xf32> -> vector<4x128xf32>
    %c0_17 = arith.constant 0 : index
    %44 = memref.load %arg2[%c0_17] : memref<81xf32, #tpu.memory_space<smem>>
    %45 = vector.broadcast %44 : f32 to vector<4x128xf32>
    %46 = arith.mulf %41, %45 : vector<4x128xf32>
    %47 = arith.addf %32, %46 : vector<4x128xf32>
    %c9 = arith.constant 9 : index
    %48 = memref.load %arg2[%c9] : memref<81xf32, #tpu.memory_space<smem>>
    %49 = vector.broadcast %48 : f32 to vector<4x128xf32>
    %50 = arith.mulf %39, %49 : vector<4x128xf32>
    %51 = arith.addf %47, %50 : vector<4x128xf32>
    %c18 = arith.constant 18 : index
    %52 = memref.load %arg2[%c18] : memref<81xf32, #tpu.memory_space<smem>>
    %53 = vector.broadcast %52 : f32 to vector<4x128xf32>
    %54 = arith.mulf %43, %53 : vector<4x128xf32>
    %55 = arith.addf %51, %54 : vector<4x128xf32>
    %cst_18 = arith.constant 0.000000e+00 : f32
    %56 = vector.broadcast %cst_18 : f32 to vector<4x17xf32>
    %57 = vector.extract_strided_slice %29 {offsets = [0, 0], sizes = [4, 111], strides = [1, 1]} : vector<4x128xf32> to vector<4x111xf32>
    %58 = tpu.concatenate %56, %57 in 1 : vector<4x17xf32>, vector<4x111xf32> -> vector<4x128xf32>
    %59 = vector.broadcast %20 : vector<1x128xf32> to vector<4x128xf32>
    %60 = arith.mulf %58, %59 : vector<4x128xf32>
    %61 = vector.extract_strided_slice %60 {offsets = [0, 0], sizes = [3, 128], strides = [1, 1]} : vector<4x128xf32> to vector<3x128xf32>
    %62 = tpu.concatenate %25, %61 in 0 : vector<1x128xf32>, vector<3x128xf32> -> vector<4x128xf32>
    %63 = vector.extract_strided_slice %60 {offsets = [1, 0], sizes = [3, 128], strides = [1, 1]} : vector<4x128xf32> to vector<3x128xf32>
    %64 = tpu.concatenate %63, %25 in 0 : vector<3x128xf32>, vector<1x128xf32> -> vector<4x128xf32>
    %c27 = arith.constant 27 : index
    %65 = memref.load %arg2[%c27] : memref<81xf32, #tpu.memory_space<smem>>
    %66 = vector.broadcast %65 : f32 to vector<4x128xf32>
    %67 = arith.mulf %62, %66 : vector<4x128xf32>
    %68 = arith.addf %33, %67 : vector<4x128xf32>
    %c36 = arith.constant 36 : index
    %69 = memref.load %arg2[%c36] : memref<81xf32, #tpu.memory_space<smem>>
    %70 = vector.broadcast %69 : f32 to vector<4x128xf32>
    %71 = arith.mulf %60, %70 : vector<4x128xf32>
    %72 = arith.addf %68, %71 : vector<4x128xf32>
    %c45 = arith.constant 45 : index
    %73 = memref.load %arg2[%c45] : memref<81xf32, #tpu.memory_space<smem>>
    %74 = vector.broadcast %73 : f32 to vector<4x128xf32>
    %75 = arith.mulf %64, %74 : vector<4x128xf32>
    %76 = arith.addf %72, %75 : vector<4x128xf32>
    %cst_19 = arith.constant 0.000000e+00 : f32
    %77 = vector.broadcast %cst_19 : f32 to vector<4x17xf32>
    %78 = vector.extract_strided_slice %31 {offsets = [0, 0], sizes = [4, 111], strides = [1, 1]} : vector<4x128xf32> to vector<4x111xf32>
    %79 = tpu.concatenate %77, %78 in 1 : vector<4x17xf32>, vector<4x111xf32> -> vector<4x128xf32>
    %80 = vector.broadcast %20 : vector<1x128xf32> to vector<4x128xf32>
    %81 = arith.mulf %79, %80 : vector<4x128xf32>
    %82 = vector.extract_strided_slice %81 {offsets = [0, 0], sizes = [3, 128], strides = [1, 1]} : vector<4x128xf32> to vector<3x128xf32>
    %83 = tpu.concatenate %25, %82 in 0 : vector<1x128xf32>, vector<3x128xf32> -> vector<4x128xf32>
    %84 = vector.extract_strided_slice %81 {offsets = [1, 0], sizes = [3, 128], strides = [1, 1]} : vector<4x128xf32> to vector<3x128xf32>
    %85 = tpu.concatenate %84, %25 in 0 : vector<3x128xf32>, vector<1x128xf32> -> vector<4x128xf32>
    %c54 = arith.constant 54 : index
    %86 = memref.load %arg2[%c54] : memref<81xf32, #tpu.memory_space<smem>>
    %87 = vector.broadcast %86 : f32 to vector<4x128xf32>
    %88 = arith.mulf %83, %87 : vector<4x128xf32>
    %89 = arith.addf %34, %88 : vector<4x128xf32>
    %c63 = arith.constant 63 : index
    %90 = memref.load %arg2[%c63] : memref<81xf32, #tpu.memory_space<smem>>
    %91 = vector.broadcast %90 : f32 to vector<4x128xf32>
    %92 = arith.mulf %81, %91 : vector<4x128xf32>
    %93 = arith.addf %89, %92 : vector<4x128xf32>
    %c72 = arith.constant 72 : index
    %94 = memref.load %arg2[%c72] : memref<81xf32, #tpu.memory_space<smem>>
    %95 = vector.broadcast %94 : f32 to vector<4x128xf32>
    %96 = arith.mulf %85, %95 : vector<4x128xf32>
    %97 = arith.addf %93, %96 : vector<4x128xf32>
    %cst_20 = arith.constant 0.000000e+00 : f32
    %98 = vector.broadcast %cst_20 : f32 to vector<4x16xf32>
    %99 = vector.extract_strided_slice %27 {offsets = [0, 0], sizes = [4, 112], strides = [1, 1]} : vector<4x128xf32> to vector<4x112xf32>
    %100 = tpu.concatenate %98, %99 in 1 : vector<4x16xf32>, vector<4x112xf32> -> vector<4x128xf32>
    %101 = vector.extract_strided_slice %100 {offsets = [0, 0], sizes = [3, 128], strides = [1, 1]} : vector<4x128xf32> to vector<3x128xf32>
    %102 = tpu.concatenate %25, %101 in 0 : vector<1x128xf32>, vector<3x128xf32> -> vector<4x128xf32>
    %103 = vector.extract_strided_slice %100 {offsets = [1, 0], sizes = [3, 128], strides = [1, 1]} : vector<4x128xf32> to vector<3x128xf32>
    %104 = tpu.concatenate %103, %25 in 0 : vector<3x128xf32>, vector<1x128xf32> -> vector<4x128xf32>
    %c1_21 = arith.constant 1 : index
    %105 = memref.load %arg2[%c1_21] : memref<81xf32, #tpu.memory_space<smem>>
    %106 = vector.broadcast %105 : f32 to vector<4x128xf32>
    %107 = arith.mulf %102, %106 : vector<4x128xf32>
    %108 = arith.addf %55, %107 : vector<4x128xf32>
    %c10 = arith.constant 10 : index
    %109 = memref.load %arg2[%c10] : memref<81xf32, #tpu.memory_space<smem>>
    %110 = vector.broadcast %109 : f32 to vector<4x128xf32>
    %111 = arith.mulf %100, %110 : vector<4x128xf32>
    %112 = arith.addf %108, %111 : vector<4x128xf32>
    %c19 = arith.constant 19 : index
    %113 = memref.load %arg2[%c19] : memref<81xf32, #tpu.memory_space<smem>>
    %114 = vector.broadcast %113 : f32 to vector<4x128xf32>
    %115 = arith.mulf %104, %114 : vector<4x128xf32>
    %116 = arith.addf %112, %115 : vector<4x128xf32>
    %cst_22 = arith.constant 0.000000e+00 : f32
    %117 = vector.broadcast %cst_22 : f32 to vector<4x16xf32>
    %118 = vector.extract_strided_slice %29 {offsets = [0, 0], sizes = [4, 112], strides = [1, 1]} : vector<4x128xf32> to vector<4x112xf32>
    %119 = tpu.concatenate %117, %118 in 1 : vector<4x16xf32>, vector<4x112xf32> -> vector<4x128xf32>
    %120 = vector.extract_strided_slice %119 {offsets = [0, 0], sizes = [3, 128], strides = [1, 1]} : vector<4x128xf32> to vector<3x128xf32>
    %121 = tpu.concatenate %25, %120 in 0 : vector<1x128xf32>, vector<3x128xf32> -> vector<4x128xf32>
    %122 = vector.extract_strided_slice %119 {offsets = [1, 0], sizes = [3, 128], strides = [1, 1]} : vector<4x128xf32> to vector<3x128xf32>
    %123 = tpu.concatenate %122, %25 in 0 : vector<3x128xf32>, vector<1x128xf32> -> vector<4x128xf32>
    %c28 = arith.constant 28 : index
    %124 = memref.load %arg2[%c28] : memref<81xf32, #tpu.memory_space<smem>>
    %125 = vector.broadcast %124 : f32 to vector<4x128xf32>
    %126 = arith.mulf %121, %125 : vector<4x128xf32>
    %127 = arith.addf %76, %126 : vector<4x128xf32>
    %c37 = arith.constant 37 : index
    %128 = memref.load %arg2[%c37] : memref<81xf32, #tpu.memory_space<smem>>
    %129 = vector.broadcast %128 : f32 to vector<4x128xf32>
    %130 = arith.mulf %119, %129 : vector<4x128xf32>
    %131 = arith.addf %127, %130 : vector<4x128xf32>
    %c46 = arith.constant 46 : index
    %132 = memref.load %arg2[%c46] : memref<81xf32, #tpu.memory_space<smem>>
    %133 = vector.broadcast %132 : f32 to vector<4x128xf32>
    %134 = arith.mulf %123, %133 : vector<4x128xf32>
    %135 = arith.addf %131, %134 : vector<4x128xf32>
    %cst_23 = arith.constant 0.000000e+00 : f32
    %136 = vector.broadcast %cst_23 : f32 to vector<4x16xf32>
    %137 = vector.extract_strided_slice %31 {offsets = [0, 0], sizes = [4, 112], strides = [1, 1]} : vector<4x128xf32> to vector<4x112xf32>
    %138 = tpu.concatenate %136, %137 in 1 : vector<4x16xf32>, vector<4x112xf32> -> vector<4x128xf32>
    %139 = vector.extract_strided_slice %138 {offsets = [0, 0], sizes = [3, 128], strides = [1, 1]} : vector<4x128xf32> to vector<3x128xf32>
    %140 = tpu.concatenate %25, %139 in 0 : vector<1x128xf32>, vector<3x128xf32> -> vector<4x128xf32>
    %141 = vector.extract_strided_slice %138 {offsets = [1, 0], sizes = [3, 128], strides = [1, 1]} : vector<4x128xf32> to vector<3x128xf32>
    %142 = tpu.concatenate %141, %25 in 0 : vector<3x128xf32>, vector<1x128xf32> -> vector<4x128xf32>
    %c55 = arith.constant 55 : index
    %143 = memref.load %arg2[%c55] : memref<81xf32, #tpu.memory_space<smem>>
    %144 = vector.broadcast %143 : f32 to vector<4x128xf32>
    %145 = arith.mulf %140, %144 : vector<4x128xf32>
    %146 = arith.addf %97, %145 : vector<4x128xf32>
    %c64 = arith.constant 64 : index
    %147 = memref.load %arg2[%c64] : memref<81xf32, #tpu.memory_space<smem>>
    %148 = vector.broadcast %147 : f32 to vector<4x128xf32>
    %149 = arith.mulf %138, %148 : vector<4x128xf32>
    %150 = arith.addf %146, %149 : vector<4x128xf32>
    %c73 = arith.constant 73 : index
    %151 = memref.load %arg2[%c73] : memref<81xf32, #tpu.memory_space<smem>>
    %152 = vector.broadcast %151 : f32 to vector<4x128xf32>
    %153 = arith.mulf %142, %152 : vector<4x128xf32>
    %154 = arith.addf %150, %153 : vector<4x128xf32>
    %cst_24 = arith.constant 0.000000e+00 : f32
    %155 = vector.broadcast %cst_24 : f32 to vector<4x15xf32>
    %156 = vector.extract_strided_slice %27 {offsets = [0, 0], sizes = [4, 113], strides = [1, 1]} : vector<4x128xf32> to vector<4x113xf32>
    %157 = tpu.concatenate %155, %156 in 1 : vector<4x15xf32>, vector<4x113xf32> -> vector<4x128xf32>
    %158 = vector.broadcast %24 : vector<1x128xf32> to vector<4x128xf32>
    %159 = arith.mulf %157, %158 : vector<4x128xf32>
    %160 = vector.extract_strided_slice %159 {offsets = [0, 0], sizes = [3, 128], strides = [1, 1]} : vector<4x128xf32> to vector<3x128xf32>
    %161 = tpu.concatenate %25, %160 in 0 : vector<1x128xf32>, vector<3x128xf32> -> vector<4x128xf32>
    %162 = vector.extract_strided_slice %159 {offsets = [1, 0], sizes = [3, 128], strides = [1, 1]} : vector<4x128xf32> to vector<3x128xf32>
    %163 = tpu.concatenate %162, %25 in 0 : vector<3x128xf32>, vector<1x128xf32> -> vector<4x128xf32>
    %c2_25 = arith.constant 2 : index
    %164 = memref.load %arg2[%c2_25] : memref<81xf32, #tpu.memory_space<smem>>
    %165 = vector.broadcast %164 : f32 to vector<4x128xf32>
    %166 = arith.mulf %161, %165 : vector<4x128xf32>
    %167 = arith.addf %116, %166 : vector<4x128xf32>
    %c11 = arith.constant 11 : index
    %168 = memref.load %arg2[%c11] : memref<81xf32, #tpu.memory_space<smem>>
    %169 = vector.broadcast %168 : f32 to vector<4x128xf32>
    %170 = arith.mulf %159, %169 : vector<4x128xf32>
    %171 = arith.addf %167, %170 : vector<4x128xf32>
    %c20 = arith.constant 20 : index
    %172 = memref.load %arg2[%c20] : memref<81xf32, #tpu.memory_space<smem>>
    %173 = vector.broadcast %172 : f32 to vector<4x128xf32>
    %174 = arith.mulf %163, %173 : vector<4x128xf32>
    %175 = arith.addf %171, %174 : vector<4x128xf32>
    %cst_26 = arith.constant 0.000000e+00 : f32
    %176 = vector.broadcast %cst_26 : f32 to vector<4x15xf32>
    %177 = vector.extract_strided_slice %29 {offsets = [0, 0], sizes = [4, 113], strides = [1, 1]} : vector<4x128xf32> to vector<4x113xf32>
    %178 = tpu.concatenate %176, %177 in 1 : vector<4x15xf32>, vector<4x113xf32> -> vector<4x128xf32>
    %179 = vector.broadcast %24 : vector<1x128xf32> to vector<4x128xf32>
    %180 = arith.mulf %178, %179 : vector<4x128xf32>
    %181 = vector.extract_strided_slice %180 {offsets = [0, 0], sizes = [3, 128], strides = [1, 1]} : vector<4x128xf32> to vector<3x128xf32>
    %182 = tpu.concatenate %25, %181 in 0 : vector<1x128xf32>, vector<3x128xf32> -> vector<4x128xf32>
    %183 = vector.extract_strided_slice %180 {offsets = [1, 0], sizes = [3, 128], strides = [1, 1]} : vector<4x128xf32> to vector<3x128xf32>
    %184 = tpu.concatenate %183, %25 in 0 : vector<3x128xf32>, vector<1x128xf32> -> vector<4x128xf32>
    %c29 = arith.constant 29 : index
    %185 = memref.load %arg2[%c29] : memref<81xf32, #tpu.memory_space<smem>>
    %186 = vector.broadcast %185 : f32 to vector<4x128xf32>
    %187 = arith.mulf %182, %186 : vector<4x128xf32>
    %188 = arith.addf %135, %187 : vector<4x128xf32>
    %c38 = arith.constant 38 : index
    %189 = memref.load %arg2[%c38] : memref<81xf32, #tpu.memory_space<smem>>
    %190 = vector.broadcast %189 : f32 to vector<4x128xf32>
    %191 = arith.mulf %180, %190 : vector<4x128xf32>
    %192 = arith.addf %188, %191 : vector<4x128xf32>
    %c47 = arith.constant 47 : index
    %193 = memref.load %arg2[%c47] : memref<81xf32, #tpu.memory_space<smem>>
    %194 = vector.broadcast %193 : f32 to vector<4x128xf32>
    %195 = arith.mulf %184, %194 : vector<4x128xf32>
    %196 = arith.addf %192, %195 : vector<4x128xf32>
    %cst_27 = arith.constant 0.000000e+00 : f32
    %197 = vector.broadcast %cst_27 : f32 to vector<4x15xf32>
    %198 = vector.extract_strided_slice %31 {offsets = [0, 0], sizes = [4, 113], strides = [1, 1]} : vector<4x128xf32> to vector<4x113xf32>
    %199 = tpu.concatenate %197, %198 in 1 : vector<4x15xf32>, vector<4x113xf32> -> vector<4x128xf32>
    %200 = vector.broadcast %24 : vector<1x128xf32> to vector<4x128xf32>
    %201 = arith.mulf %199, %200 : vector<4x128xf32>
    %202 = vector.extract_strided_slice %201 {offsets = [0, 0], sizes = [3, 128], strides = [1, 1]} : vector<4x128xf32> to vector<3x128xf32>
    %203 = tpu.concatenate %25, %202 in 0 : vector<1x128xf32>, vector<3x128xf32> -> vector<4x128xf32>
    %204 = vector.extract_strided_slice %201 {offsets = [1, 0], sizes = [3, 128], strides = [1, 1]} : vector<4x128xf32> to vector<3x128xf32>
    %205 = tpu.concatenate %204, %25 in 0 : vector<3x128xf32>, vector<1x128xf32> -> vector<4x128xf32>
    %c56 = arith.constant 56 : index
    %206 = memref.load %arg2[%c56] : memref<81xf32, #tpu.memory_space<smem>>
    %207 = vector.broadcast %206 : f32 to vector<4x128xf32>
    %208 = arith.mulf %203, %207 : vector<4x128xf32>
    %209 = arith.addf %154, %208 : vector<4x128xf32>
    %c65 = arith.constant 65 : index
    %210 = memref.load %arg2[%c65] : memref<81xf32, #tpu.memory_space<smem>>
    %211 = vector.broadcast %210 : f32 to vector<4x128xf32>
    %212 = arith.mulf %201, %211 : vector<4x128xf32>
    %213 = arith.addf %209, %212 : vector<4x128xf32>
    %c74 = arith.constant 74 : index
    %214 = memref.load %arg2[%c74] : memref<81xf32, #tpu.memory_space<smem>>
    %215 = vector.broadcast %214 : f32 to vector<4x128xf32>
    %216 = arith.mulf %205, %215 : vector<4x128xf32>
    %217 = arith.addf %213, %216 : vector<4x128xf32>
    %cst_28 = arith.constant 0.000000e+00 : f32
    %218 = vector.broadcast %cst_28 : f32 to vector<4x1xf32>
    %219 = vector.extract_strided_slice %27 {offsets = [0, 0], sizes = [4, 127], strides = [1, 1]} : vector<4x128xf32> to vector<4x127xf32>
    %220 = tpu.concatenate %218, %219 in 1 : vector<4x1xf32>, vector<4x127xf32> -> vector<4x128xf32>
    %221 = vector.broadcast %20 : vector<1x128xf32> to vector<4x128xf32>
    %222 = arith.mulf %220, %221 : vector<4x128xf32>
    %223 = vector.extract_strided_slice %222 {offsets = [0, 0], sizes = [3, 128], strides = [1, 1]} : vector<4x128xf32> to vector<3x128xf32>
    %224 = tpu.concatenate %25, %223 in 0 : vector<1x128xf32>, vector<3x128xf32> -> vector<4x128xf32>
    %225 = vector.extract_strided_slice %222 {offsets = [1, 0], sizes = [3, 128], strides = [1, 1]} : vector<4x128xf32> to vector<3x128xf32>
    %226 = tpu.concatenate %225, %25 in 0 : vector<3x128xf32>, vector<1x128xf32> -> vector<4x128xf32>
    %c3 = arith.constant 3 : index
    %227 = memref.load %arg2[%c3] : memref<81xf32, #tpu.memory_space<smem>>
    %228 = vector.broadcast %227 : f32 to vector<4x128xf32>
    %229 = arith.mulf %224, %228 : vector<4x128xf32>
    %230 = arith.addf %175, %229 : vector<4x128xf32>
    %c12 = arith.constant 12 : index
    %231 = memref.load %arg2[%c12] : memref<81xf32, #tpu.memory_space<smem>>
    %232 = vector.broadcast %231 : f32 to vector<4x128xf32>
    %233 = arith.mulf %222, %232 : vector<4x128xf32>
    %234 = arith.addf %230, %233 : vector<4x128xf32>
    %c21 = arith.constant 21 : index
    %235 = memref.load %arg2[%c21] : memref<81xf32, #tpu.memory_space<smem>>
    %236 = vector.broadcast %235 : f32 to vector<4x128xf32>
    %237 = arith.mulf %226, %236 : vector<4x128xf32>
    %238 = arith.addf %234, %237 : vector<4x128xf32>
    %cst_29 = arith.constant 0.000000e+00 : f32
    %239 = vector.broadcast %cst_29 : f32 to vector<4x1xf32>
    %240 = vector.extract_strided_slice %29 {offsets = [0, 0], sizes = [4, 127], strides = [1, 1]} : vector<4x128xf32> to vector<4x127xf32>
    %241 = tpu.concatenate %239, %240 in 1 : vector<4x1xf32>, vector<4x127xf32> -> vector<4x128xf32>
    %242 = vector.broadcast %20 : vector<1x128xf32> to vector<4x128xf32>
    %243 = arith.mulf %241, %242 : vector<4x128xf32>
    %244 = vector.extract_strided_slice %243 {offsets = [0, 0], sizes = [3, 128], strides = [1, 1]} : vector<4x128xf32> to vector<3x128xf32>
    %245 = tpu.concatenate %25, %244 in 0 : vector<1x128xf32>, vector<3x128xf32> -> vector<4x128xf32>
    %246 = vector.extract_strided_slice %243 {offsets = [1, 0], sizes = [3, 128], strides = [1, 1]} : vector<4x128xf32> to vector<3x128xf32>
    %247 = tpu.concatenate %246, %25 in 0 : vector<3x128xf32>, vector<1x128xf32> -> vector<4x128xf32>
    %c30 = arith.constant 30 : index
    %248 = memref.load %arg2[%c30] : memref<81xf32, #tpu.memory_space<smem>>
    %249 = vector.broadcast %248 : f32 to vector<4x128xf32>
    %250 = arith.mulf %245, %249 : vector<4x128xf32>
    %251 = arith.addf %196, %250 : vector<4x128xf32>
    %c39 = arith.constant 39 : index
    %252 = memref.load %arg2[%c39] : memref<81xf32, #tpu.memory_space<smem>>
    %253 = vector.broadcast %252 : f32 to vector<4x128xf32>
    %254 = arith.mulf %243, %253 : vector<4x128xf32>
    %255 = arith.addf %251, %254 : vector<4x128xf32>
    %c48 = arith.constant 48 : index
    %256 = memref.load %arg2[%c48] : memref<81xf32, #tpu.memory_space<smem>>
    %257 = vector.broadcast %256 : f32 to vector<4x128xf32>
    %258 = arith.mulf %247, %257 : vector<4x128xf32>
    %259 = arith.addf %255, %258 : vector<4x128xf32>
    %cst_30 = arith.constant 0.000000e+00 : f32
    %260 = vector.broadcast %cst_30 : f32 to vector<4x1xf32>
    %261 = vector.extract_strided_slice %31 {offsets = [0, 0], sizes = [4, 127], strides = [1, 1]} : vector<4x128xf32> to vector<4x127xf32>
    %262 = tpu.concatenate %260, %261 in 1 : vector<4x1xf32>, vector<4x127xf32> -> vector<4x128xf32>
    %263 = vector.broadcast %20 : vector<1x128xf32> to vector<4x128xf32>
    %264 = arith.mulf %262, %263 : vector<4x128xf32>
    %265 = vector.extract_strided_slice %264 {offsets = [0, 0], sizes = [3, 128], strides = [1, 1]} : vector<4x128xf32> to vector<3x128xf32>
    %266 = tpu.concatenate %25, %265 in 0 : vector<1x128xf32>, vector<3x128xf32> -> vector<4x128xf32>
    %267 = vector.extract_strided_slice %264 {offsets = [1, 0], sizes = [3, 128], strides = [1, 1]} : vector<4x128xf32> to vector<3x128xf32>
    %268 = tpu.concatenate %267, %25 in 0 : vector<3x128xf32>, vector<1x128xf32> -> vector<4x128xf32>
    %c57 = arith.constant 57 : index
    %269 = memref.load %arg2[%c57] : memref<81xf32, #tpu.memory_space<smem>>
    %270 = vector.broadcast %269 : f32 to vector<4x128xf32>
    %271 = arith.mulf %266, %270 : vector<4x128xf32>
    %272 = arith.addf %217, %271 : vector<4x128xf32>
    %c66 = arith.constant 66 : index
    %273 = memref.load %arg2[%c66] : memref<81xf32, #tpu.memory_space<smem>>
    %274 = vector.broadcast %273 : f32 to vector<4x128xf32>
    %275 = arith.mulf %264, %274 : vector<4x128xf32>
    %276 = arith.addf %272, %275 : vector<4x128xf32>
    %c75 = arith.constant 75 : index
    %277 = memref.load %arg2[%c75] : memref<81xf32, #tpu.memory_space<smem>>
    %278 = vector.broadcast %277 : f32 to vector<4x128xf32>
    %279 = arith.mulf %268, %278 : vector<4x128xf32>
    %280 = arith.addf %276, %279 : vector<4x128xf32>
    %281 = vector.extract_strided_slice %27 {offsets = [0, 0], sizes = [3, 128], strides = [1, 1]} : vector<4x128xf32> to vector<3x128xf32>
    %282 = tpu.concatenate %25, %281 in 0 : vector<1x128xf32>, vector<3x128xf32> -> vector<4x128xf32>
    %283 = vector.extract_strided_slice %27 {offsets = [1, 0], sizes = [3, 128], strides = [1, 1]} : vector<4x128xf32> to vector<3x128xf32>
    %284 = tpu.concatenate %283, %25 in 0 : vector<3x128xf32>, vector<1x128xf32> -> vector<4x128xf32>
    %c4 = arith.constant 4 : index
    %285 = memref.load %arg2[%c4] : memref<81xf32, #tpu.memory_space<smem>>
    %286 = vector.broadcast %285 : f32 to vector<4x128xf32>
    %287 = arith.mulf %282, %286 : vector<4x128xf32>
    %288 = arith.addf %238, %287 : vector<4x128xf32>
    %c13 = arith.constant 13 : index
    %289 = memref.load %arg2[%c13] : memref<81xf32, #tpu.memory_space<smem>>
    %290 = vector.broadcast %289 : f32 to vector<4x128xf32>
    %291 = arith.mulf %27, %290 : vector<4x128xf32>
    %292 = arith.addf %288, %291 : vector<4x128xf32>
    %c22 = arith.constant 22 : index
    %293 = memref.load %arg2[%c22] : memref<81xf32, #tpu.memory_space<smem>>
    %294 = vector.broadcast %293 : f32 to vector<4x128xf32>
    %295 = arith.mulf %284, %294 : vector<4x128xf32>
    %296 = arith.addf %292, %295 : vector<4x128xf32>
    %297 = vector.extract_strided_slice %29 {offsets = [0, 0], sizes = [3, 128], strides = [1, 1]} : vector<4x128xf32> to vector<3x128xf32>
    %298 = tpu.concatenate %25, %297 in 0 : vector<1x128xf32>, vector<3x128xf32> -> vector<4x128xf32>
    %299 = vector.extract_strided_slice %29 {offsets = [1, 0], sizes = [3, 128], strides = [1, 1]} : vector<4x128xf32> to vector<3x128xf32>
    %300 = tpu.concatenate %299, %25 in 0 : vector<3x128xf32>, vector<1x128xf32> -> vector<4x128xf32>
    %c31 = arith.constant 31 : index
    %301 = memref.load %arg2[%c31] : memref<81xf32, #tpu.memory_space<smem>>
    %302 = vector.broadcast %301 : f32 to vector<4x128xf32>
    %303 = arith.mulf %298, %302 : vector<4x128xf32>
    %304 = arith.addf %259, %303 : vector<4x128xf32>
    %c40 = arith.constant 40 : index
    %305 = memref.load %arg2[%c40] : memref<81xf32, #tpu.memory_space<smem>>
    %306 = vector.broadcast %305 : f32 to vector<4x128xf32>
    %307 = arith.mulf %29, %306 : vector<4x128xf32>
    %308 = arith.addf %304, %307 : vector<4x128xf32>
    %c49 = arith.constant 49 : index
    %309 = memref.load %arg2[%c49] : memref<81xf32, #tpu.memory_space<smem>>
    %310 = vector.broadcast %309 : f32 to vector<4x128xf32>
    %311 = arith.mulf %300, %310 : vector<4x128xf32>
    %312 = arith.addf %308, %311 : vector<4x128xf32>
    %313 = vector.extract_strided_slice %31 {offsets = [0, 0], sizes = [3, 128], strides = [1, 1]} : vector<4x128xf32> to vector<3x128xf32>
    %314 = tpu.concatenate %25, %313 in 0 : vector<1x128xf32>, vector<3x128xf32> -> vector<4x128xf32>
    %315 = vector.extract_strided_slice %31 {offsets = [1, 0], sizes = [3, 128], strides = [1, 1]} : vector<4x128xf32> to vector<3x128xf32>
    %316 = tpu.concatenate %315, %25 in 0 : vector<3x128xf32>, vector<1x128xf32> -> vector<4x128xf32>
    %c58 = arith.constant 58 : index
    %317 = memref.load %arg2[%c58] : memref<81xf32, #tpu.memory_space<smem>>
    %318 = vector.broadcast %317 : f32 to vector<4x128xf32>
    %319 = arith.mulf %314, %318 : vector<4x128xf32>
    %320 = arith.addf %280, %319 : vector<4x128xf32>
    %c67 = arith.constant 67 : index
    %321 = memref.load %arg2[%c67] : memref<81xf32, #tpu.memory_space<smem>>
    %322 = vector.broadcast %321 : f32 to vector<4x128xf32>
    %323 = arith.mulf %31, %322 : vector<4x128xf32>
    %324 = arith.addf %320, %323 : vector<4x128xf32>
    %c76 = arith.constant 76 : index
    %325 = memref.load %arg2[%c76] : memref<81xf32, #tpu.memory_space<smem>>
    %326 = vector.broadcast %325 : f32 to vector<4x128xf32>
    %327 = arith.mulf %316, %326 : vector<4x128xf32>
    %328 = arith.addf %324, %327 : vector<4x128xf32>
    %cst_31 = arith.constant 0.000000e+00 : f32
    %329 = vector.broadcast %cst_31 : f32 to vector<4x1xf32>
    %330 = vector.extract_strided_slice %27 {offsets = [0, 1], sizes = [4, 127], strides = [1, 1]} : vector<4x128xf32> to vector<4x127xf32>
    %331 = tpu.concatenate %330, %329 in 1 : vector<4x127xf32>, vector<4x1xf32> -> vector<4x128xf32>
    %332 = vector.broadcast %24 : vector<1x128xf32> to vector<4x128xf32>
    %333 = arith.mulf %331, %332 : vector<4x128xf32>
    %334 = vector.extract_strided_slice %333 {offsets = [0, 0], sizes = [3, 128], strides = [1, 1]} : vector<4x128xf32> to vector<3x128xf32>
    %335 = tpu.concatenate %25, %334 in 0 : vector<1x128xf32>, vector<3x128xf32> -> vector<4x128xf32>
    %336 = vector.extract_strided_slice %333 {offsets = [1, 0], sizes = [3, 128], strides = [1, 1]} : vector<4x128xf32> to vector<3x128xf32>
    %337 = tpu.concatenate %336, %25 in 0 : vector<3x128xf32>, vector<1x128xf32> -> vector<4x128xf32>
    %c5 = arith.constant 5 : index
    %338 = memref.load %arg2[%c5] : memref<81xf32, #tpu.memory_space<smem>>
    %339 = vector.broadcast %338 : f32 to vector<4x128xf32>
    %340 = arith.mulf %335, %339 : vector<4x128xf32>
    %341 = arith.addf %296, %340 : vector<4x128xf32>
    %c14 = arith.constant 14 : index
    %342 = memref.load %arg2[%c14] : memref<81xf32, #tpu.memory_space<smem>>
    %343 = vector.broadcast %342 : f32 to vector<4x128xf32>
    %344 = arith.mulf %333, %343 : vector<4x128xf32>
    %345 = arith.addf %341, %344 : vector<4x128xf32>
    %c23 = arith.constant 23 : index
    %346 = memref.load %arg2[%c23] : memref<81xf32, #tpu.memory_space<smem>>
    %347 = vector.broadcast %346 : f32 to vector<4x128xf32>
    %348 = arith.mulf %337, %347 : vector<4x128xf32>
    %349 = arith.addf %345, %348 : vector<4x128xf32>
    %cst_32 = arith.constant 0.000000e+00 : f32
    %350 = vector.broadcast %cst_32 : f32 to vector<4x1xf32>
    %351 = vector.extract_strided_slice %29 {offsets = [0, 1], sizes = [4, 127], strides = [1, 1]} : vector<4x128xf32> to vector<4x127xf32>
    %352 = tpu.concatenate %351, %350 in 1 : vector<4x127xf32>, vector<4x1xf32> -> vector<4x128xf32>
    %353 = vector.broadcast %24 : vector<1x128xf32> to vector<4x128xf32>
    %354 = arith.mulf %352, %353 : vector<4x128xf32>
    %355 = vector.extract_strided_slice %354 {offsets = [0, 0], sizes = [3, 128], strides = [1, 1]} : vector<4x128xf32> to vector<3x128xf32>
    %356 = tpu.concatenate %25, %355 in 0 : vector<1x128xf32>, vector<3x128xf32> -> vector<4x128xf32>
    %357 = vector.extract_strided_slice %354 {offsets = [1, 0], sizes = [3, 128], strides = [1, 1]} : vector<4x128xf32> to vector<3x128xf32>
    %358 = tpu.concatenate %357, %25 in 0 : vector<3x128xf32>, vector<1x128xf32> -> vector<4x128xf32>
    %c32 = arith.constant 32 : index
    %359 = memref.load %arg2[%c32] : memref<81xf32, #tpu.memory_space<smem>>
    %360 = vector.broadcast %359 : f32 to vector<4x128xf32>
    %361 = arith.mulf %356, %360 : vector<4x128xf32>
    %362 = arith.addf %312, %361 : vector<4x128xf32>
    %c41 = arith.constant 41 : index
    %363 = memref.load %arg2[%c41] : memref<81xf32, #tpu.memory_space<smem>>
    %364 = vector.broadcast %363 : f32 to vector<4x128xf32>
    %365 = arith.mulf %354, %364 : vector<4x128xf32>
    %366 = arith.addf %362, %365 : vector<4x128xf32>
    %c50 = arith.constant 50 : index
    %367 = memref.load %arg2[%c50] : memref<81xf32, #tpu.memory_space<smem>>
    %368 = vector.broadcast %367 : f32 to vector<4x128xf32>
    %369 = arith.mulf %358, %368 : vector<4x128xf32>
    %370 = arith.addf %366, %369 : vector<4x128xf32>
    %cst_33 = arith.constant 0.000000e+00 : f32
    %371 = vector.broadcast %cst_33 : f32 to vector<4x1xf32>
    %372 = vector.extract_strided_slice %31 {offsets = [0, 1], sizes = [4, 127], strides = [1, 1]} : vector<4x128xf32> to vector<4x127xf32>
    %373 = tpu.concatenate %372, %371 in 1 : vector<4x127xf32>, vector<4x1xf32> -> vector<4x128xf32>
    %374 = vector.broadcast %24 : vector<1x128xf32> to vector<4x128xf32>
    %375 = arith.mulf %373, %374 : vector<4x128xf32>
    %376 = vector.extract_strided_slice %375 {offsets = [0, 0], sizes = [3, 128], strides = [1, 1]} : vector<4x128xf32> to vector<3x128xf32>
    %377 = tpu.concatenate %25, %376 in 0 : vector<1x128xf32>, vector<3x128xf32> -> vector<4x128xf32>
    %378 = vector.extract_strided_slice %375 {offsets = [1, 0], sizes = [3, 128], strides = [1, 1]} : vector<4x128xf32> to vector<3x128xf32>
    %379 = tpu.concatenate %378, %25 in 0 : vector<3x128xf32>, vector<1x128xf32> -> vector<4x128xf32>
    %c59 = arith.constant 59 : index
    %380 = memref.load %arg2[%c59] : memref<81xf32, #tpu.memory_space<smem>>
    %381 = vector.broadcast %380 : f32 to vector<4x128xf32>
    %382 = arith.mulf %377, %381 : vector<4x128xf32>
    %383 = arith.addf %328, %382 : vector<4x128xf32>
    %c68 = arith.constant 68 : index
    %384 = memref.load %arg2[%c68] : memref<81xf32, #tpu.memory_space<smem>>
    %385 = vector.broadcast %384 : f32 to vector<4x128xf32>
    %386 = arith.mulf %375, %385 : vector<4x128xf32>
    %387 = arith.addf %383, %386 : vector<4x128xf32>
    %c77 = arith.constant 77 : index
    %388 = memref.load %arg2[%c77] : memref<81xf32, #tpu.memory_space<smem>>
    %389 = vector.broadcast %388 : f32 to vector<4x128xf32>
    %390 = arith.mulf %379, %389 : vector<4x128xf32>
    %391 = arith.addf %387, %390 : vector<4x128xf32>
    %cst_34 = arith.constant 0.000000e+00 : f32
    %392 = vector.broadcast %cst_34 : f32 to vector<4x15xf32>
    %393 = vector.extract_strided_slice %27 {offsets = [0, 15], sizes = [4, 113], strides = [1, 1]} : vector<4x128xf32> to vector<4x113xf32>
    %394 = tpu.concatenate %393, %392 in 1 : vector<4x113xf32>, vector<4x15xf32> -> vector<4x128xf32>
    %395 = vector.broadcast %20 : vector<1x128xf32> to vector<4x128xf32>
    %396 = arith.mulf %394, %395 : vector<4x128xf32>
    %397 = vector.extract_strided_slice %396 {offsets = [0, 0], sizes = [3, 128], strides = [1, 1]} : vector<4x128xf32> to vector<3x128xf32>
    %398 = tpu.concatenate %25, %397 in 0 : vector<1x128xf32>, vector<3x128xf32> -> vector<4x128xf32>
    %399 = vector.extract_strided_slice %396 {offsets = [1, 0], sizes = [3, 128], strides = [1, 1]} : vector<4x128xf32> to vector<3x128xf32>
    %400 = tpu.concatenate %399, %25 in 0 : vector<3x128xf32>, vector<1x128xf32> -> vector<4x128xf32>
    %c6 = arith.constant 6 : index
    %401 = memref.load %arg2[%c6] : memref<81xf32, #tpu.memory_space<smem>>
    %402 = vector.broadcast %401 : f32 to vector<4x128xf32>
    %403 = arith.mulf %398, %402 : vector<4x128xf32>
    %404 = arith.addf %349, %403 : vector<4x128xf32>
    %c15 = arith.constant 15 : index
    %405 = memref.load %arg2[%c15] : memref<81xf32, #tpu.memory_space<smem>>
    %406 = vector.broadcast %405 : f32 to vector<4x128xf32>
    %407 = arith.mulf %396, %406 : vector<4x128xf32>
    %408 = arith.addf %404, %407 : vector<4x128xf32>
    %c24 = arith.constant 24 : index
    %409 = memref.load %arg2[%c24] : memref<81xf32, #tpu.memory_space<smem>>
    %410 = vector.broadcast %409 : f32 to vector<4x128xf32>
    %411 = arith.mulf %400, %410 : vector<4x128xf32>
    %412 = arith.addf %408, %411 : vector<4x128xf32>
    %cst_35 = arith.constant 0.000000e+00 : f32
    %413 = vector.broadcast %cst_35 : f32 to vector<4x15xf32>
    %414 = vector.extract_strided_slice %29 {offsets = [0, 15], sizes = [4, 113], strides = [1, 1]} : vector<4x128xf32> to vector<4x113xf32>
    %415 = tpu.concatenate %414, %413 in 1 : vector<4x113xf32>, vector<4x15xf32> -> vector<4x128xf32>
    %416 = vector.broadcast %20 : vector<1x128xf32> to vector<4x128xf32>
    %417 = arith.mulf %415, %416 : vector<4x128xf32>
    %418 = vector.extract_strided_slice %417 {offsets = [0, 0], sizes = [3, 128], strides = [1, 1]} : vector<4x128xf32> to vector<3x128xf32>
    %419 = tpu.concatenate %25, %418 in 0 : vector<1x128xf32>, vector<3x128xf32> -> vector<4x128xf32>
    %420 = vector.extract_strided_slice %417 {offsets = [1, 0], sizes = [3, 128], strides = [1, 1]} : vector<4x128xf32> to vector<3x128xf32>
    %421 = tpu.concatenate %420, %25 in 0 : vector<3x128xf32>, vector<1x128xf32> -> vector<4x128xf32>
    %c33 = arith.constant 33 : index
    %422 = memref.load %arg2[%c33] : memref<81xf32, #tpu.memory_space<smem>>
    %423 = vector.broadcast %422 : f32 to vector<4x128xf32>
    %424 = arith.mulf %419, %423 : vector<4x128xf32>
    %425 = arith.addf %370, %424 : vector<4x128xf32>
    %c42 = arith.constant 42 : index
    %426 = memref.load %arg2[%c42] : memref<81xf32, #tpu.memory_space<smem>>
    %427 = vector.broadcast %426 : f32 to vector<4x128xf32>
    %428 = arith.mulf %417, %427 : vector<4x128xf32>
    %429 = arith.addf %425, %428 : vector<4x128xf32>
    %c51 = arith.constant 51 : index
    %430 = memref.load %arg2[%c51] : memref<81xf32, #tpu.memory_space<smem>>
    %431 = vector.broadcast %430 : f32 to vector<4x128xf32>
    %432 = arith.mulf %421, %431 : vector<4x128xf32>
    %433 = arith.addf %429, %432 : vector<4x128xf32>
    %cst_36 = arith.constant 0.000000e+00 : f32
    %434 = vector.broadcast %cst_36 : f32 to vector<4x15xf32>
    %435 = vector.extract_strided_slice %31 {offsets = [0, 15], sizes = [4, 113], strides = [1, 1]} : vector<4x128xf32> to vector<4x113xf32>
    %436 = tpu.concatenate %435, %434 in 1 : vector<4x113xf32>, vector<4x15xf32> -> vector<4x128xf32>
    %437 = vector.broadcast %20 : vector<1x128xf32> to vector<4x128xf32>
    %438 = arith.mulf %436, %437 : vector<4x128xf32>
    %439 = vector.extract_strided_slice %438 {offsets = [0, 0], sizes = [3, 128], strides = [1, 1]} : vector<4x128xf32> to vector<3x128xf32>
    %440 = tpu.concatenate %25, %439 in 0 : vector<1x128xf32>, vector<3x128xf32> -> vector<4x128xf32>
    %441 = vector.extract_strided_slice %438 {offsets = [1, 0], sizes = [3, 128], strides = [1, 1]} : vector<4x128xf32> to vector<3x128xf32>
    %442 = tpu.concatenate %441, %25 in 0 : vector<3x128xf32>, vector<1x128xf32> -> vector<4x128xf32>
    %c60 = arith.constant 60 : index
    %443 = memref.load %arg2[%c60] : memref<81xf32, #tpu.memory_space<smem>>
    %444 = vector.broadcast %443 : f32 to vector<4x128xf32>
    %445 = arith.mulf %440, %444 : vector<4x128xf32>
    %446 = arith.addf %391, %445 : vector<4x128xf32>
    %c69 = arith.constant 69 : index
    %447 = memref.load %arg2[%c69] : memref<81xf32, #tpu.memory_space<smem>>
    %448 = vector.broadcast %447 : f32 to vector<4x128xf32>
    %449 = arith.mulf %438, %448 : vector<4x128xf32>
    %450 = arith.addf %446, %449 : vector<4x128xf32>
    %c78 = arith.constant 78 : index
    %451 = memref.load %arg2[%c78] : memref<81xf32, #tpu.memory_space<smem>>
    %452 = vector.broadcast %451 : f32 to vector<4x128xf32>
    %453 = arith.mulf %442, %452 : vector<4x128xf32>
    %454 = arith.addf %450, %453 : vector<4x128xf32>
    %cst_37 = arith.constant 0.000000e+00 : f32
    %455 = vector.broadcast %cst_37 : f32 to vector<4x16xf32>
    %456 = vector.extract_strided_slice %27 {offsets = [0, 16], sizes = [4, 112], strides = [1, 1]} : vector<4x128xf32> to vector<4x112xf32>
    %457 = tpu.concatenate %456, %455 in 1 : vector<4x112xf32>, vector<4x16xf32> -> vector<4x128xf32>
    %458 = vector.extract_strided_slice %457 {offsets = [0, 0], sizes = [3, 128], strides = [1, 1]} : vector<4x128xf32> to vector<3x128xf32>
    %459 = tpu.concatenate %25, %458 in 0 : vector<1x128xf32>, vector<3x128xf32> -> vector<4x128xf32>
    %460 = vector.extract_strided_slice %457 {offsets = [1, 0], sizes = [3, 128], strides = [1, 1]} : vector<4x128xf32> to vector<3x128xf32>
    %461 = tpu.concatenate %460, %25 in 0 : vector<3x128xf32>, vector<1x128xf32> -> vector<4x128xf32>
    %c7 = arith.constant 7 : index
    %462 = memref.load %arg2[%c7] : memref<81xf32, #tpu.memory_space<smem>>
    %463 = vector.broadcast %462 : f32 to vector<4x128xf32>
    %464 = arith.mulf %459, %463 : vector<4x128xf32>
    %465 = arith.addf %412, %464 : vector<4x128xf32>
    %c16 = arith.constant 16 : index
    %466 = memref.load %arg2[%c16] : memref<81xf32, #tpu.memory_space<smem>>
    %467 = vector.broadcast %466 : f32 to vector<4x128xf32>
    %468 = arith.mulf %457, %467 : vector<4x128xf32>
    %469 = arith.addf %465, %468 : vector<4x128xf32>
    %c25 = arith.constant 25 : index
    %470 = memref.load %arg2[%c25] : memref<81xf32, #tpu.memory_space<smem>>
    %471 = vector.broadcast %470 : f32 to vector<4x128xf32>
    %472 = arith.mulf %461, %471 : vector<4x128xf32>
    %473 = arith.addf %469, %472 : vector<4x128xf32>
    %cst_38 = arith.constant 0.000000e+00 : f32
    %474 = vector.broadcast %cst_38 : f32 to vector<4x16xf32>
    %475 = vector.extract_strided_slice %29 {offsets = [0, 16], sizes = [4, 112], strides = [1, 1]} : vector<4x128xf32> to vector<4x112xf32>
    %476 = tpu.concatenate %475, %474 in 1 : vector<4x112xf32>, vector<4x16xf32> -> vector<4x128xf32>
    %477 = vector.extract_strided_slice %476 {offsets = [0, 0], sizes = [3, 128], strides = [1, 1]} : vector<4x128xf32> to vector<3x128xf32>
    %478 = tpu.concatenate %25, %477 in 0 : vector<1x128xf32>, vector<3x128xf32> -> vector<4x128xf32>
    %479 = vector.extract_strided_slice %476 {offsets = [1, 0], sizes = [3, 128], strides = [1, 1]} : vector<4x128xf32> to vector<3x128xf32>
    %480 = tpu.concatenate %479, %25 in 0 : vector<3x128xf32>, vector<1x128xf32> -> vector<4x128xf32>
    %c34 = arith.constant 34 : index
    %481 = memref.load %arg2[%c34] : memref<81xf32, #tpu.memory_space<smem>>
    %482 = vector.broadcast %481 : f32 to vector<4x128xf32>
    %483 = arith.mulf %478, %482 : vector<4x128xf32>
    %484 = arith.addf %433, %483 : vector<4x128xf32>
    %c43 = arith.constant 43 : index
    %485 = memref.load %arg2[%c43] : memref<81xf32, #tpu.memory_space<smem>>
    %486 = vector.broadcast %485 : f32 to vector<4x128xf32>
    %487 = arith.mulf %476, %486 : vector<4x128xf32>
    %488 = arith.addf %484, %487 : vector<4x128xf32>
    %c52 = arith.constant 52 : index
    %489 = memref.load %arg2[%c52] : memref<81xf32, #tpu.memory_space<smem>>
    %490 = vector.broadcast %489 : f32 to vector<4x128xf32>
    %491 = arith.mulf %480, %490 : vector<4x128xf32>
    %492 = arith.addf %488, %491 : vector<4x128xf32>
    %cst_39 = arith.constant 0.000000e+00 : f32
    %493 = vector.broadcast %cst_39 : f32 to vector<4x16xf32>
    %494 = vector.extract_strided_slice %31 {offsets = [0, 16], sizes = [4, 112], strides = [1, 1]} : vector<4x128xf32> to vector<4x112xf32>
    %495 = tpu.concatenate %494, %493 in 1 : vector<4x112xf32>, vector<4x16xf32> -> vector<4x128xf32>
    %496 = vector.extract_strided_slice %495 {offsets = [0, 0], sizes = [3, 128], strides = [1, 1]} : vector<4x128xf32> to vector<3x128xf32>
    %497 = tpu.concatenate %25, %496 in 0 : vector<1x128xf32>, vector<3x128xf32> -> vector<4x128xf32>
    %498 = vector.extract_strided_slice %495 {offsets = [1, 0], sizes = [3, 128], strides = [1, 1]} : vector<4x128xf32> to vector<3x128xf32>
    %499 = tpu.concatenate %498, %25 in 0 : vector<3x128xf32>, vector<1x128xf32> -> vector<4x128xf32>
    %c61 = arith.constant 61 : index
    %500 = memref.load %arg2[%c61] : memref<81xf32, #tpu.memory_space<smem>>
    %501 = vector.broadcast %500 : f32 to vector<4x128xf32>
    %502 = arith.mulf %497, %501 : vector<4x128xf32>
    %503 = arith.addf %454, %502 : vector<4x128xf32>
    %c70 = arith.constant 70 : index
    %504 = memref.load %arg2[%c70] : memref<81xf32, #tpu.memory_space<smem>>
    %505 = vector.broadcast %504 : f32 to vector<4x128xf32>
    %506 = arith.mulf %495, %505 : vector<4x128xf32>
    %507 = arith.addf %503, %506 : vector<4x128xf32>
    %c79 = arith.constant 79 : index
    %508 = memref.load %arg2[%c79] : memref<81xf32, #tpu.memory_space<smem>>
    %509 = vector.broadcast %508 : f32 to vector<4x128xf32>
    %510 = arith.mulf %499, %509 : vector<4x128xf32>
    %511 = arith.addf %507, %510 : vector<4x128xf32>
    %cst_40 = arith.constant 0.000000e+00 : f32
    %512 = vector.broadcast %cst_40 : f32 to vector<4x17xf32>
    %513 = vector.extract_strided_slice %27 {offsets = [0, 17], sizes = [4, 111], strides = [1, 1]} : vector<4x128xf32> to vector<4x111xf32>
    %514 = tpu.concatenate %513, %512 in 1 : vector<4x111xf32>, vector<4x17xf32> -> vector<4x128xf32>
    %515 = vector.broadcast %24 : vector<1x128xf32> to vector<4x128xf32>
    %516 = arith.mulf %514, %515 : vector<4x128xf32>
    %517 = vector.extract_strided_slice %516 {offsets = [0, 0], sizes = [3, 128], strides = [1, 1]} : vector<4x128xf32> to vector<3x128xf32>
    %518 = tpu.concatenate %25, %517 in 0 : vector<1x128xf32>, vector<3x128xf32> -> vector<4x128xf32>
    %519 = vector.extract_strided_slice %516 {offsets = [1, 0], sizes = [3, 128], strides = [1, 1]} : vector<4x128xf32> to vector<3x128xf32>
    %520 = tpu.concatenate %519, %25 in 0 : vector<3x128xf32>, vector<1x128xf32> -> vector<4x128xf32>
    %c8 = arith.constant 8 : index
    %521 = memref.load %arg2[%c8] : memref<81xf32, #tpu.memory_space<smem>>
    %522 = vector.broadcast %521 : f32 to vector<4x128xf32>
    %523 = arith.mulf %518, %522 : vector<4x128xf32>
    %524 = arith.addf %473, %523 : vector<4x128xf32>
    %c17 = arith.constant 17 : index
    %525 = memref.load %arg2[%c17] : memref<81xf32, #tpu.memory_space<smem>>
    %526 = vector.broadcast %525 : f32 to vector<4x128xf32>
    %527 = arith.mulf %516, %526 : vector<4x128xf32>
    %528 = arith.addf %524, %527 : vector<4x128xf32>
    %c26 = arith.constant 26 : index
    %529 = memref.load %arg2[%c26] : memref<81xf32, #tpu.memory_space<smem>>
    %530 = vector.broadcast %529 : f32 to vector<4x128xf32>
    %531 = arith.mulf %520, %530 : vector<4x128xf32>
    %532 = arith.addf %528, %531 : vector<4x128xf32>
    %cst_41 = arith.constant 0.000000e+00 : f32
    %533 = vector.broadcast %cst_41 : f32 to vector<4x17xf32>
    %534 = vector.extract_strided_slice %29 {offsets = [0, 17], sizes = [4, 111], strides = [1, 1]} : vector<4x128xf32> to vector<4x111xf32>
    %535 = tpu.concatenate %534, %533 in 1 : vector<4x111xf32>, vector<4x17xf32> -> vector<4x128xf32>
    %536 = vector.broadcast %24 : vector<1x128xf32> to vector<4x128xf32>
    %537 = arith.mulf %535, %536 : vector<4x128xf32>
    %538 = vector.extract_strided_slice %537 {offsets = [0, 0], sizes = [3, 128], strides = [1, 1]} : vector<4x128xf32> to vector<3x128xf32>
    %539 = tpu.concatenate %25, %538 in 0 : vector<1x128xf32>, vector<3x128xf32> -> vector<4x128xf32>
    %540 = vector.extract_strided_slice %537 {offsets = [1, 0], sizes = [3, 128], strides = [1, 1]} : vector<4x128xf32> to vector<3x128xf32>
    %541 = tpu.concatenate %540, %25 in 0 : vector<3x128xf32>, vector<1x128xf32> -> vector<4x128xf32>
    %c35 = arith.constant 35 : index
    %542 = memref.load %arg2[%c35] : memref<81xf32, #tpu.memory_space<smem>>
    %543 = vector.broadcast %542 : f32 to vector<4x128xf32>
    %544 = arith.mulf %539, %543 : vector<4x128xf32>
    %545 = arith.addf %492, %544 : vector<4x128xf32>
    %c44 = arith.constant 44 : index
    %546 = memref.load %arg2[%c44] : memref<81xf32, #tpu.memory_space<smem>>
    %547 = vector.broadcast %546 : f32 to vector<4x128xf32>
    %548 = arith.mulf %537, %547 : vector<4x128xf32>
    %549 = arith.addf %545, %548 : vector<4x128xf32>
    %c53 = arith.constant 53 : index
    %550 = memref.load %arg2[%c53] : memref<81xf32, #tpu.memory_space<smem>>
    %551 = vector.broadcast %550 : f32 to vector<4x128xf32>
    %552 = arith.mulf %541, %551 : vector<4x128xf32>
    %553 = arith.addf %549, %552 : vector<4x128xf32>
    %cst_42 = arith.constant 0.000000e+00 : f32
    %554 = vector.broadcast %cst_42 : f32 to vector<4x17xf32>
    %555 = vector.extract_strided_slice %31 {offsets = [0, 17], sizes = [4, 111], strides = [1, 1]} : vector<4x128xf32> to vector<4x111xf32>
    %556 = tpu.concatenate %555, %554 in 1 : vector<4x111xf32>, vector<4x17xf32> -> vector<4x128xf32>
    %557 = vector.broadcast %24 : vector<1x128xf32> to vector<4x128xf32>
    %558 = arith.mulf %556, %557 : vector<4x128xf32>
    %559 = vector.extract_strided_slice %558 {offsets = [0, 0], sizes = [3, 128], strides = [1, 1]} : vector<4x128xf32> to vector<3x128xf32>
    %560 = tpu.concatenate %25, %559 in 0 : vector<1x128xf32>, vector<3x128xf32> -> vector<4x128xf32>
    %561 = vector.extract_strided_slice %558 {offsets = [1, 0], sizes = [3, 128], strides = [1, 1]} : vector<4x128xf32> to vector<3x128xf32>
    %562 = tpu.concatenate %561, %25 in 0 : vector<3x128xf32>, vector<1x128xf32> -> vector<4x128xf32>
    %c62 = arith.constant 62 : index
    %563 = memref.load %arg2[%c62] : memref<81xf32, #tpu.memory_space<smem>>
    %564 = vector.broadcast %563 : f32 to vector<4x128xf32>
    %565 = arith.mulf %560, %564 : vector<4x128xf32>
    %566 = arith.addf %511, %565 : vector<4x128xf32>
    %c71 = arith.constant 71 : index
    %567 = memref.load %arg2[%c71] : memref<81xf32, #tpu.memory_space<smem>>
    %568 = vector.broadcast %567 : f32 to vector<4x128xf32>
    %569 = arith.mulf %558, %568 : vector<4x128xf32>
    %570 = arith.addf %566, %569 : vector<4x128xf32>
    %c80 = arith.constant 80 : index
    %571 = memref.load %arg2[%c80] : memref<81xf32, #tpu.memory_space<smem>>
    %572 = vector.broadcast %571 : f32 to vector<4x128xf32>
    %573 = arith.mulf %562, %572 : vector<4x128xf32>
    %574 = arith.addf %570, %573 : vector<4x128xf32>
    %c0_43 = arith.constant 0 : index
    %575 = memref.load %arg3[%c0_43] : memref<3xf32, #tpu.memory_space<smem>>
    %576 = vector.broadcast %575 : f32 to vector<4x128xf32>
    %577 = arith.addf %532, %576 : vector<4x128xf32>
    %c1_44 = arith.constant 1 : index
    %578 = memref.load %arg3[%c1_44] : memref<3xf32, #tpu.memory_space<smem>>
    %579 = vector.broadcast %578 : f32 to vector<4x128xf32>
    %580 = arith.addf %553, %579 : vector<4x128xf32>
    %c2_45 = arith.constant 2 : index
    %581 = memref.load %arg3[%c2_45] : memref<3xf32, #tpu.memory_space<smem>>
    %582 = vector.broadcast %581 : f32 to vector<4x128xf32>
    %583 = arith.addf %574, %582 : vector<4x128xf32>
    %cst_46 = arith.constant 0.000000e+00 : f32
    %584 = vector.broadcast %cst_46 : f32 to vector<4x128xf32>
    %c0_47 = arith.constant 0 : index
    %585 = memref.load %arg5[%c0_47] : memref<24xf32, #tpu.memory_space<smem>>
    %586 = vector.broadcast %585 : f32 to vector<4x128xf32>
    %587 = arith.addf %584, %586 : vector<4x128xf32>
    %c0_48 = arith.constant 0 : index
    %588 = memref.load %arg4[%c0_48] : memref<72xf32, #tpu.memory_space<smem>>
    %589 = vector.broadcast %588 : f32 to vector<4x128xf32>
    %590 = arith.mulf %577, %589 : vector<4x128xf32>
    %591 = arith.addf %587, %590 : vector<4x128xf32>
    %c1_49 = arith.constant 1 : index
    %592 = memref.load %arg4[%c1_49] : memref<72xf32, #tpu.memory_space<smem>>
    %593 = vector.broadcast %592 : f32 to vector<4x128xf32>
    %594 = arith.mulf %580, %593 : vector<4x128xf32>
    %595 = arith.addf %591, %594 : vector<4x128xf32>
    %c2_50 = arith.constant 2 : index
    %596 = memref.load %arg4[%c2_50] : memref<72xf32, #tpu.memory_space<smem>>
    %597 = vector.broadcast %596 : f32 to vector<4x128xf32>
    %598 = arith.mulf %583, %597 : vector<4x128xf32>
    %599 = arith.addf %595, %598 : vector<4x128xf32>
    %c0_51 = arith.constant 0 : index
    %c0_52 = arith.constant 0 : index
    %c0_53 = arith.constant 0 : index
    %c0_54 = arith.constant 0 : index
    %600 = vector.load %arg6[%c0_51, %c0_52, %c0_53, %c0_54] : memref<1x24x4x128xf32, #tpu.memory_space<vmem>>, vector<1x1x4x128xf32>
    %601 = vector.shape_cast %600 : vector<1x1x4x128xf32> to vector<4x128xf32>
    %602 = vector.shape_cast %599 : vector<4x128xf32> to vector<1x1x4x128xf32>
    tpu.vector_store %arg6[%c0_51, %c0_52, %c0_53, %c0_54], %602 {strides = array<i32>} : memref<1x24x4x128xf32, #tpu.memory_space<vmem>>, vector<1x1x4x128xf32>,
    %cst_55 = arith.constant 0.000000e+00 : f32
    %603 = vector.broadcast %cst_55 : f32 to vector<4x128xf32>
    %c1_56 = arith.constant 1 : index
    %604 = memref.load %arg5[%c1_56] : memref<24xf32, #tpu.memory_space<smem>>
    %605 = vector.broadcast %604 : f32 to vector<4x128xf32>
    %606 = arith.addf %603, %605 : vector<4x128xf32>
    %c3_57 = arith.constant 3 : index
    %607 = memref.load %arg4[%c3_57] : memref<72xf32, #tpu.memory_space<smem>>
    %608 = vector.broadcast %607 : f32 to vector<4x128xf32>
    %609 = arith.mulf %577, %608 : vector<4x128xf32>
    %610 = arith.addf %606, %609 : vector<4x128xf32>
    %c4_58 = arith.constant 4 : index
    %611 = memref.load %arg4[%c4_58] : memref<72xf32, #tpu.memory_space<smem>>
    %612 = vector.broadcast %611 : f32 to vector<4x128xf32>
    %613 = arith.mulf %580, %612 : vector<4x128xf32>
    %614 = arith.addf %610, %613 : vector<4x128xf32>
    %c5_59 = arith.constant 5 : index
    %615 = memref.load %arg4[%c5_59] : memref<72xf32, #tpu.memory_space<smem>>
    %616 = vector.broadcast %615 : f32 to vector<4x128xf32>
    %617 = arith.mulf %583, %616 : vector<4x128xf32>
    %618 = arith.addf %614, %617 : vector<4x128xf32>
    %c0_60 = arith.constant 0 : index
    %c1_61 = arith.constant 1 : index
    %c0_62 = arith.constant 0 : index
    %c0_63 = arith.constant 0 : index
    %619 = vector.load %arg6[%c0_60, %c1_61, %c0_62, %c0_63] : memref<1x24x4x128xf32, #tpu.memory_space<vmem>>, vector<1x1x4x128xf32>
    %620 = vector.shape_cast %619 : vector<1x1x4x128xf32> to vector<4x128xf32>
    %621 = vector.shape_cast %618 : vector<4x128xf32> to vector<1x1x4x128xf32>
    tpu.vector_store %arg6[%c0_60, %c1_61, %c0_62, %c0_63], %621 {strides = array<i32>} : memref<1x24x4x128xf32, #tpu.memory_space<vmem>>, vector<1x1x4x128xf32>,
    %cst_64 = arith.constant 0.000000e+00 : f32
    %622 = vector.broadcast %cst_64 : f32 to vector<4x128xf32>
    %c2_65 = arith.constant 2 : index
    %623 = memref.load %arg5[%c2_65] : memref<24xf32, #tpu.memory_space<smem>>
    %624 = vector.broadcast %623 : f32 to vector<4x128xf32>
    %625 = arith.addf %622, %624 : vector<4x128xf32>
    %c6_66 = arith.constant 6 : index
    %626 = memref.load %arg4[%c6_66] : memref<72xf32, #tpu.memory_space<smem>>
    %627 = vector.broadcast %626 : f32 to vector<4x128xf32>
    %628 = arith.mulf %577, %627 : vector<4x128xf32>
    %629 = arith.addf %625, %628 : vector<4x128xf32>
    %c7_67 = arith.constant 7 : index
    %630 = memref.load %arg4[%c7_67] : memref<72xf32, #tpu.memory_space<smem>>
    %631 = vector.broadcast %630 : f32 to vector<4x128xf32>
    %632 = arith.mulf %580, %631 : vector<4x128xf32>
    %633 = arith.addf %629, %632 : vector<4x128xf32>
    %c8_68 = arith.constant 8 : index
    %634 = memref.load %arg4[%c8_68] : memref<72xf32, #tpu.memory_space<smem>>
    %635 = vector.broadcast %634 : f32 to vector<4x128xf32>
    %636 = arith.mulf %583, %635 : vector<4x128xf32>
    %637 = arith.addf %633, %636 : vector<4x128xf32>
    %c0_69 = arith.constant 0 : index
    %c2_70 = arith.constant 2 : index
    %c0_71 = arith.constant 0 : index
    %c0_72 = arith.constant 0 : index
    %638 = vector.load %arg6[%c0_69, %c2_70, %c0_71, %c0_72] : memref<1x24x4x128xf32, #tpu.memory_space<vmem>>, vector<1x1x4x128xf32>
    %639 = vector.shape_cast %638 : vector<1x1x4x128xf32> to vector<4x128xf32>
    %640 = vector.shape_cast %637 : vector<4x128xf32> to vector<1x1x4x128xf32>
    tpu.vector_store %arg6[%c0_69, %c2_70, %c0_71, %c0_72], %640 {strides = array<i32>} : memref<1x24x4x128xf32, #tpu.memory_space<vmem>>, vector<1x1x4x128xf32>,
    %cst_73 = arith.constant 0.000000e+00 : f32
    %641 = vector.broadcast %cst_73 : f32 to vector<4x128xf32>
    %c3_74 = arith.constant 3 : index
    %642 = memref.load %arg5[%c3_74] : memref<24xf32, #tpu.memory_space<smem>>
    %643 = vector.broadcast %642 : f32 to vector<4x128xf32>
    %644 = arith.addf %641, %643 : vector<4x128xf32>
    %c9_75 = arith.constant 9 : index
    %645 = memref.load %arg4[%c9_75] : memref<72xf32, #tpu.memory_space<smem>>
    %646 = vector.broadcast %645 : f32 to vector<4x128xf32>
    %647 = arith.mulf %577, %646 : vector<4x128xf32>
    %648 = arith.addf %644, %647 : vector<4x128xf32>
    %c10_76 = arith.constant 10 : index
    %649 = memref.load %arg4[%c10_76] : memref<72xf32, #tpu.memory_space<smem>>
    %650 = vector.broadcast %649 : f32 to vector<4x128xf32>
    %651 = arith.mulf %580, %650 : vector<4x128xf32>
    %652 = arith.addf %648, %651 : vector<4x128xf32>
    %c11_77 = arith.constant 11 : index
    %653 = memref.load %arg4[%c11_77] : memref<72xf32, #tpu.memory_space<smem>>
    %654 = vector.broadcast %653 : f32 to vector<4x128xf32>
    %655 = arith.mulf %583, %654 : vector<4x128xf32>
    %656 = arith.addf %652, %655 : vector<4x128xf32>
    %c0_78 = arith.constant 0 : index
    %c3_79 = arith.constant 3 : index
    %c0_80 = arith.constant 0 : index
    %c0_81 = arith.constant 0 : index
    %657 = vector.load %arg6[%c0_78, %c3_79, %c0_80, %c0_81] : memref<1x24x4x128xf32, #tpu.memory_space<vmem>>, vector<1x1x4x128xf32>
    %658 = vector.shape_cast %657 : vector<1x1x4x128xf32> to vector<4x128xf32>
    %659 = vector.shape_cast %656 : vector<4x128xf32> to vector<1x1x4x128xf32>
    tpu.vector_store %arg6[%c0_78, %c3_79, %c0_80, %c0_81], %659 {strides = array<i32>} : memref<1x24x4x128xf32, #tpu.memory_space<vmem>>, vector<1x1x4x128xf32>,
    %cst_82 = arith.constant 0.000000e+00 : f32
    %660 = vector.broadcast %cst_82 : f32 to vector<4x128xf32>
    %c4_83 = arith.constant 4 : index
    %661 = memref.load %arg5[%c4_83] : memref<24xf32, #tpu.memory_space<smem>>
    %662 = vector.broadcast %661 : f32 to vector<4x128xf32>
    %663 = arith.addf %660, %662 : vector<4x128xf32>
    %c12_84 = arith.constant 12 : index
    %664 = memref.load %arg4[%c12_84] : memref<72xf32, #tpu.memory_space<smem>>
    %665 = vector.broadcast %664 : f32 to vector<4x128xf32>
    %666 = arith.mulf %577, %665 : vector<4x128xf32>
    %667 = arith.addf %663, %666 : vector<4x128xf32>
    %c13_85 = arith.constant 13 : index
    %668 = memref.load %arg4[%c13_85] : memref<72xf32, #tpu.memory_space<smem>>
    %669 = vector.broadcast %668 : f32 to vector<4x128xf32>
    %670 = arith.mulf %580, %669 : vector<4x128xf32>
    %671 = arith.addf %667, %670 : vector<4x128xf32>
    %c14_86 = arith.constant 14 : index
    %672 = memref.load %arg4[%c14_86] : memref<72xf32, #tpu.memory_space<smem>>
    %673 = vector.broadcast %672 : f32 to vector<4x128xf32>
    %674 = arith.mulf %583, %673 : vector<4x128xf32>
    %675 = arith.addf %671, %674 : vector<4x128xf32>
    %c0_87 = arith.constant 0 : index
    %c4_88 = arith.constant 4 : index
    %c0_89 = arith.constant 0 : index
    %c0_90 = arith.constant 0 : index
    %676 = vector.load %arg6[%c0_87, %c4_88, %c0_89, %c0_90] : memref<1x24x4x128xf32, #tpu.memory_space<vmem>>, vector<1x1x4x128xf32>
    %677 = vector.shape_cast %676 : vector<1x1x4x128xf32> to vector<4x128xf32>
    %678 = vector.shape_cast %675 : vector<4x128xf32> to vector<1x1x4x128xf32>
    tpu.vector_store %arg6[%c0_87, %c4_88, %c0_89, %c0_90], %678 {strides = array<i32>} : memref<1x24x4x128xf32, #tpu.memory_space<vmem>>, vector<1x1x4x128xf32>,
    %cst_91 = arith.constant 0.000000e+00 : f32
    %679 = vector.broadcast %cst_91 : f32 to vector<4x128xf32>
    %c5_92 = arith.constant 5 : index
    %680 = memref.load %arg5[%c5_92] : memref<24xf32, #tpu.memory_space<smem>>
    %681 = vector.broadcast %680 : f32 to vector<4x128xf32>
    %682 = arith.addf %679, %681 : vector<4x128xf32>
    %c15_93 = arith.constant 15 : index
    %683 = memref.load %arg4[%c15_93] : memref<72xf32, #tpu.memory_space<smem>>
    %684 = vector.broadcast %683 : f32 to vector<4x128xf32>
    %685 = arith.mulf %577, %684 : vector<4x128xf32>
    %686 = arith.addf %682, %685 : vector<4x128xf32>
    %c16_94 = arith.constant 16 : index
    %687 = memref.load %arg4[%c16_94] : memref<72xf32, #tpu.memory_space<smem>>
    %688 = vector.broadcast %687 : f32 to vector<4x128xf32>
    %689 = arith.mulf %580, %688 : vector<4x128xf32>
    %690 = arith.addf %686, %689 : vector<4x128xf32>
    %c17_95 = arith.constant 17 : index
    %691 = memref.load %arg4[%c17_95] : memref<72xf32, #tpu.memory_space<smem>>
    %692 = vector.broadcast %691 : f32 to vector<4x128xf32>
    %693 = arith.mulf %583, %692 : vector<4x128xf32>
    %694 = arith.addf %690, %693 : vector<4x128xf32>
    %c0_96 = arith.constant 0 : index
    %c5_97 = arith.constant 5 : index
    %c0_98 = arith.constant 0 : index
    %c0_99 = arith.constant 0 : index
    %695 = vector.load %arg6[%c0_96, %c5_97, %c0_98, %c0_99] : memref<1x24x4x128xf32, #tpu.memory_space<vmem>>, vector<1x1x4x128xf32>
    %696 = vector.shape_cast %695 : vector<1x1x4x128xf32> to vector<4x128xf32>
    %697 = vector.shape_cast %694 : vector<4x128xf32> to vector<1x1x4x128xf32>
    tpu.vector_store %arg6[%c0_96, %c5_97, %c0_98, %c0_99], %697 {strides = array<i32>} : memref<1x24x4x128xf32, #tpu.memory_space<vmem>>, vector<1x1x4x128xf32>,
    %cst_100 = arith.constant 0.000000e+00 : f32
    %698 = vector.broadcast %cst_100 : f32 to vector<4x128xf32>
    %c6_101 = arith.constant 6 : index
    %699 = memref.load %arg5[%c6_101] : memref<24xf32, #tpu.memory_space<smem>>
    %700 = vector.broadcast %699 : f32 to vector<4x128xf32>
    %701 = arith.addf %698, %700 : vector<4x128xf32>
    %c18_102 = arith.constant 18 : index
    %702 = memref.load %arg4[%c18_102] : memref<72xf32, #tpu.memory_space<smem>>
    %703 = vector.broadcast %702 : f32 to vector<4x128xf32>
    %704 = arith.mulf %577, %703 : vector<4x128xf32>
    %705 = arith.addf %701, %704 : vector<4x128xf32>
    %c19_103 = arith.constant 19 : index
    %706 = memref.load %arg4[%c19_103] : memref<72xf32, #tpu.memory_space<smem>>
    %707 = vector.broadcast %706 : f32 to vector<4x128xf32>
    %708 = arith.mulf %580, %707 : vector<4x128xf32>
    %709 = arith.addf %705, %708 : vector<4x128xf32>
    %c20_104 = arith.constant 20 : index
    %710 = memref.load %arg4[%c20_104] : memref<72xf32, #tpu.memory_space<smem>>
    %711 = vector.broadcast %710 : f32 to vector<4x128xf32>
    %712 = arith.mulf %583, %711 : vector<4x128xf32>
    %713 = arith.addf %709, %712 : vector<4x128xf32>
    %c0_105 = arith.constant 0 : index
    %c6_106 = arith.constant 6 : index
    %c0_107 = arith.constant 0 : index
    %c0_108 = arith.constant 0 : index
    %714 = vector.load %arg6[%c0_105, %c6_106, %c0_107, %c0_108] : memref<1x24x4x128xf32, #tpu.memory_space<vmem>>, vector<1x1x4x128xf32>
    %715 = vector.shape_cast %714 : vector<1x1x4x128xf32> to vector<4x128xf32>
    %716 = vector.shape_cast %713 : vector<4x128xf32> to vector<1x1x4x128xf32>
    tpu.vector_store %arg6[%c0_105, %c6_106, %c0_107, %c0_108], %716 {strides = array<i32>} : memref<1x24x4x128xf32, #tpu.memory_space<vmem>>, vector<1x1x4x128xf32>,
    %cst_109 = arith.constant 0.000000e+00 : f32
    %717 = vector.broadcast %cst_109 : f32 to vector<4x128xf32>
    %c7_110 = arith.constant 7 : index
    %718 = memref.load %arg5[%c7_110] : memref<24xf32, #tpu.memory_space<smem>>
    %719 = vector.broadcast %718 : f32 to vector<4x128xf32>
    %720 = arith.addf %717, %719 : vector<4x128xf32>
    %c21_111 = arith.constant 21 : index
    %721 = memref.load %arg4[%c21_111] : memref<72xf32, #tpu.memory_space<smem>>
    %722 = vector.broadcast %721 : f32 to vector<4x128xf32>
    %723 = arith.mulf %577, %722 : vector<4x128xf32>
    %724 = arith.addf %720, %723 : vector<4x128xf32>
    %c22_112 = arith.constant 22 : index
    %725 = memref.load %arg4[%c22_112] : memref<72xf32, #tpu.memory_space<smem>>
    %726 = vector.broadcast %725 : f32 to vector<4x128xf32>
    %727 = arith.mulf %580, %726 : vector<4x128xf32>
    %728 = arith.addf %724, %727 : vector<4x128xf32>
    %c23_113 = arith.constant 23 : index
    %729 = memref.load %arg4[%c23_113] : memref<72xf32, #tpu.memory_space<smem>>
    %730 = vector.broadcast %729 : f32 to vector<4x128xf32>
    %731 = arith.mulf %583, %730 : vector<4x128xf32>
    %732 = arith.addf %728, %731 : vector<4x128xf32>
    %c0_114 = arith.constant 0 : index
    %c7_115 = arith.constant 7 : index
    %c0_116 = arith.constant 0 : index
    %c0_117 = arith.constant 0 : index
    %733 = vector.load %arg6[%c0_114, %c7_115, %c0_116, %c0_117] : memref<1x24x4x128xf32, #tpu.memory_space<vmem>>, vector<1x1x4x128xf32>
    %734 = vector.shape_cast %733 : vector<1x1x4x128xf32> to vector<4x128xf32>
    %735 = vector.shape_cast %732 : vector<4x128xf32> to vector<1x1x4x128xf32>
    tpu.vector_store %arg6[%c0_114, %c7_115, %c0_116, %c0_117], %735 {strides = array<i32>} : memref<1x24x4x128xf32, #tpu.memory_space<vmem>>, vector<1x1x4x128xf32>,
    %cst_118 = arith.constant 0.000000e+00 : f32
    %736 = vector.broadcast %cst_118 : f32 to vector<4x128xf32>
    %c8_119 = arith.constant 8 : index
    %737 = memref.load %arg5[%c8_119] : memref<24xf32, #tpu.memory_space<smem>>
    %738 = vector.broadcast %737 : f32 to vector<4x128xf32>
    %739 = arith.addf %736, %738 : vector<4x128xf32>
    %c24_120 = arith.constant 24 : index
    %740 = memref.load %arg4[%c24_120] : memref<72xf32, #tpu.memory_space<smem>>
    %741 = vector.broadcast %740 : f32 to vector<4x128xf32>
    %742 = arith.mulf %577, %741 : vector<4x128xf32>
    %743 = arith.addf %739, %742 : vector<4x128xf32>
    %c25_121 = arith.constant 25 : index
    %744 = memref.load %arg4[%c25_121] : memref<72xf32, #tpu.memory_space<smem>>
    %745 = vector.broadcast %744 : f32 to vector<4x128xf32>
    %746 = arith.mulf %580, %745 : vector<4x128xf32>
    %747 = arith.addf %743, %746 : vector<4x128xf32>
    %c26_122 = arith.constant 26 : index
    %748 = memref.load %arg4[%c26_122] : memref<72xf32, #tpu.memory_space<smem>>
    %749 = vector.broadcast %748 : f32 to vector<4x128xf32>
    %750 = arith.mulf %583, %749 : vector<4x128xf32>
    %751 = arith.addf %747, %750 : vector<4x128xf32>
    %c0_123 = arith.constant 0 : index
    %c8_124 = arith.constant 8 : index
    %c0_125 = arith.constant 0 : index
    %c0_126 = arith.constant 0 : index
    %752 = vector.load %arg6[%c0_123, %c8_124, %c0_125, %c0_126] : memref<1x24x4x128xf32, #tpu.memory_space<vmem>>, vector<1x1x4x128xf32>
    %753 = vector.shape_cast %752 : vector<1x1x4x128xf32> to vector<4x128xf32>
    %754 = vector.shape_cast %751 : vector<4x128xf32> to vector<1x1x4x128xf32>
    tpu.vector_store %arg6[%c0_123, %c8_124, %c0_125, %c0_126], %754 {strides = array<i32>} : memref<1x24x4x128xf32, #tpu.memory_space<vmem>>, vector<1x1x4x128xf32>,
    %cst_127 = arith.constant 0.000000e+00 : f32
    %755 = vector.broadcast %cst_127 : f32 to vector<4x128xf32>
    %c9_128 = arith.constant 9 : index
    %756 = memref.load %arg5[%c9_128] : memref<24xf32, #tpu.memory_space<smem>>
    %757 = vector.broadcast %756 : f32 to vector<4x128xf32>
    %758 = arith.addf %755, %757 : vector<4x128xf32>
    %c27_129 = arith.constant 27 : index
    %759 = memref.load %arg4[%c27_129] : memref<72xf32, #tpu.memory_space<smem>>
    %760 = vector.broadcast %759 : f32 to vector<4x128xf32>
    %761 = arith.mulf %577, %760 : vector<4x128xf32>
    %762 = arith.addf %758, %761 : vector<4x128xf32>
    %c28_130 = arith.constant 28 : index
    %763 = memref.load %arg4[%c28_130] : memref<72xf32, #tpu.memory_space<smem>>
    %764 = vector.broadcast %763 : f32 to vector<4x128xf32>
    %765 = arith.mulf %580, %764 : vector<4x128xf32>
    %766 = arith.addf %762, %765 : vector<4x128xf32>
    %c29_131 = arith.constant 29 : index
    %767 = memref.load %arg4[%c29_131] : memref<72xf32, #tpu.memory_space<smem>>
    %768 = vector.broadcast %767 : f32 to vector<4x128xf32>
    %769 = arith.mulf %583, %768 : vector<4x128xf32>
    %770 = arith.addf %766, %769 : vector<4x128xf32>
    %c0_132 = arith.constant 0 : index
    %c9_133 = arith.constant 9 : index
    %c0_134 = arith.constant 0 : index
    %c0_135 = arith.constant 0 : index
    %771 = vector.load %arg6[%c0_132, %c9_133, %c0_134, %c0_135] : memref<1x24x4x128xf32, #tpu.memory_space<vmem>>, vector<1x1x4x128xf32>
    %772 = vector.shape_cast %771 : vector<1x1x4x128xf32> to vector<4x128xf32>
    %773 = vector.shape_cast %770 : vector<4x128xf32> to vector<1x1x4x128xf32>
    tpu.vector_store %arg6[%c0_132, %c9_133, %c0_134, %c0_135], %773 {strides = array<i32>} : memref<1x24x4x128xf32, #tpu.memory_space<vmem>>, vector<1x1x4x128xf32>,
    %cst_136 = arith.constant 0.000000e+00 : f32
    %774 = vector.broadcast %cst_136 : f32 to vector<4x128xf32>
    %c10_137 = arith.constant 10 : index
    %775 = memref.load %arg5[%c10_137] : memref<24xf32, #tpu.memory_space<smem>>
    %776 = vector.broadcast %775 : f32 to vector<4x128xf32>
    %777 = arith.addf %774, %776 : vector<4x128xf32>
    %c30_138 = arith.constant 30 : index
    %778 = memref.load %arg4[%c30_138] : memref<72xf32, #tpu.memory_space<smem>>
    %779 = vector.broadcast %778 : f32 to vector<4x128xf32>
    %780 = arith.mulf %577, %779 : vector<4x128xf32>
    %781 = arith.addf %777, %780 : vector<4x128xf32>
    %c31_139 = arith.constant 31 : index
    %782 = memref.load %arg4[%c31_139] : memref<72xf32, #tpu.memory_space<smem>>
    %783 = vector.broadcast %782 : f32 to vector<4x128xf32>
    %784 = arith.mulf %580, %783 : vector<4x128xf32>
    %785 = arith.addf %781, %784 : vector<4x128xf32>
    %c32_140 = arith.constant 32 : index
    %786 = memref.load %arg4[%c32_140] : memref<72xf32, #tpu.memory_space<smem>>
    %787 = vector.broadcast %786 : f32 to vector<4x128xf32>
    %788 = arith.mulf %583, %787 : vector<4x128xf32>
    %789 = arith.addf %785, %788 : vector<4x128xf32>
    %c0_141 = arith.constant 0 : index
    %c10_142 = arith.constant 10 : index
    %c0_143 = arith.constant 0 : index
    %c0_144 = arith.constant 0 : index
    %790 = vector.load %arg6[%c0_141, %c10_142, %c0_143, %c0_144] : memref<1x24x4x128xf32, #tpu.memory_space<vmem>>, vector<1x1x4x128xf32>
    %791 = vector.shape_cast %790 : vector<1x1x4x128xf32> to vector<4x128xf32>
    %792 = vector.shape_cast %789 : vector<4x128xf32> to vector<1x1x4x128xf32>
    tpu.vector_store %arg6[%c0_141, %c10_142, %c0_143, %c0_144], %792 {strides = array<i32>} : memref<1x24x4x128xf32, #tpu.memory_space<vmem>>, vector<1x1x4x128xf32>,
    %cst_145 = arith.constant 0.000000e+00 : f32
    %793 = vector.broadcast %cst_145 : f32 to vector<4x128xf32>
    %c11_146 = arith.constant 11 : index
    %794 = memref.load %arg5[%c11_146] : memref<24xf32, #tpu.memory_space<smem>>
    %795 = vector.broadcast %794 : f32 to vector<4x128xf32>
    %796 = arith.addf %793, %795 : vector<4x128xf32>
    %c33_147 = arith.constant 33 : index
    %797 = memref.load %arg4[%c33_147] : memref<72xf32, #tpu.memory_space<smem>>
    %798 = vector.broadcast %797 : f32 to vector<4x128xf32>
    %799 = arith.mulf %577, %798 : vector<4x128xf32>
    %800 = arith.addf %796, %799 : vector<4x128xf32>
    %c34_148 = arith.constant 34 : index
    %801 = memref.load %arg4[%c34_148] : memref<72xf32, #tpu.memory_space<smem>>
    %802 = vector.broadcast %801 : f32 to vector<4x128xf32>
    %803 = arith.mulf %580, %802 : vector<4x128xf32>
    %804 = arith.addf %800, %803 : vector<4x128xf32>
    %c35_149 = arith.constant 35 : index
    %805 = memref.load %arg4[%c35_149] : memref<72xf32, #tpu.memory_space<smem>>
    %806 = vector.broadcast %805 : f32 to vector<4x128xf32>
    %807 = arith.mulf %583, %806 : vector<4x128xf32>
    %808 = arith.addf %804, %807 : vector<4x128xf32>
    %c0_150 = arith.constant 0 : index
    %c11_151 = arith.constant 11 : index
    %c0_152 = arith.constant 0 : index
    %c0_153 = arith.constant 0 : index
    %809 = vector.load %arg6[%c0_150, %c11_151, %c0_152, %c0_153] : memref<1x24x4x128xf32, #tpu.memory_space<vmem>>, vector<1x1x4x128xf32>
    %810 = vector.shape_cast %809 : vector<1x1x4x128xf32> to vector<4x128xf32>
    %811 = vector.shape_cast %808 : vector<4x128xf32> to vector<1x1x4x128xf32>
    tpu.vector_store %arg6[%c0_150, %c11_151, %c0_152, %c0_153], %811 {strides = array<i32>} : memref<1x24x4x128xf32, #tpu.memory_space<vmem>>, vector<1x1x4x128xf32>,
    %cst_154 = arith.constant 0.000000e+00 : f32
    %812 = vector.broadcast %cst_154 : f32 to vector<4x128xf32>
    %c12_155 = arith.constant 12 : index
    %813 = memref.load %arg5[%c12_155] : memref<24xf32, #tpu.memory_space<smem>>
    %814 = vector.broadcast %813 : f32 to vector<4x128xf32>
    %815 = arith.addf %812, %814 : vector<4x128xf32>
    %c36_156 = arith.constant 36 : index
    %816 = memref.load %arg4[%c36_156] : memref<72xf32, #tpu.memory_space<smem>>
    %817 = vector.broadcast %816 : f32 to vector<4x128xf32>
    %818 = arith.mulf %577, %817 : vector<4x128xf32>
    %819 = arith.addf %815, %818 : vector<4x128xf32>
    %c37_157 = arith.constant 37 : index
    %820 = memref.load %arg4[%c37_157] : memref<72xf32, #tpu.memory_space<smem>>
    %821 = vector.broadcast %820 : f32 to vector<4x128xf32>
    %822 = arith.mulf %580, %821 : vector<4x128xf32>
    %823 = arith.addf %819, %822 : vector<4x128xf32>
    %c38_158 = arith.constant 38 : index
    %824 = memref.load %arg4[%c38_158] : memref<72xf32, #tpu.memory_space<smem>>
    %825 = vector.broadcast %824 : f32 to vector<4x128xf32>
    %826 = arith.mulf %583, %825 : vector<4x128xf32>
    %827 = arith.addf %823, %826 : vector<4x128xf32>
    %c0_159 = arith.constant 0 : index
    %c12_160 = arith.constant 12 : index
    %c0_161 = arith.constant 0 : index
    %c0_162 = arith.constant 0 : index
    %828 = vector.load %arg6[%c0_159, %c12_160, %c0_161, %c0_162] : memref<1x24x4x128xf32, #tpu.memory_space<vmem>>, vector<1x1x4x128xf32>
    %829 = vector.shape_cast %828 : vector<1x1x4x128xf32> to vector<4x128xf32>
    %830 = vector.shape_cast %827 : vector<4x128xf32> to vector<1x1x4x128xf32>
    tpu.vector_store %arg6[%c0_159, %c12_160, %c0_161, %c0_162], %830 {strides = array<i32>} : memref<1x24x4x128xf32, #tpu.memory_space<vmem>>, vector<1x1x4x128xf32>,
    %cst_163 = arith.constant 0.000000e+00 : f32
    %831 = vector.broadcast %cst_163 : f32 to vector<4x128xf32>
    %c13_164 = arith.constant 13 : index
    %832 = memref.load %arg5[%c13_164] : memref<24xf32, #tpu.memory_space<smem>>
    %833 = vector.broadcast %832 : f32 to vector<4x128xf32>
    %834 = arith.addf %831, %833 : vector<4x128xf32>
    %c39_165 = arith.constant 39 : index
    %835 = memref.load %arg4[%c39_165] : memref<72xf32, #tpu.memory_space<smem>>
    %836 = vector.broadcast %835 : f32 to vector<4x128xf32>
    %837 = arith.mulf %577, %836 : vector<4x128xf32>
    %838 = arith.addf %834, %837 : vector<4x128xf32>
    %c40_166 = arith.constant 40 : index
    %839 = memref.load %arg4[%c40_166] : memref<72xf32, #tpu.memory_space<smem>>
    %840 = vector.broadcast %839 : f32 to vector<4x128xf32>
    %841 = arith.mulf %580, %840 : vector<4x128xf32>
    %842 = arith.addf %838, %841 : vector<4x128xf32>
    %c41_167 = arith.constant 41 : index
    %843 = memref.load %arg4[%c41_167] : memref<72xf32, #tpu.memory_space<smem>>
    %844 = vector.broadcast %843 : f32 to vector<4x128xf32>
    %845 = arith.mulf %583, %844 : vector<4x128xf32>
    %846 = arith.addf %842, %845 : vector<4x128xf32>
    %c0_168 = arith.constant 0 : index
    %c13_169 = arith.constant 13 : index
    %c0_170 = arith.constant 0 : index
    %c0_171 = arith.constant 0 : index
    %847 = vector.load %arg6[%c0_168, %c13_169, %c0_170, %c0_171] : memref<1x24x4x128xf32, #tpu.memory_space<vmem>>, vector<1x1x4x128xf32>
    %848 = vector.shape_cast %847 : vector<1x1x4x128xf32> to vector<4x128xf32>
    %849 = vector.shape_cast %846 : vector<4x128xf32> to vector<1x1x4x128xf32>
    tpu.vector_store %arg6[%c0_168, %c13_169, %c0_170, %c0_171], %849 {strides = array<i32>} : memref<1x24x4x128xf32, #tpu.memory_space<vmem>>, vector<1x1x4x128xf32>,
    %cst_172 = arith.constant 0.000000e+00 : f32
    %850 = vector.broadcast %cst_172 : f32 to vector<4x128xf32>
    %c14_173 = arith.constant 14 : index
    %851 = memref.load %arg5[%c14_173] : memref<24xf32, #tpu.memory_space<smem>>
    %852 = vector.broadcast %851 : f32 to vector<4x128xf32>
    %853 = arith.addf %850, %852 : vector<4x128xf32>
    %c42_174 = arith.constant 42 : index
    %854 = memref.load %arg4[%c42_174] : memref<72xf32, #tpu.memory_space<smem>>
    %855 = vector.broadcast %854 : f32 to vector<4x128xf32>
    %856 = arith.mulf %577, %855 : vector<4x128xf32>
    %857 = arith.addf %853, %856 : vector<4x128xf32>
    %c43_175 = arith.constant 43 : index
    %858 = memref.load %arg4[%c43_175] : memref<72xf32, #tpu.memory_space<smem>>
    %859 = vector.broadcast %858 : f32 to vector<4x128xf32>
    %860 = arith.mulf %580, %859 : vector<4x128xf32>
    %861 = arith.addf %857, %860 : vector<4x128xf32>
    %c44_176 = arith.constant 44 : index
    %862 = memref.load %arg4[%c44_176] : memref<72xf32, #tpu.memory_space<smem>>
    %863 = vector.broadcast %862 : f32 to vector<4x128xf32>
    %864 = arith.mulf %583, %863 : vector<4x128xf32>
    %865 = arith.addf %861, %864 : vector<4x128xf32>
    %c0_177 = arith.constant 0 : index
    %c14_178 = arith.constant 14 : index
    %c0_179 = arith.constant 0 : index
    %c0_180 = arith.constant 0 : index
    %866 = vector.load %arg6[%c0_177, %c14_178, %c0_179, %c0_180] : memref<1x24x4x128xf32, #tpu.memory_space<vmem>>, vector<1x1x4x128xf32>
    %867 = vector.shape_cast %866 : vector<1x1x4x128xf32> to vector<4x128xf32>
    %868 = vector.shape_cast %865 : vector<4x128xf32> to vector<1x1x4x128xf32>
    tpu.vector_store %arg6[%c0_177, %c14_178, %c0_179, %c0_180], %868 {strides = array<i32>} : memref<1x24x4x128xf32, #tpu.memory_space<vmem>>, vector<1x1x4x128xf32>,
    %cst_181 = arith.constant 0.000000e+00 : f32
    %869 = vector.broadcast %cst_181 : f32 to vector<4x128xf32>
    %c15_182 = arith.constant 15 : index
    %870 = memref.load %arg5[%c15_182] : memref<24xf32, #tpu.memory_space<smem>>
    %871 = vector.broadcast %870 : f32 to vector<4x128xf32>
    %872 = arith.addf %869, %871 : vector<4x128xf32>
    %c45_183 = arith.constant 45 : index
    %873 = memref.load %arg4[%c45_183] : memref<72xf32, #tpu.memory_space<smem>>
    %874 = vector.broadcast %873 : f32 to vector<4x128xf32>
    %875 = arith.mulf %577, %874 : vector<4x128xf32>
    %876 = arith.addf %872, %875 : vector<4x128xf32>
    %c46_184 = arith.constant 46 : index
    %877 = memref.load %arg4[%c46_184] : memref<72xf32, #tpu.memory_space<smem>>
    %878 = vector.broadcast %877 : f32 to vector<4x128xf32>
    %879 = arith.mulf %580, %878 : vector<4x128xf32>
    %880 = arith.addf %876, %879 : vector<4x128xf32>
    %c47_185 = arith.constant 47 : index
    %881 = memref.load %arg4[%c47_185] : memref<72xf32, #tpu.memory_space<smem>>
    %882 = vector.broadcast %881 : f32 to vector<4x128xf32>
    %883 = arith.mulf %583, %882 : vector<4x128xf32>
    %884 = arith.addf %880, %883 : vector<4x128xf32>
    %c0_186 = arith.constant 0 : index
    %c15_187 = arith.constant 15 : index
    %c0_188 = arith.constant 0 : index
    %c0_189 = arith.constant 0 : index
    %885 = vector.load %arg6[%c0_186, %c15_187, %c0_188, %c0_189] : memref<1x24x4x128xf32, #tpu.memory_space<vmem>>, vector<1x1x4x128xf32>
    %886 = vector.shape_cast %885 : vector<1x1x4x128xf32> to vector<4x128xf32>
    %887 = vector.shape_cast %884 : vector<4x128xf32> to vector<1x1x4x128xf32>
    tpu.vector_store %arg6[%c0_186, %c15_187, %c0_188, %c0_189], %887 {strides = array<i32>} : memref<1x24x4x128xf32, #tpu.memory_space<vmem>>, vector<1x1x4x128xf32>,
    %cst_190 = arith.constant 0.000000e+00 : f32
    %888 = vector.broadcast %cst_190 : f32 to vector<4x128xf32>
    %c16_191 = arith.constant 16 : index
    %889 = memref.load %arg5[%c16_191] : memref<24xf32, #tpu.memory_space<smem>>
    %890 = vector.broadcast %889 : f32 to vector<4x128xf32>
    %891 = arith.addf %888, %890 : vector<4x128xf32>
    %c48_192 = arith.constant 48 : index
    %892 = memref.load %arg4[%c48_192] : memref<72xf32, #tpu.memory_space<smem>>
    %893 = vector.broadcast %892 : f32 to vector<4x128xf32>
    %894 = arith.mulf %577, %893 : vector<4x128xf32>
    %895 = arith.addf %891, %894 : vector<4x128xf32>
    %c49_193 = arith.constant 49 : index
    %896 = memref.load %arg4[%c49_193] : memref<72xf32, #tpu.memory_space<smem>>
    %897 = vector.broadcast %896 : f32 to vector<4x128xf32>
    %898 = arith.mulf %580, %897 : vector<4x128xf32>
    %899 = arith.addf %895, %898 : vector<4x128xf32>
    %c50_194 = arith.constant 50 : index
    %900 = memref.load %arg4[%c50_194] : memref<72xf32, #tpu.memory_space<smem>>
    %901 = vector.broadcast %900 : f32 to vector<4x128xf32>
    %902 = arith.mulf %583, %901 : vector<4x128xf32>
    %903 = arith.addf %899, %902 : vector<4x128xf32>
    %c0_195 = arith.constant 0 : index
    %c16_196 = arith.constant 16 : index
    %c0_197 = arith.constant 0 : index
    %c0_198 = arith.constant 0 : index
    %904 = vector.load %arg6[%c0_195, %c16_196, %c0_197, %c0_198] : memref<1x24x4x128xf32, #tpu.memory_space<vmem>>, vector<1x1x4x128xf32>
    %905 = vector.shape_cast %904 : vector<1x1x4x128xf32> to vector<4x128xf32>
    %906 = vector.shape_cast %903 : vector<4x128xf32> to vector<1x1x4x128xf32>
    tpu.vector_store %arg6[%c0_195, %c16_196, %c0_197, %c0_198], %906 {strides = array<i32>} : memref<1x24x4x128xf32, #tpu.memory_space<vmem>>, vector<1x1x4x128xf32>,
    %cst_199 = arith.constant 0.000000e+00 : f32
    %907 = vector.broadcast %cst_199 : f32 to vector<4x128xf32>
    %c17_200 = arith.constant 17 : index
    %908 = memref.load %arg5[%c17_200] : memref<24xf32, #tpu.memory_space<smem>>
    %909 = vector.broadcast %908 : f32 to vector<4x128xf32>
    %910 = arith.addf %907, %909 : vector<4x128xf32>
    %c51_201 = arith.constant 51 : index
    %911 = memref.load %arg4[%c51_201] : memref<72xf32, #tpu.memory_space<smem>>
    %912 = vector.broadcast %911 : f32 to vector<4x128xf32>
    %913 = arith.mulf %577, %912 : vector<4x128xf32>
    %914 = arith.addf %910, %913 : vector<4x128xf32>
    %c52_202 = arith.constant 52 : index
    %915 = memref.load %arg4[%c52_202] : memref<72xf32, #tpu.memory_space<smem>>
    %916 = vector.broadcast %915 : f32 to vector<4x128xf32>
    %917 = arith.mulf %580, %916 : vector<4x128xf32>
    %918 = arith.addf %914, %917 : vector<4x128xf32>
    %c53_203 = arith.constant 53 : index
    %919 = memref.load %arg4[%c53_203] : memref<72xf32, #tpu.memory_space<smem>>
    %920 = vector.broadcast %919 : f32 to vector<4x128xf32>
    %921 = arith.mulf %583, %920 : vector<4x128xf32>
    %922 = arith.addf %918, %921 : vector<4x128xf32>
    %c0_204 = arith.constant 0 : index
    %c17_205 = arith.constant 17 : index
    %c0_206 = arith.constant 0 : index
    %c0_207 = arith.constant 0 : index
    %923 = vector.load %arg6[%c0_204, %c17_205, %c0_206, %c0_207] : memref<1x24x4x128xf32, #tpu.memory_space<vmem>>, vector<1x1x4x128xf32>
    %924 = vector.shape_cast %923 : vector<1x1x4x128xf32> to vector<4x128xf32>
    %925 = vector.shape_cast %922 : vector<4x128xf32> to vector<1x1x4x128xf32>
    tpu.vector_store %arg6[%c0_204, %c17_205, %c0_206, %c0_207], %925 {strides = array<i32>} : memref<1x24x4x128xf32, #tpu.memory_space<vmem>>, vector<1x1x4x128xf32>,
    %cst_208 = arith.constant 0.000000e+00 : f32
    %926 = vector.broadcast %cst_208 : f32 to vector<4x128xf32>
    %c18_209 = arith.constant 18 : index
    %927 = memref.load %arg5[%c18_209] : memref<24xf32, #tpu.memory_space<smem>>
    %928 = vector.broadcast %927 : f32 to vector<4x128xf32>
    %929 = arith.addf %926, %928 : vector<4x128xf32>
    %c54_210 = arith.constant 54 : index
    %930 = memref.load %arg4[%c54_210] : memref<72xf32, #tpu.memory_space<smem>>
    %931 = vector.broadcast %930 : f32 to vector<4x128xf32>
    %932 = arith.mulf %577, %931 : vector<4x128xf32>
    %933 = arith.addf %929, %932 : vector<4x128xf32>
    %c55_211 = arith.constant 55 : index
    %934 = memref.load %arg4[%c55_211] : memref<72xf32, #tpu.memory_space<smem>>
    %935 = vector.broadcast %934 : f32 to vector<4x128xf32>
    %936 = arith.mulf %580, %935 : vector<4x128xf32>
    %937 = arith.addf %933, %936 : vector<4x128xf32>
    %c56_212 = arith.constant 56 : index
    %938 = memref.load %arg4[%c56_212] : memref<72xf32, #tpu.memory_space<smem>>
    %939 = vector.broadcast %938 : f32 to vector<4x128xf32>
    %940 = arith.mulf %583, %939 : vector<4x128xf32>
    %941 = arith.addf %937, %940 : vector<4x128xf32>
    %c0_213 = arith.constant 0 : index
    %c18_214 = arith.constant 18 : index
    %c0_215 = arith.constant 0 : index
    %c0_216 = arith.constant 0 : index
    %942 = vector.load %arg6[%c0_213, %c18_214, %c0_215, %c0_216] : memref<1x24x4x128xf32, #tpu.memory_space<vmem>>, vector<1x1x4x128xf32>
    %943 = vector.shape_cast %942 : vector<1x1x4x128xf32> to vector<4x128xf32>
    %944 = vector.shape_cast %941 : vector<4x128xf32> to vector<1x1x4x128xf32>
    tpu.vector_store %arg6[%c0_213, %c18_214, %c0_215, %c0_216], %944 {strides = array<i32>} : memref<1x24x4x128xf32, #tpu.memory_space<vmem>>, vector<1x1x4x128xf32>,
    %cst_217 = arith.constant 0.000000e+00 : f32
    %945 = vector.broadcast %cst_217 : f32 to vector<4x128xf32>
    %c19_218 = arith.constant 19 : index
    %946 = memref.load %arg5[%c19_218] : memref<24xf32, #tpu.memory_space<smem>>
    %947 = vector.broadcast %946 : f32 to vector<4x128xf32>
    %948 = arith.addf %945, %947 : vector<4x128xf32>
    %c57_219 = arith.constant 57 : index
    %949 = memref.load %arg4[%c57_219] : memref<72xf32, #tpu.memory_space<smem>>
    %950 = vector.broadcast %949 : f32 to vector<4x128xf32>
    %951 = arith.mulf %577, %950 : vector<4x128xf32>
    %952 = arith.addf %948, %951 : vector<4x128xf32>
    %c58_220 = arith.constant 58 : index
    %953 = memref.load %arg4[%c58_220] : memref<72xf32, #tpu.memory_space<smem>>
    %954 = vector.broadcast %953 : f32 to vector<4x128xf32>
    %955 = arith.mulf %580, %954 : vector<4x128xf32>
    %956 = arith.addf %952, %955 : vector<4x128xf32>
    %c59_221 = arith.constant 59 : index
    %957 = memref.load %arg4[%c59_221] : memref<72xf32, #tpu.memory_space<smem>>
    %958 = vector.broadcast %957 : f32 to vector<4x128xf32>
    %959 = arith.mulf %583, %958 : vector<4x128xf32>
    %960 = arith.addf %956, %959 : vector<4x128xf32>
    %c0_222 = arith.constant 0 : index
    %c19_223 = arith.constant 19 : index
    %c0_224 = arith.constant 0 : index
    %c0_225 = arith.constant 0 : index
    %961 = vector.load %arg6[%c0_222, %c19_223, %c0_224, %c0_225] : memref<1x24x4x128xf32, #tpu.memory_space<vmem>>, vector<1x1x4x128xf32>
    %962 = vector.shape_cast %961 : vector<1x1x4x128xf32> to vector<4x128xf32>
    %963 = vector.shape_cast %960 : vector<4x128xf32> to vector<1x1x4x128xf32>
    tpu.vector_store %arg6[%c0_222, %c19_223, %c0_224, %c0_225], %963 {strides = array<i32>} : memref<1x24x4x128xf32, #tpu.memory_space<vmem>>, vector<1x1x4x128xf32>,
    %cst_226 = arith.constant 0.000000e+00 : f32
    %964 = vector.broadcast %cst_226 : f32 to vector<4x128xf32>
    %c20_227 = arith.constant 20 : index
    %965 = memref.load %arg5[%c20_227] : memref<24xf32, #tpu.memory_space<smem>>
    %966 = vector.broadcast %965 : f32 to vector<4x128xf32>
    %967 = arith.addf %964, %966 : vector<4x128xf32>
    %c60_228 = arith.constant 60 : index
    %968 = memref.load %arg4[%c60_228] : memref<72xf32, #tpu.memory_space<smem>>
    %969 = vector.broadcast %968 : f32 to vector<4x128xf32>
    %970 = arith.mulf %577, %969 : vector<4x128xf32>
    %971 = arith.addf %967, %970 : vector<4x128xf32>
    %c61_229 = arith.constant 61 : index
    %972 = memref.load %arg4[%c61_229] : memref<72xf32, #tpu.memory_space<smem>>
    %973 = vector.broadcast %972 : f32 to vector<4x128xf32>
    %974 = arith.mulf %580, %973 : vector<4x128xf32>
    %975 = arith.addf %971, %974 : vector<4x128xf32>
    %c62_230 = arith.constant 62 : index
    %976 = memref.load %arg4[%c62_230] : memref<72xf32, #tpu.memory_space<smem>>
    %977 = vector.broadcast %976 : f32 to vector<4x128xf32>
    %978 = arith.mulf %583, %977 : vector<4x128xf32>
    %979 = arith.addf %975, %978 : vector<4x128xf32>
    %c0_231 = arith.constant 0 : index
    %c20_232 = arith.constant 20 : index
    %c0_233 = arith.constant 0 : index
    %c0_234 = arith.constant 0 : index
    %980 = vector.load %arg6[%c0_231, %c20_232, %c0_233, %c0_234] : memref<1x24x4x128xf32, #tpu.memory_space<vmem>>, vector<1x1x4x128xf32>
    %981 = vector.shape_cast %980 : vector<1x1x4x128xf32> to vector<4x128xf32>
    %982 = vector.shape_cast %979 : vector<4x128xf32> to vector<1x1x4x128xf32>
    tpu.vector_store %arg6[%c0_231, %c20_232, %c0_233, %c0_234], %982 {strides = array<i32>} : memref<1x24x4x128xf32, #tpu.memory_space<vmem>>, vector<1x1x4x128xf32>,
    %cst_235 = arith.constant 0.000000e+00 : f32
    %983 = vector.broadcast %cst_235 : f32 to vector<4x128xf32>
    %c21_236 = arith.constant 21 : index
    %984 = memref.load %arg5[%c21_236] : memref<24xf32, #tpu.memory_space<smem>>
    %985 = vector.broadcast %984 : f32 to vector<4x128xf32>
    %986 = arith.addf %983, %985 : vector<4x128xf32>
    %c63_237 = arith.constant 63 : index
    %987 = memref.load %arg4[%c63_237] : memref<72xf32, #tpu.memory_space<smem>>
    %988 = vector.broadcast %987 : f32 to vector<4x128xf32>
    %989 = arith.mulf %577, %988 : vector<4x128xf32>
    %990 = arith.addf %986, %989 : vector<4x128xf32>
    %c64_238 = arith.constant 64 : index
    %991 = memref.load %arg4[%c64_238] : memref<72xf32, #tpu.memory_space<smem>>
    %992 = vector.broadcast %991 : f32 to vector<4x128xf32>
    %993 = arith.mulf %580, %992 : vector<4x128xf32>
    %994 = arith.addf %990, %993 : vector<4x128xf32>
    %c65_239 = arith.constant 65 : index
    %995 = memref.load %arg4[%c65_239] : memref<72xf32, #tpu.memory_space<smem>>
    %996 = vector.broadcast %995 : f32 to vector<4x128xf32>
    %997 = arith.mulf %583, %996 : vector<4x128xf32>
    %998 = arith.addf %994, %997 : vector<4x128xf32>
    %c0_240 = arith.constant 0 : index
    %c21_241 = arith.constant 21 : index
    %c0_242 = arith.constant 0 : index
    %c0_243 = arith.constant 0 : index
    %999 = vector.load %arg6[%c0_240, %c21_241, %c0_242, %c0_243] : memref<1x24x4x128xf32, #tpu.memory_space<vmem>>, vector<1x1x4x128xf32>
    %1000 = vector.shape_cast %999 : vector<1x1x4x128xf32> to vector<4x128xf32>
    %1001 = vector.shape_cast %998 : vector<4x128xf32> to vector<1x1x4x128xf32>
    tpu.vector_store %arg6[%c0_240, %c21_241, %c0_242, %c0_243], %1001 {strides = array<i32>} : memref<1x24x4x128xf32, #tpu.memory_space<vmem>>, vector<1x1x4x128xf32>,
    %cst_244 = arith.constant 0.000000e+00 : f32
    %1002 = vector.broadcast %cst_244 : f32 to vector<4x128xf32>
    %c22_245 = arith.constant 22 : index
    %1003 = memref.load %arg5[%c22_245] : memref<24xf32, #tpu.memory_space<smem>>
    %1004 = vector.broadcast %1003 : f32 to vector<4x128xf32>
    %1005 = arith.addf %1002, %1004 : vector<4x128xf32>
    %c66_246 = arith.constant 66 : index
    %1006 = memref.load %arg4[%c66_246] : memref<72xf32, #tpu.memory_space<smem>>
    %1007 = vector.broadcast %1006 : f32 to vector<4x128xf32>
    %1008 = arith.mulf %577, %1007 : vector<4x128xf32>
    %1009 = arith.addf %1005, %1008 : vector<4x128xf32>
    %c67_247 = arith.constant 67 : index
    %1010 = memref.load %arg4[%c67_247] : memref<72xf32, #tpu.memory_space<smem>>
    %1011 = vector.broadcast %1010 : f32 to vector<4x128xf32>
    %1012 = arith.mulf %580, %1011 : vector<4x128xf32>
    %1013 = arith.addf %1009, %1012 : vector<4x128xf32>
    %c68_248 = arith.constant 68 : index
    %1014 = memref.load %arg4[%c68_248] : memref<72xf32, #tpu.memory_space<smem>>
    %1015 = vector.broadcast %1014 : f32 to vector<4x128xf32>
    %1016 = arith.mulf %583, %1015 : vector<4x128xf32>
    %1017 = arith.addf %1013, %1016 : vector<4x128xf32>
    %c0_249 = arith.constant 0 : index
    %c22_250 = arith.constant 22 : index
    %c0_251 = arith.constant 0 : index
    %c0_252 = arith.constant 0 : index
    %1018 = vector.load %arg6[%c0_249, %c22_250, %c0_251, %c0_252] : memref<1x24x4x128xf32, #tpu.memory_space<vmem>>, vector<1x1x4x128xf32>
    %1019 = vector.shape_cast %1018 : vector<1x1x4x128xf32> to vector<4x128xf32>
    %1020 = vector.shape_cast %1017 : vector<4x128xf32> to vector<1x1x4x128xf32>
    tpu.vector_store %arg6[%c0_249, %c22_250, %c0_251, %c0_252], %1020 {strides = array<i32>} : memref<1x24x4x128xf32, #tpu.memory_space<vmem>>, vector<1x1x4x128xf32>,
    %cst_253 = arith.constant 0.000000e+00 : f32
    %1021 = vector.broadcast %cst_253 : f32 to vector<4x128xf32>
    %c23_254 = arith.constant 23 : index
    %1022 = memref.load %arg5[%c23_254] : memref<24xf32, #tpu.memory_space<smem>>
    %1023 = vector.broadcast %1022 : f32 to vector<4x128xf32>
    %1024 = arith.addf %1021, %1023 : vector<4x128xf32>
    %c69_255 = arith.constant 69 : index
    %1025 = memref.load %arg4[%c69_255] : memref<72xf32, #tpu.memory_space<smem>>
    %1026 = vector.broadcast %1025 : f32 to vector<4x128xf32>
    %1027 = arith.mulf %577, %1026 : vector<4x128xf32>
    %1028 = arith.addf %1024, %1027 : vector<4x128xf32>
    %c70_256 = arith.constant 70 : index
    %1029 = memref.load %arg4[%c70_256] : memref<72xf32, #tpu.memory_space<smem>>
    %1030 = vector.broadcast %1029 : f32 to vector<4x128xf32>
    %1031 = arith.mulf %580, %1030 : vector<4x128xf32>
    %1032 = arith.addf %1028, %1031 : vector<4x128xf32>
    %c71_257 = arith.constant 71 : index
    %1033 = memref.load %arg4[%c71_257] : memref<72xf32, #tpu.memory_space<smem>>
    %1034 = vector.broadcast %1033 : f32 to vector<4x128xf32>
    %1035 = arith.mulf %583, %1034 : vector<4x128xf32>
    %1036 = arith.addf %1032, %1035 : vector<4x128xf32>
    %c0_258 = arith.constant 0 : index
    %c23_259 = arith.constant 23 : index
    %c0_260 = arith.constant 0 : index
    %c0_261 = arith.constant 0 : index
    %1037 = vector.load %arg6[%c0_258, %c23_259, %c0_260, %c0_261] : memref<1x24x4x128xf32, #tpu.memory_space<vmem>>, vector<1x1x4x128xf32>
    %1038 = vector.shape_cast %1037 : vector<1x1x4x128xf32> to vector<4x128xf32>
    %1039 = vector.shape_cast %1036 : vector<4x128xf32> to vector<1x1x4x128xf32>
    tpu.vector_store %arg6[%c0_258, %c23_259, %c0_260, %c0_261], %1039 {strides = array<i32>} : memref<1x24x4x128xf32, #tpu.memory_space<vmem>>, vector<1x1x4x128xf32>,
    return
  }
  func.func @transform_0(%arg0: i32) -> (i32, i32, i32, i32) {
    %c0_i32 = arith.constant 0 : i32
    %c0_i32_0 = arith.constant 0 : i32
    %c0_i32_1 = arith.constant 0 : i32
    %c0_i32_2 = arith.constant 0 : i32
    return %arg0, %c0_i32, %c0_i32_0, %c0_i32_1 : i32, i32, i32, i32
  }
  func.func @transform_1(%arg0: i32) -> i32 {
    %c0_i32 = arith.constant 0 : i32
    %c0_i32_0 = arith.constant 0 : i32
    return %c0_i32 : i32
  }
  func.func @transform_2(%arg0: i32) -> i32 {
    %c0_i32 = arith.constant 0 : i32
    %c0_i32_0 = arith.constant 0 : i32
    return %c0_i32 : i32
  }
  func.func @transform_3(%arg0: i32) -> i32 {
    %c0_i32 = arith.constant 0 : i32
    %c0_i32_0 = arith.constant 0 : i32
    return %c0_i32 : i32
  }
  func.func @transform_4(%arg0: i32) -> i32 {
    %c0_i32 = arith.constant 0 : i32
    %c0_i32_0 = arith.constant 0 : i32
    return %c0_i32 : i32
  }
  func.func @transform_5(%arg0: i32) -> (i32, i32, i32, i32) {
    %c0_i32 = arith.constant 0 : i32
    %c0_i32_0 = arith.constant 0 : i32
    %c0_i32_1 = arith.constant 0 : i32
    %c0_i32_2 = arith.constant 0 : i32
    return %arg0, %c0_i32, %c0_i32_0, %c0_i32_1 : i32, i32, i32, i32
  }
}

</mosaic_0001>

<llo_original>
// kernel: tpu_custom_call.1
$region0: #{tpu_custom_call.1}
  #allocation0 [shape = 'u32[]', space=smem, size = 0x4, offset = 0x4, fixed_abs, tag = 'smem constant byte address 0x4 - core index']
  #allocation1 [shape = 'u32[144,128]{1,0:T(1,128)}', space=vmem, size = 0x12000, scoped, tag = 'internal scratch']
  %s0 = inlined_call_operand.hbm [shape: f32[2,3,4,128], index: 0, kind: input, shape index: {}]
  %s1 = inlined_call_operand.vmem [shape: f32[81], index: 1, kind: input, shape index: {}]
  %s2 = inlined_call_operand.vmem [shape: f32[3], index: 2, kind: input, shape index: {}]
  %s3 = inlined_call_operand.vmem [shape: f32[72], index: 3, kind: input, shape index: {}]
  %s4 = inlined_call_operand.vmem [shape: f32[24], index: 4, kind: input, shape index: {}]
  %s5 = inlined_call_operand.hbm [shape: f32[2,24,4,128], index: 5, kind: output, shape index: {}]
  %s6 = sld [smem:[#allocation0]]
  $region73: #{tpu_custom_call.1} parent=0
    _
  %s8 = ssub.s32 1, %s6
  %s9 = scalar_select 0, %s8, %s6
  $region1: #{tpu_custom_call.1} parent=0
    #allocation2 [shape = 'u8[12288]{0}', space=vmem, size = 0x3000, scoped, tag = 'input window, operand 0']
    #allocation3 [shape = 's32[2]{0}', space=sflag, size = 0x8, scoped, tag = 'scoped memory for tpu_custom_call.1']
    #allocation4 [shape = 's32[2]{0}', space=sflag, size = 0x8, scoped, tag = 'scoped memory for tpu_custom_call.1']
    #allocation5 [shape = 's32[2]{0}', space=sflag, size = 0x8, scoped, tag = 'scoped memory for tpu_custom_call.1']
    #allocation6 [shape = 'u8[512]{0}', space=smem, size = 0x200, scoped, tag = 'input window, operand 1, single buffered']
    #allocation7 [shape = 'u8[512]{0}', space=smem, size = 0x200, scoped, tag = 'input window, operand 2, single buffered']
    #allocation8 [shape = 's32[1]{0}', space=sflag, size = 0x4, scoped, tag = 'scoped memory for tpu_custom_call.1']
    #allocation9 [shape = 'u8[512]{0}', space=smem, size = 0x200, scoped, tag = 'input window, operand 3, single buffered']
    #allocation10 [shape = 'u8[512]{0}', space=smem, size = 0x200, scoped, tag = 'input window, operand 4, single buffered']
    #allocation11 [shape = 's32[1]{0}', space=sflag, size = 0x4, scoped, tag = 'scoped memory for tpu_custom_call.1']
    #allocation12 [shape = 'u8[98304]{0}', space=vmem, size = 0x18000, scoped, tag = 'output window, operand 0']
    %10 = vsyncpa [#allocation3], 0
    %s11 = scalar_lea.sflag [#allocation3], 1
    %12 = vsyncpa %s11, 0
    %13 = vsyncpa [#allocation5], 0
    %14 = vsyncpa [#allocation8], 0
    %15 = vsyncpa [#allocation11], 0
    %16 = vsyncpa [#allocation4], 0
    %s17 = scalar_lea.sflag [#allocation4], 1
    %18 = vsyncpa %s17, 0
    loop: start=0, step=1, limit=4
    $region2: #{tpu_custom_call.1} parent=1 // loop_pre_header
      _
    $region3: #{tpu_custom_call.1} parent=1 // loop_header
      %s20 = sphi 0, %s24
      %p21 = scmp.ge.s32.totalorder %s20, 4
      %s30 = sphi 0, %s32
      %s33 = sphi 0, %s30
      %s34 = sphi 0, %s33
      %s50 = sphi 0, %s34
      %s54 = sphi 0, %s54
      %s56 = sphi 0, %s54
      %s57 = sphi 0, %s56
      %s71 = sphi 0, %s57
      %s75 = sphi 0, %s75
      %s77 = sphi 0, %s75
      %s78 = sphi 0, %s77
      %s92 = sphi 0, %s78
      %s96 = sphi 0, %s96
      %s98 = sphi 0, %s96
      %s99 = sphi 0, %s98
      %s113 = sphi 0, %s99
      %s117 = sphi 0, %s117
      %s119 = sphi 0, %s117
      %s120 = sphi 0, %s119
      %s134 = sphi 0, %s120
      %s140 = sphi 0, %s142
      %s143 = sphi 0, %s140
      %s144 = sphi 0, %s143
      %s160 = sphi 0, %s144
    $region4: #{tpu_custom_call.1} parent=1 // loop_header_branch
      %23 = sbr.rel (%p21) target = $region8
    $region5: #{tpu_custom_call.1} parent=1 // loop_body
      %s25 = ssub.s32 %s20, 1
      %s26 = ssub.s32 %s20, 2
      %s27 = sadd.s32 %s20, 1
      %s28 = ssub.s32 %s20, %s27
      %p29 = scmp.eq.s32.totalorder %s28, 0
      %s31 = sadd.s32 %s30, 1
      %s32 = scalar_select %p29, %s30, %s31
      %p35 = pneg %p29
      %p36 = scmp.eq.s32.totalorder %s20, 1
      %p37 = por %p35, %p36
      %p38 = scmp.ne.s32.totalorder %s30, %s33
      %p39 = scmp.eq.s32.totalorder %s20, 0
      %p40 = por %p38, %p39
      %p41 = scmp.ne.s32.totalorder %s30, %s33
      %p42 = scmp.eq.s32.totalorder %s25, 1
      %p43 = por %p41, %p42
      %p44 = scmp.ne.s32.totalorder %s33, %s34
      %p45 = scmp.eq.s32.totalorder %s25, 0
      %p46 = por %p44, %p45
      %p47 = scmp.ne.s32.totalorder %s33, %s34
      %p48 = scmp.eq.s32.totalorder %s26, 1
      %p49 = por %p47, %p48
      %p51 = scmp.ne.s32.totalorder %s34, %s50
      %p52 = scmp.eq.s32.totalorder %s26, 0
      %p53 = por %p51, %p52
      %s55 = sadd.s32 %s54, 1
      %p58 = scmp.eq.s32.totalorder %s20, 1
      %p59 = scmp.ne.s32.totalorder %s54, %s56
      %p60 = scmp.eq.s32.totalorder %s20, 0
      %p61 = por %p59, %p60
      %p62 = scmp.ne.s32.totalorder %s54, %s56
      %p63 = scmp.eq.s32.totalorder %s25, 1
      %p64 = por %p62, %p63
      %p65 = scmp.ne.s32.totalorder %s56, %s57
      %p66 = scmp.eq.s32.totalorder %s25, 0
      %p67 = por %p65, %p66
      %p68 = scmp.ne.s32.totalorder %s56, %s57
      %p69 = scmp.eq.s32.totalorder %s26, 1
      %p70 = por %p68, %p69
      %p72 = scmp.ne.s32.totalorder %s57, %s71
      %p73 = scmp.eq.s32.totalorder %s26, 0
      %p74 = por %p72, %p73
      %s76 = sadd.s32 %s75, 1
      %p79 = scmp.eq.s32.totalorder %s20, 1
      %p80 = scmp.ne.s32.totalorder %s75, %s77
      %p81 = scmp.eq.s32.totalorder %s20, 0
      %p82 = por %p80, %p81
      %p83 = scmp.ne.s32.totalorder %s75, %s77
      %p84 = scmp.eq.s32.totalorder %s25, 1
      %p85 = por %p83, %p84
      %p86 = scmp.ne.s32.totalorder %s77, %s78
      %p87 = scmp.eq.s32.totalorder %s25, 0
      %p88 = por %p86, %p87
      %p89 = scmp.ne.s32.totalorder %s77, %s78
      %p90 = scmp.eq.s32.totalorder %s26, 1
      %p91 = por %p89, %p90
      %p93 = scmp.ne.s32.totalorder %s78, %s92
      %p94 = scmp.eq.s32.totalorder %s26, 0
      %p95 = por %p93, %p94
      %s97 = sadd.s32 %s96, 1
      %p100 = scmp.eq.s32.totalorder %s20, 1
      %p101 = scmp.ne.s32.totalorder %s96, %s98
      %p102 = scmp.eq.s32.totalorder %s20, 0
      %p103 = por %p101, %p102
      %p104 = scmp.ne.s32.totalorder %s96, %s98
      %p105 = scmp.eq.s32.totalorder %s25, 1
      %p106 = por %p104, %p105
      %p107 = scmp.ne.s32.totalorder %s98, %s99
      %p108 = scmp.eq.s32.totalorder %s25, 0
      %p109 = por %p107, %p108
      %p110 = scmp.ne.s32.totalorder %s98, %s99
      %p111 = scmp.eq.s32.totalorder %s26, 1
      %p112 = por %p110, %p111
      %p114 = scmp.ne.s32.totalorder %s99, %s113
      %p115 = scmp.eq.s32.totalorder %s26, 0
      %p116 = por %p114, %p115
      %s118 = sadd.s32 %s117, 1
      %p121 = scmp.eq.s32.totalorder %s20, 1
      %p122 = scmp.ne.s32.totalorder %s117, %s119
      %p123 = scmp.eq.s32.totalorder %s20, 0
      %p124 = por %p122, %p123
      %p125 = scmp.ne.s32.totalorder %s117, %s119
      %p126 = scmp.eq.s32.totalorder %s25, 1
      %p127 = por %p125, %p126
      %p128 = scmp.ne.s32.totalorder %s119, %s120
      %p129 = scmp.eq.s32.totalorder %s25, 0
      %p130 = por %p128, %p129
      %p131 = scmp.ne.s32.totalorder %s119, %s120
      %p132 = scmp.eq.s32.totalorder %s26, 1
      %p133 = por %p131, %p132
      %p135 = scmp.ne.s32.totalorder %s120, %s134
      %p136 = scmp.eq.s32.totalorder %s26, 0
      %p137 = por %p135, %p136
      %s138 = ssub.s32 %s20, %s27
      %p139 = scmp.eq.s32.totalorder %s138, 0
      %s141 = sadd.s32 %s140, 1
      %s142 = scalar_select %p139, %s140, %s141
      %p145 = pneg %p139
      %p146 = scmp.eq.s32.totalorder %s20, 1
      %p147 = por %p145, %p146
      %p148 = scmp.ne.s32.totalorder %s140, %s143
      %p149 = scmp.eq.s32.totalorder %s20, 0
      %p150 = por %p148, %p149
      %p151 = scmp.ne.s32.totalorder %s140, %s143
      %p152 = scmp.eq.s32.totalorder %s25, 1
      %p153 = por %p151, %p152
      %p154 = scmp.ne.s32.totalorder %s143, %s144
      %p155 = scmp.eq.s32.totalorder %s25, 0
      %p156 = por %p154, %p155
      %p157 = scmp.ne.s32.totalorder %s143, %s144
      %p158 = scmp.eq.s32.totalorder %s26, 1
      %p159 = por %p157, %p158
      %p161 = scmp.ne.s32.totalorder %s144, %s160
      %p162 = scmp.eq.s32.totalorder %s26, 0
      %p163 = por %p161, %p162
      %p164 = scmp.le.s32.totalorder 1, %s20
      %p165 = scmp.lt.s32.totalorder %s20, 3
      %p166 = pnand %p164, %p165
      %p167 = pneg %p166
      // Predicated region
      $region9: #{tpu_custom_call.1} parent=5 // pred_check
        _
      $region10: #{tpu_custom_call.1} parent=5 // pred_check_branch
        %169 = sbr.rel (%p166) target = $region12
      $region11: #{tpu_custom_call.1} parent=5 // pred_region
        %s170 = ssub.s32 %s20, 1
        // Predicated region
        $region13: #{tpu_custom_call.1} parent=11 // pred_check
          %p171 = pneg %p67
        $region14: #{tpu_custom_call.1} parent=11 // pred_check_branch
          %173 = sbr.rel (%p171) target = $region16
        $region15: #{tpu_custom_call.1} parent=11 // pred_region
          %s175 = ssub.s32 16, 16
          %176 = vsyncadd [#allocation5], %s175
          %s178 = sshll.u32 %s1, 4
          %s179 = int_to_ptr.vmem [resolvable:$true] %s178
          %181 = dma.vmem_to_smem %s179, 16, [#allocation6], [#allocation5]
        $region16: #{tpu_custom_call.1} parent=11 // pred_fallthru
          _
        // Predicated region
        $region17: #{tpu_custom_call.1} parent=11 // pred_check
          %p182 = pneg %p88
        $region18: #{tpu_custom_call.1} parent=11 // pred_check_branch
          %184 = sbr.rel (%p182) target = $region20
        $region19: #{tpu_custom_call.1} parent=11 // pred_region
          %s186 = ssub.s32 16, 16
          %187 = vsyncadd [#allocation8], %s186
          %s189 = sshll.u32 %s2, 4
          %s190 = int_to_ptr.vmem [resolvable:$true] %s189
          %192 = dma.vmem_to_smem %s190, 16, [#allocation7], [#allocation8]
        $region20: #{tpu_custom_call.1} parent=11 // pred_fallthru
          _
        // Predicated region
        $region21: #{tpu_custom_call.1} parent=11 // pred_check
          %p193 = pneg %p109
        $region22: #{tpu_custom_call.1} parent=11 // pred_check_branch
          %195 = sbr.rel (%p193) target = $region24
        $region23: #{tpu_custom_call.1} parent=11 // pred_region
          %s197 = ssub.s32 16, 16
          %198 = vsyncadd [#allocation8], %s197
          %s200 = sshll.u32 %s3, 4
          %s201 = int_to_ptr.vmem [resolvable:$true] %s200
          %203 = dma.vmem_to_smem %s201, 16, [#allocation9], [#allocation8]
        $region24: #{tpu_custom_call.1} parent=11 // pred_fallthru
          _
        // Predicated region
        $region25: #{tpu_custom_call.1} parent=11 // pred_check
          %p204 = pneg %p130
        $region26: #{tpu_custom_call.1} parent=11 // pred_check_branch
          %206 = sbr.rel (%p204) target = $region28
        $region27: #{tpu_custom_call.1} parent=11 // pred_region
          %s208 = ssub.s32 16, 16
          %209 = vsyncadd [#allocation11], %s208
          %s211 = sshll.u32 %s4, 4
          %s212 = int_to_ptr.vmem [resolvable:$true] %s211
          %214 = dma.vmem_to_smem %s212, 16, [#allocation10], [#allocation11]
        $region28: #{tpu_custom_call.1} parent=11 // pred_fallthru
          _
      $region12: #{tpu_custom_call.1} parent=5 // pred_fallthru
        _
      %p215 = scmp.lt.s32.totalorder %s20, 2
      // Predicated region
      $region29: #{tpu_custom_call.1} parent=5 // pred_check
        %p216 = pneg %p215
      $region30: #{tpu_custom_call.1} parent=5 // pred_check_branch
        %218 = sbr.rel (%p216) target = $region32
      $region31: #{tpu_custom_call.1} parent=5 // pred_region
        // Predicated region
        $region33: #{tpu_custom_call.1} parent=31 // pred_check
          %p219 = pneg %p40
        $region34: #{tpu_custom_call.1} parent=31 // pred_check_branch
          %221 = sbr.rel (%p219) target = $region36
        $region35: #{tpu_custom_call.1} parent=31 // pred_region
          %s222 = sand.u32 %s30, 1
          %s223 = scalar_lea.sflag [#allocation3], %s222
          %s224 = sand.u32 %s30, 1
          %s225 = smul.addr %s224, 12
          %s226 = scalar_lea.vmem [#allocation2], %s225
          %s228 = ssub.s32 192, 192
          %229 = vsyncadd %s223, %s228
          %s230 = smul.addr %s20, 3
          %s231 = smul.addr %s230, 64
          %s232 = scalar_lea.hbm %s0, %s231
          %s233 = sshll.u32 %s226, 4
          %s234 = int_to_ptr.vmem [resolvable:$true] %s233
          %239 = dma.hbm_to_vmem [thread:$0]  %s232, 192, %s234, %s223, 64, 64, 4
        $region36: #{tpu_custom_call.1} parent=31 // pred_fallthru
          _
      $region32: #{tpu_custom_call.1} parent=5 // pred_fallthru
        _
      %p240 = scmp.le.s32.totalorder 1, %s20
      %p241 = scmp.lt.s32.totalorder %s20, 3
      %p242 = pnand %p240, %p241
      %p243 = pneg %p242
      // Predicated region
      $region37: #{tpu_custom_call.1} parent=5 // pred_check
        _
      $region38: #{tpu_custom_call.1} parent=5 // pred_check_branch
        %245 = sbr.rel (%p242) target = $region40
      $region39: #{tpu_custom_call.1} parent=5 // pred_region
        %s246 = ssub.s32 %s20, 1
        %s247 = sand.u32 %s33, 1
        %s248 = scalar_lea.sflag [#allocation3], %s247
        %s249 = sand.u32 %s33, 1
        %s250 = smul.addr %s249, 12
        %s251 = scalar_lea.vmem [#allocation2], %s250
        // Predicated region
        $region41: #{tpu_custom_call.1} parent=39 // pred_check
          %p252 = pneg %p46
        $region42: #{tpu_custom_call.1} parent=39 // pred_check_branch
          %254 = sbr.rel (%p252) target = $region44
        $region43: #{tpu_custom_call.1} parent=39 // pred_region
          %255 = dma.done %s248, 192
        $region44: #{tpu_custom_call.1} parent=39 // pred_fallthru
          _
        // Predicated region
        $region45: #{tpu_custom_call.1} parent=39 // pred_check
          %p256 = pneg %p67
        $region46: #{tpu_custom_call.1} parent=39 // pred_check_branch
          %258 = sbr.rel (%p256) target = $region48
        $region47: #{tpu_custom_call.1} parent=39 // pred_region
          %259 = dma.done [#allocation5], 16
        $region48: #{tpu_custom_call.1} parent=39 // pred_fallthru
          _
        // Predicated region
        $region49: #{tpu_custom_call.1} parent=39 // pred_check
          %p260 = pneg %p88
        $region50: #{tpu_custom_call.1} parent=39 // pred_check_branch
          %262 = sbr.rel (%p260) target = $region52
        $region51: #{tpu_custom_call.1} parent=39 // pred_region
          %263 = dma.done [#allocation8], 16
        $region52: #{tpu_custom_call.1} parent=39 // pred_fallthru
          _
        // Predicated region
        $region53: #{tpu_custom_call.1} parent=39 // pred_check
          %p264 = pneg %p109
        $region54: #{tpu_custom_call.1} parent=39 // pred_check_branch
          %266 = sbr.rel (%p264) target = $region56
        $region55: #{tpu_custom_call.1} parent=39 // pred_region
          %267 = dma.done [#allocation8], 16
        $region56: #{tpu_custom_call.1} parent=39 // pred_fallthru
          _
        // Predicated region
        $region57: #{tpu_custom_call.1} parent=39 // pred_check
          %p268 = pneg %p130
        $region58: #{tpu_custom_call.1} parent=39 // pred_check_branch
          %270 = sbr.rel (%p268) target = $region60
        $region59: #{tpu_custom_call.1} parent=39 // pred_region
          %271 = dma.done [#allocation11], 16
        $region60: #{tpu_custom_call.1} parent=39 // pred_fallthru
          _
        %272 = sfence
        %s273 = sand.u32 %s33, 1
        %s274 = scalar_lea.sflag [#allocation3], %s273
        %s275 = sand.u32 %s33, 1
        %s276 = smul.addr %s275, 12
        %s277 = scalar_lea.vmem [#allocation2], %s276
        %p278 = pneg %p46
        %p279 = pneg %p43
        %p280 = pneg %p67
        %p281 = pneg %p64
        %p282 = pneg %p88
        %p283 = pneg %p85
        %p284 = pneg %p109
        %p285 = pneg %p106
        %p286 = pneg %p130
        %p287 = pneg %p127
        %p288 = pneg %p156
        %p289 = pneg %p153
        %s290 = sand.u32 %s143, 1
        %s291 = scalar_lea.sflag [#allocation4], %s290
        %s292 = sand.u32 %s143, 1
        %s293 = smul.addr %s292, 96
        %s294 = scalar_lea.vmem [#allocation12], %s293
        %v295 = vlaneseq
        %v296 = vand.u32 %v295, 127
        %vm297 = vcmp.lt.s32.totalorder %v296, 0
        %v298 = vsub.s32 0, %v296
        %v299 = vsel %vm297, %v298, %v296
        %v300 = vshrl.u32 %v299, 4
        %v301 = vand.u32 %v299, 15
        %v302 = vsub.s32 0, %v301
        %v303 = vsel %vm297, %v302, %v301
        %vm304 = vcmp.ne.s32.totalorder %v303, 0
        %vm305 = vcmp.lt.s32.totalorder %v303, 0
        %vm306 = vmand %vm305, %vm304
        %v307 = vadd.s32 %v303, 16
        %v308 = vsel %vm306, %v307, %v303
        %vm309 = vcmp.ge.s32.totalorder %v308, 1
        %v310 = vsel %vm309, 1, 0
        %v311 = vcvt.s32.f32 %v310
        %vm312 = vcmp.le.s32.totalorder %v308, 14
        %v313 = vsel %vm312, 1, 0
        %v314 = vcvt.s32.f32 %v313
        %v315 = vld [vmem:[%s251] sm:$0xf]
        %s316 = scalar_lea.vmem %s251, 4 [#allocation2]
        %v317 = vld [vmem:[%s316] sm:$0xf]
        %s318 = scalar_lea.vmem %s251, 8 [#allocation2]
        %v319 = vld [vmem:[%s318] sm:$0xf]
        %321 = vrot.lane.b32.xlu0 %v315, 17
        %v322 = vpop.permute.xlu0 %321
        %vm324 = vcmask 138240
        %v325 = vsel %vm324, 0.0, %v322
        %v326 = vmul.f32 %v325, %v311
        %v328 = vrot.slane %v326, 7
        %vm330 = vcmask 1040384
        %v331 = vsel %vm330, 0.0, %v328
        %v332 = vrot.slane %v326, 1
        %vm334 = vcmask 1042432
        %v335 = vsel %vm334, %v332, 0.0
        %s336 = sld [smem:[#allocation6]]
        %v337 = vstv %s336
        %v338 = vmul.f32 %v331, %v337
        %v339 = vadd.f32 %v338, 0.0
        %s340 = sld [smem:[#allocation6 + $0x9]]
        %v341 = vstv %s340
        %v342 = vmul.f32 %v326, %v341
        %v343 = vadd.f32 %v339, %v342
        %s344 = sld [smem:[#allocation6 + $0x12]]
        %v345 = vstv %s344
        %v346 = vmul.f32 %v335, %v345
        %v347 = vadd.f32 %v343, %v346
        %349 = vrot.lane.b32.xlu0 %v317, 17
        %v350 = vpop.permute.xlu0 %349
        %v352 = vsel %vm324, 0.0, %v350
        %v353 = vmul.f32 %v352, %v311
        %v355 = vrot.slane %v353, 7
        %v357 = vsel %vm330, 0.0, %v355
        %v358 = vrot.slane %v353, 1
        %v360 = vsel %vm334, %v358, 0.0
        %s361 = sld [smem:[#allocation6 + $0x1b]]
        %v362 = vstv %s361
        %v363 = vmul.f32 %v357, %v362
        %v364 = vadd.f32 %v363, 0.0
        %s365 = sld [smem:[#allocation6 + $0x24]]
        %v366 = vstv %s365
        %v367 = vmul.f32 %v353, %v366
        %v368 = vadd.f32 %v364, %v367
        %s369 = sld [smem:[#allocation6 + $0x2d]]
        %v370 = vstv %s369
        %v371 = vmul.f32 %v360, %v370
        %v372 = vadd.f32 %v368, %v371
        %374 = vrot.lane.b32.xlu0 %v319, 17
        %v375 = vpop.permute.xlu0 %374
        %v377 = vsel %vm324, 0.0, %v375
        %v378 = vmul.f32 %v377, %v311
        %v380 = vrot.slane %v378, 7
        %v382 = vsel %vm330, 0.0, %v380
        %v383 = vrot.slane %v378, 1
        %v385 = vsel %vm334, %v383, 0.0
        %s386 = sld [smem:[#allocation6 + $0x36]]
        %v387 = vstv %s386
        %v388 = vmul.f32 %v382, %v387
        %v389 = vadd.f32 %v388, 0.0
        %s390 = sld [smem:[#allocation6 + $0x3f]]
        %v391 = vstv %s390
        %v392 = vmul.f32 %v378, %v391
        %v393 = vadd.f32 %v389, %v392
        %s394 = sld [smem:[#allocation6 + $0x48]]
        %v395 = vstv %s394
        %v396 = vmul.f32 %v385, %v395
        %v397 = vadd.f32 %v393, %v396
        %398 = vrot.lane.b32.xlu0 %v315, 16
        %v399 = vpop.permute.xlu0 %398
        %vm401 = vcmask 130048
        %v402 = vsel %vm401, 0.0, %v399
        %v404 = vrot.slane %v402, 7
        %v406 = vsel %vm330, 0.0, %v404
        %v407 = vrot.slane %v402, 1
        %v409 = vsel %vm334, %v407, 0.0
        %s410 = sld [smem:[#allocation6 + $0x1]]
        %v411 = vstv %s410
        %v412 = vmul.f32 %v406, %v411
        %v413 = vadd.f32 %v347, %v412
        %s414 = sld [smem:[#allocation6 + $0xa]]
        %v415 = vstv %s414
        %v416 = vmul.f32 %v402, %v415
        %v417 = vadd.f32 %v413, %v416
        %s418 = sld [smem:[#allocation6 + $0x13]]
        %v419 = vstv %s418
        %v420 = vmul.f32 %v409, %v419
        %v421 = vadd.f32 %v417, %v420
        %422 = vrot.lane.b32.xlu0 %v317, 16
        %v423 = vpop.permute.xlu0 %422
        %v425 = vsel %vm401, 0.0, %v423
        %v427 = vrot.slane %v425, 7
        %v429 = vsel %vm330, 0.0, %v427
        %v430 = vrot.slane %v425, 1
        %v432 = vsel %vm334, %v430, 0.0
        %s433 = sld [smem:[#allocation6 + $0x1c]]
        %v434 = vstv %s433
        %v435 = vmul.f32 %v429, %v434
        %v436 = vadd.f32 %v372, %v435
        %s437 = sld [smem:[#allocation6 + $0x25]]
        %v438 = vstv %s437
        %v439 = vmul.f32 %v425, %v438
        %v440 = vadd.f32 %v436, %v439
        %s441 = sld [smem:[#allocation6 + $0x2e]]
        %v442 = vstv %s441
        %v443 = vmul.f32 %v432, %v442
        %v444 = vadd.f32 %v440, %v443
        %445 = vrot.lane.b32.xlu0 %v319, 16
        %v446 = vpop.permute.xlu0 %445
        %v448 = vsel %vm401, 0.0, %v446
        %v450 = vrot.slane %v448, 7
        %v452 = vsel %vm330, 0.0, %v450
        %v453 = vrot.slane %v448, 1
        %v455 = vsel %vm334, %v453, 0.0
        %s456 = sld [smem:[#allocation6 + $0x37]]
        %v457 = vstv %s456
        %v458 = vmul.f32 %v452, %v457
        %v459 = vadd.f32 %v397, %v458
        %s460 = sld [smem:[#allocation6 + $0x40]]
        %v461 = vstv %s460
        %v462 = vmul.f32 %v448, %v461
        %v463 = vadd.f32 %v459, %v462
        %s464 = sld [smem:[#allocation6 + $0x49]]
        %v465 = vstv %s464
        %v466 = vmul.f32 %v455, %v465
        %v467 = vadd.f32 %v463, %v466
        %468 = vrot.lane.b32.xlu0 %v315, 15
        %v469 = vpop.permute.xlu0 %468
        %vm471 = vcmask 121856
        %v472 = vsel %vm471, 0.0, %v469
        %v473 = vmul.f32 %v472, %v314
        %v475 = vrot.slane %v473, 7
        %v477 = vsel %vm330, 0.0, %v475
        %v478 = vrot.slane %v473, 1
        %v480 = vsel %vm334, %v478, 0.0
        %s481 = sld [smem:[#allocation6 + $0x2]]
        %v482 = vstv %s481
        %v483 = vmul.f32 %v477, %v482
        %v484 = vadd.f32 %v421, %v483
        %s485 = sld [smem:[#allocation6 + $0xb]]
        %v486 = vstv %s485
        %v487 = vmul.f32 %v473, %v486
        %v488 = vadd.f32 %v484, %v487
        %s489 = sld [smem:[#allocation6 + $0x14]]
        %v490 = vstv %s489
        %v491 = vmul.f32 %v480, %v490
        %v492 = vadd.f32 %v488, %v491
        %493 = vrot.lane.b32.xlu0 %v317, 15
        %v494 = vpop.permute.xlu0 %493
        %v496 = vsel %vm471, 0.0, %v494
        %v497 = vmul.f32 %v496, %v314
        %v499 = vrot.slane %v497, 7
        %v501 = vsel %vm330, 0.0, %v499
        %v502 = vrot.slane %v497, 1
        %v504 = vsel %vm334, %v502, 0.0
        %s505 = sld [smem:[#allocation6 + $0x1d]]
        %v506 = vstv %s505
        %v507 = vmul.f32 %v501, %v506
        %v508 = vadd.f32 %v444, %v507
        %s509 = sld [smem:[#allocation6 + $0x26]]
        %v510 = vstv %s509
        %v511 = vmul.f32 %v497, %v510
        %v512 = vadd.f32 %v508, %v511
        %s513 = sld [smem:[#allocation6 + $0x2f]]
        %v514 = vstv %s513
        %v515 = vmul.f32 %v504, %v514
        %v516 = vadd.f32 %v512, %v515
        %517 = vrot.lane.b32.xlu0 %v319, 15
        %v518 = vpop.permute.xlu0 %517
        %v520 = vsel %vm471, 0.0, %v518
        %v521 = vmul.f32 %v520, %v314
        %v523 = vrot.slane %v521, 7
        %v525 = vsel %vm330, 0.0, %v523
        %v526 = vrot.slane %v521, 1
        %v528 = vsel %vm334, %v526, 0.0
        %s529 = sld [smem:[#allocation6 + $0x38]]
        %v530 = vstv %s529
        %v531 = vmul.f32 %v525, %v530
        %v532 = vadd.f32 %v467, %v531
        %s533 = sld [smem:[#allocation6 + $0x41]]
        %v534 = vstv %s533
        %v535 = vmul.f32 %v521, %v534
        %v536 = vadd.f32 %v532, %v535
        %s537 = sld [smem:[#allocation6 + $0x4a]]
        %v538 = vstv %s537
        %v539 = vmul.f32 %v528, %v538
        %v540 = vadd.f32 %v536, %v539
        %541 = vrot.lane.b32.xlu0 %v315, 1
        %v542 = vpop.permute.xlu0 %541
        %vm544 = vcmask 7168
        %v545 = vsel %vm544, 0.0, %v542
        %v546 = vmul.f32 %v545, %v311
        %v548 = vrot.slane %v546, 7
        %v550 = vsel %vm330, 0.0, %v548
        %v551 = vrot.slane %v546, 1
        %v553 = vsel %vm334, %v551, 0.0
        %s554 = sld [smem:[#allocation6 + $0x3]]
        %v555 = vstv %s554
        %v556 = vmul.f32 %v550, %v555
        %v557 = vadd.f32 %v492, %v556
        %s558 = sld [smem:[#allocation6 + $0xc]]
        %v559 = vstv %s558
        %v560 = vmul.f32 %v546, %v559
        %v561 = vadd.f32 %v557, %v560
        %s562 = sld [smem:[#allocation6 + $0x15]]
        %v563 = vstv %s562
        %v564 = vmul.f32 %v553, %v563
        %v565 = vadd.f32 %v561, %v564
        %566 = vrot.lane.b32.xlu0 %v317, 1
        %v567 = vpop.permute.xlu0 %566
        %v569 = vsel %vm544, 0.0, %v567
        %v570 = vmul.f32 %v569, %v311
        %v572 = vrot.slane %v570, 7
        %v574 = vsel %vm330, 0.0, %v572
        %v575 = vrot.slane %v570, 1
        %v577 = vsel %vm334, %v575, 0.0
        %s578 = sld [smem:[#allocation6 + $0x1e]]
        %v579 = vstv %s578
        %v580 = vmul.f32 %v574, %v579
        %v581 = vadd.f32 %v516, %v580
        %s582 = sld [smem:[#allocation6 + $0x27]]
        %v583 = vstv %s582
        %v584 = vmul.f32 %v570, %v583
        %v585 = vadd.f32 %v581, %v584
        %s586 = sld [smem:[#allocation6 + $0x30]]
        %v587 = vstv %s586
        %v588 = vmul.f32 %v577, %v587
        %v589 = vadd.f32 %v585, %v588
        %590 = vrot.lane.b32.xlu0 %v319, 1
        %v591 = vpop.permute.xlu0 %590
        %v593 = vsel %vm544, 0.0, %v591
        %v594 = vmul.f32 %v593, %v311
        %v596 = vrot.slane %v594, 7
        %v598 = vsel %vm330, 0.0, %v596
        %v599 = vrot.slane %v594, 1
        %v601 = vsel %vm334, %v599, 0.0
        %s602 = sld [smem:[#allocation6 + $0x39]]
        %v603 = vstv %s602
        %v604 = vmul.f32 %v598, %v603
        %v605 = vadd.f32 %v540, %v604
        %s606 = sld [smem:[#allocation6 + $0x42]]
        %v607 = vstv %s606
        %v608 = vmul.f32 %v594, %v607
        %v609 = vadd.f32 %v605, %v608
        %s610 = sld [smem:[#allocation6 + $0x4b]]
        %v611 = vstv %s610
        %v612 = vmul.f32 %v601, %v611
        %v613 = vadd.f32 %v609, %v612
        %v614 = vrot.slane %v315, 7
        %v616 = vsel %vm330, 0.0, %v614
        %v617 = vrot.slane %v315, 1
        %v619 = vsel %vm334, %v617, 0.0
        %s620 = sld [smem:[#allocation6 + $0x4]]
        %v621 = vstv %s620
        %v622 = vmul.f32 %v616, %v621
        %v623 = vadd.f32 %v565, %v622
        %s624 = sld [smem:[#allocation6 + $0xd]]
        %v625 = vstv %s624
        %v626 = vmul.f32 %v315, %v625
        %v627 = vadd.f32 %v623, %v626
        %s628 = sld [smem:[#allocation6 + $0x16]]
        %v629 = vstv %s628
        %v630 = vmul.f32 %v619, %v629
        %v631 = vadd.f32 %v627, %v630
        %v632 = vrot.slane %v317, 7
        %v634 = vsel %vm330, 0.0, %v632
        %v635 = vrot.slane %v317, 1
        %v637 = vsel %vm334, %v635, 0.0
        %s638 = sld [smem:[#allocation6 + $0x1f]]
        %v639 = vstv %s638
        %v640 = vmul.f32 %v634, %v639
        %v641 = vadd.f32 %v589, %v640
        %s642 = sld [smem:[#allocation6 + $0x28]]
        %v643 = vstv %s642
        %v644 = vmul.f32 %v317, %v643
        %v645 = vadd.f32 %v641, %v644
        %s646 = sld [smem:[#allocation6 + $0x31]]
        %v647 = vstv %s646
        %v648 = vmul.f32 %v637, %v647
        %v649 = vadd.f32 %v645, %v648
        %v650 = vrot.slane %v319, 7
        %v652 = vsel %vm330, 0.0, %v650
        %v653 = vrot.slane %v319, 1
        %v655 = vsel %vm334, %v653, 0.0
        %s656 = sld [smem:[#allocation6 + $0x3a]]
        %v657 = vstv %s656
        %v658 = vmul.f32 %v652, %v657
        %v659 = vadd.f32 %v613, %v658
        %s660 = sld [smem:[#allocation6 + $0x43]]
        %v661 = vstv %s660
        %v662 = vmul.f32 %v319, %v661
        %v663 = vadd.f32 %v659, %v662
        %s664 = sld [smem:[#allocation6 + $0x4c]]
        %v665 = vstv %s664
        %v666 = vmul.f32 %v655, %v665
        %v667 = vadd.f32 %v663, %v666
        %668 = vrot.lane.b32.xlu0 %v315, 127
        %v669 = vpop.permute.xlu0 %668
        %vm671 = vcmask 1039360
        %v672 = vsel %vm671, %v669, 0.0
        %v673 = vmul.f32 %v672, %v314
        %v675 = vrot.slane %v673, 7
        %v677 = vsel %vm330, 0.0, %v675
        %v678 = vrot.slane %v673, 1
        %v680 = vsel %vm334, %v678, 0.0
        %s681 = sld [smem:[#allocation6 + $0x5]]
        %v682 = vstv %s681
        %v683 = vmul.f32 %v677, %v682
        %v684 = vadd.f32 %v631, %v683
        %s685 = sld [smem:[#allocation6 + $0xe]]
        %v686 = vstv %s685
        %v687 = vmul.f32 %v673, %v686
        %v688 = vadd.f32 %v684, %v687
        %s689 = sld [smem:[#allocation6 + $0x17]]
        %v690 = vstv %s689
        %v691 = vmul.f32 %v680, %v690
        %v692 = vadd.f32 %v688, %v691
        %693 = vrot.lane.b32.xlu0 %v317, 127
        %v694 = vpop.permute.xlu0 %693
        %v696 = vsel %vm671, %v694, 0.0
        %v697 = vmul.f32 %v696, %v314
        %v699 = vrot.slane %v697, 7
        %v701 = vsel %vm330, 0.0, %v699
        %v702 = vrot.slane %v697, 1
        %v704 = vsel %vm334, %v702, 0.0
        %s705 = sld [smem:[#allocation6 + $0x20]]
        %v706 = vstv %s705
        %v707 = vmul.f32 %v701, %v706
        %v708 = vadd.f32 %v649, %v707
        %s709 = sld [smem:[#allocation6 + $0x29]]
        %v710 = vstv %s709
        %v711 = vmul.f32 %v697, %v710
        %v712 = vadd.f32 %v708, %v711
        %s713 = sld [smem:[#allocation6 + $0x32]]
        %v714 = vstv %s713
        %v715 = vmul.f32 %v704, %v714
        %v716 = vadd.f32 %v712, %v715
        %717 = vrot.lane.b32.xlu0 %v319, 127
        %v718 = vpop.permute.xlu0 %717
        %v720 = vsel %vm671, %v718, 0.0
        %v721 = vmul.f32 %v720, %v314
        %v723 = vrot.slane %v721, 7
        %v725 = vsel %vm330, 0.0, %v723
        %v726 = vrot.slane %v721, 1
        %v728 = vsel %vm334, %v726, 0.0
        %s729 = sld [smem:[#allocation6 + $0x3b]]
        %v730 = vstv %s729
        %v731 = vmul.f32 %v725, %v730
        %v732 = vadd.f32 %v667, %v731
        %s733 = sld [smem:[#allocation6 + $0x44]]
        %v734 = vstv %s733
        %v735 = vmul.f32 %v721, %v734
        %v736 = vadd.f32 %v732, %v735
        %s737 = sld [smem:[#allocation6 + $0x4d]]
        %v738 = vstv %s737
        %v739 = vmul.f32 %v728, %v738
        %v740 = vadd.f32 %v736, %v739
        %741 = vrot.lane.b32.xlu0 %v315, 113
        %v742 = vpop.permute.xlu0 %741
        %vm744 = vcmask 924672
        %v745 = vsel %vm744, %v742, 0.0
        %v746 = vmul.f32 %v745, %v311
        %v748 = vrot.slane %v746, 7
        %v750 = vsel %vm330, 0.0, %v748
        %v751 = vrot.slane %v746, 1
        %v753 = vsel %vm334, %v751, 0.0
        %s754 = sld [smem:[#allocation6 + $0x6]]
        %v755 = vstv %s754
        %v756 = vmul.f32 %v750, %v755
        %v757 = vadd.f32 %v692, %v756
        %s758 = sld [smem:[#allocation6 + $0xf]]
        %v759 = vstv %s758
        %v760 = vmul.f32 %v746, %v759
        %v761 = vadd.f32 %v757, %v760
        %s762 = sld [smem:[#allocation6 + $0x18]]
        %v763 = vstv %s762
        %v764 = vmul.f32 %v753, %v763
        %v765 = vadd.f32 %v761, %v764
        %766 = vrot.lane.b32.xlu0 %v317, 113
        %v767 = vpop.permute.xlu0 %766
        %v769 = vsel %vm744, %v767, 0.0
        %v770 = vmul.f32 %v769, %v311
        %v772 = vrot.slane %v770, 7
        %v774 = vsel %vm330, 0.0, %v772
        %v775 = vrot.slane %v770, 1
        %v777 = vsel %vm334, %v775, 0.0
        %s778 = sld [smem:[#allocation6 + $0x21]]
        %v779 = vstv %s778
        %v780 = vmul.f32 %v774, %v779
        %v781 = vadd.f32 %v716, %v780
        %s782 = sld [smem:[#allocation6 + $0x2a]]
        %v783 = vstv %s782
        %v784 = vmul.f32 %v770, %v783
        %v785 = vadd.f32 %v781, %v784
        %s786 = sld [smem:[#allocation6 + $0x33]]
        %v787 = vstv %s786
        %v788 = vmul.f32 %v777, %v787
        %v789 = vadd.f32 %v785, %v788
        %790 = vrot.lane.b32.xlu0 %v319, 113
        %v791 = vpop.permute.xlu0 %790
        %v793 = vsel %vm744, %v791, 0.0
        %v794 = vmul.f32 %v793, %v311
        %v796 = vrot.slane %v794, 7
        %v798 = vsel %vm330, 0.0, %v796
        %v799 = vrot.slane %v794, 1
        %v801 = vsel %vm334, %v799, 0.0
        %s802 = sld [smem:[#allocation6 + $0x3c]]
        %v803 = vstv %s802
        %v804 = vmul.f32 %v798, %v803
        %v805 = vadd.f32 %v740, %v804
        %s806 = sld [smem:[#allocation6 + $0x45]]
        %v807 = vstv %s806
        %v808 = vmul.f32 %v794, %v807
        %v809 = vadd.f32 %v805, %v808
        %s810 = sld [smem:[#allocation6 + $0x4e]]
        %v811 = vstv %s810
        %v812 = vmul.f32 %v801, %v811
        %v813 = vadd.f32 %v809, %v812
        %814 = vrot.lane.b32.xlu0 %v315, 112
        %v815 = vpop.permute.xlu0 %814
        %vm817 = vcmask 916480
        %v818 = vsel %vm817, %v815, 0.0
        %v820 = vrot.slane %v818, 7
        %v822 = vsel %vm330, 0.0, %v820
        %v823 = vrot.slane %v818, 1
        %v825 = vsel %vm334, %v823, 0.0
        %s826 = sld [smem:[#allocation6 + $0x7]]
        %v827 = vstv %s826
        %v828 = vmul.f32 %v822, %v827
        %v829 = vadd.f32 %v765, %v828
        %s830 = sld [smem:[#allocation6 + $0x10]]
        %v831 = vstv %s830
        %v832 = vmul.f32 %v818, %v831
        %v833 = vadd.f32 %v829, %v832
        %s834 = sld [smem:[#allocation6 + $0x19]]
        %v835 = vstv %s834
        %v836 = vmul.f32 %v825, %v835
        %v837 = vadd.f32 %v833, %v836
        %838 = vrot.lane.b32.xlu0 %v317, 112
        %v839 = vpop.permute.xlu0 %838
        %v841 = vsel %vm817, %v839, 0.0
        %v843 = vrot.slane %v841, 7
        %v845 = vsel %vm330, 0.0, %v843
        %v846 = vrot.slane %v841, 1
        %v848 = vsel %vm334, %v846, 0.0
        %s849 = sld [smem:[#allocation6 + $0x22]]
        %v850 = vstv %s849
        %v851 = vmul.f32 %v845, %v850
        %v852 = vadd.f32 %v789, %v851
        %s853 = sld [smem:[#allocation6 + $0x2b]]
        %v854 = vstv %s853
        %v855 = vmul.f32 %v841, %v854
        %v856 = vadd.f32 %v852, %v855
        %s857 = sld [smem:[#allocation6 + $0x34]]
        %v858 = vstv %s857
        %v859 = vmul.f32 %v848, %v858
        %v860 = vadd.f32 %v856, %v859
        %861 = vrot.lane.b32.xlu0 %v319, 112
        %v862 = vpop.permute.xlu0 %861
        %v864 = vsel %vm817, %v862, 0.0
        %v866 = vrot.slane %v864, 7
        %v868 = vsel %vm330, 0.0, %v866
        %v869 = vrot.slane %v864, 1
        %v871 = vsel %vm334, %v869, 0.0
        %s872 = sld [smem:[#allocation6 + $0x3d]]
        %v873 = vstv %s872
        %v874 = vmul.f32 %v868, %v873
        %v875 = vadd.f32 %v813, %v874
        %s876 = sld [smem:[#allocation6 + $0x46]]
        %v877 = vstv %s876
        %v878 = vmul.f32 %v864, %v877
        %v879 = vadd.f32 %v875, %v878
        %s880 = sld [smem:[#allocation6 + $0x4f]]
        %v881 = vstv %s880
        %v882 = vmul.f32 %v871, %v881
        %v883 = vadd.f32 %v879, %v882
        %884 = vrot.lane.b32.xlu0 %v315, 111
        %v885 = vpop.permute.xlu0 %884
        %vm887 = vcmask 908288
        %v888 = vsel %vm887, %v885, 0.0
        %v889 = vmul.f32 %v888, %v314
        %v891 = vrot.slane %v889, 7
        %v893 = vsel %vm330, 0.0, %v891
        %v894 = vrot.slane %v889, 1
        %v896 = vsel %vm334, %v894, 0.0
        %s897 = sld [smem:[#allocation6 + $0x8]]
        %v898 = vstv %s897
        %v899 = vmul.f32 %v893, %v898
        %v900 = vadd.f32 %v837, %v899
        %s901 = sld [smem:[#allocation6 + $0x11]]
        %v902 = vstv %s901
        %v903 = vmul.f32 %v889, %v902
        %v904 = vadd.f32 %v900, %v903
        %s905 = sld [smem:[#allocation6 + $0x1a]]
        %v906 = vstv %s905
        %v907 = vmul.f32 %v896, %v906
        %v908 = vadd.f32 %v904, %v907
        %909 = vrot.lane.b32.xlu0 %v317, 111
        %v910 = vpop.permute.xlu0 %909
        %v912 = vsel %vm887, %v910, 0.0
        %v913 = vmul.f32 %v912, %v314
        %v915 = vrot.slane %v913, 7
        %v917 = vsel %vm330, 0.0, %v915
        %v918 = vrot.slane %v913, 1
        %v920 = vsel %vm334, %v918, 0.0
        %s921 = sld [smem:[#allocation6 + $0x23]]
        %v922 = vstv %s921
        %v923 = vmul.f32 %v917, %v922
        %v924 = vadd.f32 %v860, %v923
        %s925 = sld [smem:[#allocation6 + $0x2c]]
        %v926 = vstv %s925
        %v927 = vmul.f32 %v913, %v926
        %v928 = vadd.f32 %v924, %v927
        %s929 = sld [smem:[#allocation6 + $0x35]]
        %v930 = vstv %s929
        %v931 = vmul.f32 %v920, %v930
        %v932 = vadd.f32 %v928, %v931
        %933 = vrot.lane.b32.xlu0 %v319, 111
        %v934 = vpop.permute.xlu0 %933
        %v936 = vsel %vm887, %v934, 0.0
        %v937 = vmul.f32 %v936, %v314
        %v939 = vrot.slane %v937, 7
        %v941 = vsel %vm330, 0.0, %v939
        %v942 = vrot.slane %v937, 1
        %v944 = vsel %vm334, %v942, 0.0
        %s945 = sld [smem:[#allocation6 + $0x3e]]
        %v946 = vstv %s945
        %v947 = vmul.f32 %v941, %v946
        %v948 = vadd.f32 %v883, %v947
        %s949 = sld [smem:[#allocation6 + $0x47]]
        %v950 = vstv %s949
        %v951 = vmul.f32 %v937, %v950
        %v952 = vadd.f32 %v948, %v951
        %s953 = sld [smem:[#allocation6 + $0x50]]
        %v954 = vstv %s953
        %v955 = vmul.f32 %v944, %v954
        %v956 = vadd.f32 %v952, %v955
        %s957 = sld [smem:[#allocation7]]
        %v958 = vstv %s957
        %v959 = vadd.f32 %v908, %v958
        %s960 = sld [smem:[#allocation7 + $0x1]]
        %v961 = vstv %s960
        %v962 = vadd.f32 %v932, %v961
        %s963 = sld [smem:[#allocation7 + $0x2]]
        %v964 = vstv %s963
        %v965 = vadd.f32 %v956, %v964
        %s966 = sld [smem:[#allocation10]]
        %v967 = vstv %s966
        %v968 = vadd.f32 %v967, 0.0
        %s969 = sld [smem:[#allocation9]]
        %v970 = vstv %s969
        %v971 = vmul.f32 %v959, %v970
        %v972 = vadd.f32 %v968, %v971
        %s973 = sld [smem:[#allocation9 + $0x1]]
        %v974 = vstv %s973
        %v975 = vmul.f32 %v962, %v974
        %v976 = vadd.f32 %v972, %v975
        %s977 = sld [smem:[#allocation9 + $0x2]]
        %v978 = vstv %s977
        %v979 = vmul.f32 %v965, %v978
        %v980 = vadd.f32 %v976, %v979
        %981 = vst [vmem:[%s294] sm:$0xf] %v980
        %s982 = sld [smem:[#allocation10 + $0x1]]
        %v983 = vstv %s982
        %v984 = vadd.f32 %v983, 0.0
        %s985 = sld [smem:[#allocation9 + $0x3]]
        %v986 = vstv %s985
        %v987 = vmul.f32 %v959, %v986
        %v988 = vadd.f32 %v984, %v987
        %s989 = sld [smem:[#allocation9 + $0x4]]
        %v990 = vstv %s989
        %v991 = vmul.f32 %v962, %v990
        %v992 = vadd.f32 %v988, %v991
        %s993 = sld [smem:[#allocation9 + $0x5]]
        %v994 = vstv %s993
        %v995 = vmul.f32 %v965, %v994
        %v996 = vadd.f32 %v992, %v995
        %s997 = scalar_lea.vmem %s294, 4 [#allocation12]
        %998 = vst [vmem:[%s997] sm:$0xf] %v996
        %s999 = sld [smem:[#allocation10 + $0x2]]
        %v1000 = vstv %s999
        %v1001 = vadd.f32 %v1000, 0.0
        %s1002 = sld [smem:[#allocation9 + $0x6]]
        %v1003 = vstv %s1002
        %v1004 = vmul.f32 %v959, %v1003
        %v1005 = vadd.f32 %v1001, %v1004
        %s1006 = sld [smem:[#allocation9 + $0x7]]
        %v1007 = vstv %s1006
        %v1008 = vmul.f32 %v962, %v1007
        %v1009 = vadd.f32 %v1005, %v1008
        %s1010 = sld [smem:[#allocation9 + $0x8]]
        %v1011 = vstv %s1010
        %v1012 = vmul.f32 %v965, %v1011
        %v1013 = vadd.f32 %v1009, %v1012
        %s1014 = scalar_lea.vmem %s294, 8 [#allocation12]
        %1015 = vst [vmem:[%s1014] sm:$0xf] %v1013
        %s1016 = sld [smem:[#allocation10 + $0x3]]
        %v1017 = vstv %s1016
        %v1018 = vadd.f32 %v1017, 0.0
        %s1019 = sld [smem:[#allocation9 + $0x9]]
        %v1020 = vstv %s1019
        %v1021 = vmul.f32 %v959, %v1020
        %v1022 = vadd.f32 %v1018, %v1021
        %s1023 = sld [smem:[#allocation9 + $0xa]]
        %v1024 = vstv %s1023
        %v1025 = vmul.f32 %v962, %v1024
        %v1026 = vadd.f32 %v1022, %v1025
        %s1027 = sld [smem:[#allocation9 + $0xb]]
        %v1028 = vstv %s1027
        %v1029 = vmul.f32 %v965, %v1028
        %v1030 = vadd.f32 %v1026, %v1029
        %s1031 = scalar_lea.vmem %s294, 12 [#allocation12]
        %1032 = vst [vmem:[%s1031] sm:$0xf] %v1030
        %s1033 = sld [smem:[#allocation10 + $0x4]]
        %v1034 = vstv %s1033
        %v1035 = vadd.f32 %v1034, 0.0
        %s1036 = sld [smem:[#allocation9 + $0xc]]
        %v1037 = vstv %s1036
        %v1038 = vmul.f32 %v959, %v1037
        %v1039 = vadd.f32 %v1035, %v1038
        %s1040 = sld [smem:[#allocation9 + $0xd]]
        %v1041 = vstv %s1040
        %v1042 = vmul.f32 %v962, %v1041
        %v1043 = vadd.f32 %v1039, %v1042
        %s1044 = sld [smem:[#allocation9 + $0xe]]
        %v1045 = vstv %s1044
        %v1046 = vmul.f32 %v965, %v1045
        %v1047 = vadd.f32 %v1043, %v1046
        %s1048 = scalar_lea.vmem %s294, 16 [#allocation12]
        %1049 = vst [vmem:[%s1048] sm:$0xf] %v1047
        %s1050 = sld [smem:[#allocation10 + $0x5]]
        %v1051 = vstv %s1050
        %v1052 = vadd.f32 %v1051, 0.0
        %s1053 = sld [smem:[#allocation9 + $0xf]]
        %v1054 = vstv %s1053
        %v1055 = vmul.f32 %v959, %v1054
        %v1056 = vadd.f32 %v1052, %v1055
        %s1057 = sld [smem:[#allocation9 + $0x10]]
        %v1058 = vstv %s1057
        %v1059 = vmul.f32 %v962, %v1058
        %v1060 = vadd.f32 %v1056, %v1059
        %s1061 = sld [smem:[#allocation9 + $0x11]]
        %v1062 = vstv %s1061
        %v1063 = vmul.f32 %v965, %v1062
        %v1064 = vadd.f32 %v1060, %v1063
        %s1065 = scalar_lea.vmem %s294, 20 [#allocation12]
        %1066 = vst [vmem:[%s1065] sm:$0xf] %v1064
        %s1067 = sld [smem:[#allocation10 + $0x6]]
        %v1068 = vstv %s1067
        %v1069 = vadd.f32 %v1068, 0.0
        %s1070 = sld [smem:[#allocation9 + $0x12]]
        %v1071 = vstv %s1070
        %v1072 = vmul.f32 %v959, %v1071
        %v1073 = vadd.f32 %v1069, %v1072
        %s1074 = sld [smem:[#allocation9 + $0x13]]
        %v1075 = vstv %s1074
        %v1076 = vmul.f32 %v962, %v1075
        %v1077 = vadd.f32 %v1073, %v1076
        %s1078 = sld [smem:[#allocation9 + $0x14]]
        %v1079 = vstv %s1078
        %v1080 = vmul.f32 %v965, %v1079
        %v1081 = vadd.f32 %v1077, %v1080
        %s1082 = scalar_lea.vmem %s294, 24 [#allocation12]
        %1083 = vst [vmem:[%s1082] sm:$0xf] %v1081
        %s1084 = sld [smem:[#allocation10 + $0x7]]
        %v1085 = vstv %s1084
        %v1086 = vadd.f32 %v1085, 0.0
        %s1087 = sld [smem:[#allocation9 + $0x15]]
        %v1088 = vstv %s1087
        %v1089 = vmul.f32 %v959, %v1088
        %v1090 = vadd.f32 %v1086, %v1089
        %s1091 = sld [smem:[#allocation9 + $0x16]]
        %v1092 = vstv %s1091
        %v1093 = vmul.f32 %v962, %v1092
        %v1094 = vadd.f32 %v1090, %v1093
        %s1095 = sld [smem:[#allocation9 + $0x17]]
        %v1096 = vstv %s1095
        %v1097 = vmul.f32 %v965, %v1096
        %v1098 = vadd.f32 %v1094, %v1097
        %s1099 = scalar_lea.vmem %s294, 28 [#allocation12]
        %1100 = vst [vmem:[%s1099] sm:$0xf] %v1098
        %s1101 = sld [smem:[#allocation10 + $0x8]]
        %v1102 = vstv %s1101
        %v1103 = vadd.f32 %v1102, 0.0
        %s1104 = sld [smem:[#allocation9 + $0x18]]
        %v1105 = vstv %s1104
        %v1106 = vmul.f32 %v959, %v1105
        %v1107 = vadd.f32 %v1103, %v1106
        %s1108 = sld [smem:[#allocation9 + $0x19]]
        %v1109 = vstv %s1108
        %v1110 = vmul.f32 %v962, %v1109
        %v1111 = vadd.f32 %v1107, %v1110
        %s1112 = sld [smem:[#allocation9 + $0x1a]]
        %v1113 = vstv %s1112
        %v1114 = vmul.f32 %v965, %v1113
        %v1115 = vadd.f32 %v1111, %v1114
        %s1116 = scalar_lea.vmem %s294, 32 [#allocation12]
        %1117 = vst [vmem:[%s1116] sm:$0xf] %v1115
        %s1118 = sld [smem:[#allocation10 + $0x9]]
        %v1119 = vstv %s1118
        %v1120 = vadd.f32 %v1119, 0.0
        %s1121 = sld [smem:[#allocation9 + $0x1b]]
        %v1122 = vstv %s1121
        %v1123 = vmul.f32 %v959, %v1122
        %v1124 = vadd.f32 %v1120, %v1123
        %s1125 = sld [smem:[#allocation9 + $0x1c]]
        %v1126 = vstv %s1125
        %v1127 = vmul.f32 %v962, %v1126
        %v1128 = vadd.f32 %v1124, %v1127
        %s1129 = sld [smem:[#allocation9 + $0x1d]]
        %v1130 = vstv %s1129
        %v1131 = vmul.f32 %v965, %v1130
        %v1132 = vadd.f32 %v1128, %v1131
        %s1133 = scalar_lea.vmem %s294, 36 [#allocation12]
        %1134 = vst [vmem:[%s1133] sm:$0xf] %v1132
        %s1135 = sld [smem:[#allocation10 + $0xa]]
        %v1136 = vstv %s1135
        %v1137 = vadd.f32 %v1136, 0.0
        %s1138 = sld [smem:[#allocation9 + $0x1e]]
        %v1139 = vstv %s1138
        %v1140 = vmul.f32 %v959, %v1139
        %v1141 = vadd.f32 %v1137, %v1140
        %s1142 = sld [smem:[#allocation9 + $0x1f]]
        %v1143 = vstv %s1142
        %v1144 = vmul.f32 %v962, %v1143
        %v1145 = vadd.f32 %v1141, %v1144
        %s1146 = sld [smem:[#allocation9 + $0x20]]
        %v1147 = vstv %s1146
        %v1148 = vmul.f32 %v965, %v1147
        %v1149 = vadd.f32 %v1145, %v1148
        %s1150 = scalar_lea.vmem %s294, 40 [#allocation12]
        %1151 = vst [vmem:[%s1150] sm:$0xf] %v1149
        %s1152 = sld [smem:[#allocation10 + $0xb]]
        %v1153 = vstv %s1152
        %v1154 = vadd.f32 %v1153, 0.0
        %s1155 = sld [smem:[#allocation9 + $0x21]]
        %v1156 = vstv %s1155
        %v1157 = vmul.f32 %v959, %v1156
        %v1158 = vadd.f32 %v1154, %v1157
        %s1159 = sld [smem:[#allocation9 + $0x22]]
        %v1160 = vstv %s1159
        %v1161 = vmul.f32 %v962, %v1160
        %v1162 = vadd.f32 %v1158, %v1161
        %s1163 = sld [smem:[#allocation9 + $0x23]]
        %v1164 = vstv %s1163
        %v1165 = vmul.f32 %v965, %v1164
        %v1166 = vadd.f32 %v1162, %v1165
        %s1167 = scalar_lea.vmem %s294, 44 [#allocation12]
        %1168 = vst [vmem:[%s1167] sm:$0xf] %v1166
        %s1169 = sld [smem:[#allocation10 + $0xc]]
        %v1170 = vstv %s1169
        %v1171 = vadd.f32 %v1170, 0.0
        %s1172 = sld [smem:[#allocation9 + $0x24]]
        %v1173 = vstv %s1172
        %v1174 = vmul.f32 %v959, %v1173
        %v1175 = vadd.f32 %v1171, %v1174
        %s1176 = sld [smem:[#allocation9 + $0x25]]
        %v1177 = vstv %s1176
        %v1178 = vmul.f32 %v962, %v1177
        %v1179 = vadd.f32 %v1175, %v1178
        %s1180 = sld [smem:[#allocation9 + $0x26]]
        %v1181 = vstv %s1180
        %v1182 = vmul.f32 %v965, %v1181
        %v1183 = vadd.f32 %v1179, %v1182
        %s1184 = scalar_lea.vmem %s294, 48 [#allocation12]
        %1185 = vst [vmem:[%s1184] sm:$0xf] %v1183
        %s1186 = sld [smem:[#allocation10 + $0xd]]
        %v1187 = vstv %s1186
        %v1188 = vadd.f32 %v1187, 0.0
        %s1189 = sld [smem:[#allocation9 + $0x27]]
        %v1190 = vstv %s1189
        %v1191 = vmul.f32 %v959, %v1190
        %v1192 = vadd.f32 %v1188, %v1191
        %s1193 = sld [smem:[#allocation9 + $0x28]]
        %v1194 = vstv %s1193
        %v1195 = vmul.f32 %v962, %v1194
        %v1196 = vadd.f32 %v1192, %v1195
        %s1197 = sld [smem:[#allocation9 + $0x29]]
        %v1198 = vstv %s1197
        %v1199 = vmul.f32 %v965, %v1198
        %v1200 = vadd.f32 %v1196, %v1199
        %s1201 = scalar_lea.vmem %s294, 52 [#allocation12]
        %1202 = vst [vmem:[%s1201] sm:$0xf] %v1200
        %s1203 = sld [smem:[#allocation10 + $0xe]]
        %v1204 = vstv %s1203
        %v1205 = vadd.f32 %v1204, 0.0
        %s1206 = sld [smem:[#allocation9 + $0x2a]]
        %v1207 = vstv %s1206
        %v1208 = vmul.f32 %v959, %v1207
        %v1209 = vadd.f32 %v1205, %v1208
        %s1210 = sld [smem:[#allocation9 + $0x2b]]
        %v1211 = vstv %s1210
        %v1212 = vmul.f32 %v962, %v1211
        %v1213 = vadd.f32 %v1209, %v1212
        %s1214 = sld [smem:[#allocation9 + $0x2c]]
        %v1215 = vstv %s1214
        %v1216 = vmul.f32 %v965, %v1215
        %v1217 = vadd.f32 %v1213, %v1216
        %s1218 = scalar_lea.vmem %s294, 56 [#allocation12]
        %1219 = vst [vmem:[%s1218] sm:$0xf] %v1217
        %s1220 = sld [smem:[#allocation10 + $0xf]]
        %v1221 = vstv %s1220
        %v1222 = vadd.f32 %v1221, 0.0
        %s1223 = sld [smem:[#allocation9 + $0x2d]]
        %v1224 = vstv %s1223
        %v1225 = vmul.f32 %v959, %v1224
        %v1226 = vadd.f32 %v1222, %v1225
        %s1227 = sld [smem:[#allocation9 + $0x2e]]
        %v1228 = vstv %s1227
        %v1229 = vmul.f32 %v962, %v1228
        %v1230 = vadd.f32 %v1226, %v1229
        %s1231 = sld [smem:[#allocation9 + $0x2f]]
        %v1232 = vstv %s1231
        %v1233 = vmul.f32 %v965, %v1232
        %v1234 = vadd.f32 %v1230, %v1233
        %s1235 = scalar_lea.vmem %s294, 60 [#allocation12]
        %1236 = vst [vmem:[%s1235] sm:$0xf] %v1234
        %s1237 = sld [smem:[#allocation10 + $0x10]]
        %v1238 = vstv %s1237
        %v1239 = vadd.f32 %v1238, 0.0
        %s1240 = sld [smem:[#allocation9 + $0x30]]
        %v1241 = vstv %s1240
        %v1242 = vmul.f32 %v959, %v1241
        %v1243 = vadd.f32 %v1239, %v1242
        %s1244 = sld [smem:[#allocation9 + $0x31]]
        %v1245 = vstv %s1244
        %v1246 = vmul.f32 %v962, %v1245
        %v1247 = vadd.f32 %v1243, %v1246
        %s1248 = sld [smem:[#allocation9 + $0x32]]
        %v1249 = vstv %s1248
        %v1250 = vmul.f32 %v965, %v1249
        %v1251 = vadd.f32 %v1247, %v1250
        %s1252 = scalar_lea.vmem %s294, 64 [#allocation12]
        %1253 = vst [vmem:[%s1252] sm:$0xf] %v1251
        %s1254 = sld [smem:[#allocation10 + $0x11]]
        %v1255 = vstv %s1254
        %v1256 = vadd.f32 %v1255, 0.0
        %s1257 = sld [smem:[#allocation9 + $0x33]]
        %v1258 = vstv %s1257
        %v1259 = vmul.f32 %v959, %v1258
        %v1260 = vadd.f32 %v1256, %v1259
        %s1261 = sld [smem:[#allocation9 + $0x34]]
        %v1262 = vstv %s1261
        %v1263 = vmul.f32 %v962, %v1262
        %v1264 = vadd.f32 %v1260, %v1263
        %s1265 = sld [smem:[#allocation9 + $0x35]]
        %v1266 = vstv %s1265
        %v1267 = vmul.f32 %v965, %v1266
        %v1268 = vadd.f32 %v1264, %v1267
        %s1269 = scalar_lea.vmem %s294, 68 [#allocation12]
        %1270 = vst [vmem:[%s1269] sm:$0xf] %v1268
        %s1271 = sld [smem:[#allocation10 + $0x12]]
        %v1272 = vstv %s1271
        %v1273 = vadd.f32 %v1272, 0.0
        %s1274 = sld [smem:[#allocation9 + $0x36]]
        %v1275 = vstv %s1274
        %v1276 = vmul.f32 %v959, %v1275
        %v1277 = vadd.f32 %v1273, %v1276
        %s1278 = sld [smem:[#allocation9 + $0x37]]
        %v1279 = vstv %s1278
        %v1280 = vmul.f32 %v962, %v1279
        %v1281 = vadd.f32 %v1277, %v1280
        %s1282 = sld [smem:[#allocation9 + $0x38]]
        %v1283 = vstv %s1282
        %v1284 = vmul.f32 %v965, %v1283
        %v1285 = vadd.f32 %v1281, %v1284
        %s1286 = scalar_lea.vmem %s294, 72 [#allocation12]
        %1287 = vst [vmem:[%s1286] sm:$0xf] %v1285
        %s1288 = sld [smem:[#allocation10 + $0x13]]
        %v1289 = vstv %s1288
        %v1290 = vadd.f32 %v1289, 0.0
        %s1291 = sld [smem:[#allocation9 + $0x39]]
        %v1292 = vstv %s1291
        %v1293 = vmul.f32 %v959, %v1292
        %v1294 = vadd.f32 %v1290, %v1293
        %s1295 = sld [smem:[#allocation9 + $0x3a]]
        %v1296 = vstv %s1295
        %v1297 = vmul.f32 %v962, %v1296
        %v1298 = vadd.f32 %v1294, %v1297
        %s1299 = sld [smem:[#allocation9 + $0x3b]]
        %v1300 = vstv %s1299
        %v1301 = vmul.f32 %v965, %v1300
        %v1302 = vadd.f32 %v1298, %v1301
        %s1303 = scalar_lea.vmem %s294, 76 [#allocation12]
        %1304 = vst [vmem:[%s1303] sm:$0xf] %v1302
        %s1305 = sld [smem:[#allocation10 + $0x14]]
        %v1306 = vstv %s1305
        %v1307 = vadd.f32 %v1306, 0.0
        %s1308 = sld [smem:[#allocation9 + $0x3c]]
        %v1309 = vstv %s1308
        %v1310 = vmul.f32 %v959, %v1309
        %v1311 = vadd.f32 %v1307, %v1310
        %s1312 = sld [smem:[#allocation9 + $0x3d]]
        %v1313 = vstv %s1312
        %v1314 = vmul.f32 %v962, %v1313
        %v1315 = vadd.f32 %v1311, %v1314
        %s1316 = sld [smem:[#allocation9 + $0x3e]]
        %v1317 = vstv %s1316
        %v1318 = vmul.f32 %v965, %v1317
        %v1319 = vadd.f32 %v1315, %v1318
        %s1320 = scalar_lea.vmem %s294, 80 [#allocation12]
        %1321 = vst [vmem:[%s1320] sm:$0xf] %v1319
        %s1322 = sld [smem:[#allocation10 + $0x15]]
        %v1323 = vstv %s1322
        %v1324 = vadd.f32 %v1323, 0.0
        %s1325 = sld [smem:[#allocation9 + $0x3f]]
        %v1326 = vstv %s1325
        %v1327 = vmul.f32 %v959, %v1326
        %v1328 = vadd.f32 %v1324, %v1327
        %s1329 = sld [smem:[#allocation9 + $0x40]]
        %v1330 = vstv %s1329
        %v1331 = vmul.f32 %v962, %v1330
        %v1332 = vadd.f32 %v1328, %v1331
        %s1333 = sld [smem:[#allocation9 + $0x41]]
        %v1334 = vstv %s1333
        %v1335 = vmul.f32 %v965, %v1334
        %v1336 = vadd.f32 %v1332, %v1335
        %s1337 = scalar_lea.vmem %s294, 84 [#allocation12]
        %1338 = vst [vmem:[%s1337] sm:$0xf] %v1336
        %s1339 = sld [smem:[#allocation10 + $0x16]]
        %v1340 = vstv %s1339
        %v1341 = vadd.f32 %v1340, 0.0
        %s1342 = sld [smem:[#allocation9 + $0x42]]
        %v1343 = vstv %s1342
        %v1344 = vmul.f32 %v959, %v1343
        %v1345 = vadd.f32 %v1341, %v1344
        %s1346 = sld [smem:[#allocation9 + $0x43]]
        %v1347 = vstv %s1346
        %v1348 = vmul.f32 %v962, %v1347
        %v1349 = vadd.f32 %v1345, %v1348
        %s1350 = sld [smem:[#allocation9 + $0x44]]
        %v1351 = vstv %s1350
        %v1352 = vmul.f32 %v965, %v1351
        %v1353 = vadd.f32 %v1349, %v1352
        %s1354 = scalar_lea.vmem %s294, 88 [#allocation12]
        %1355 = vst [vmem:[%s1354] sm:$0xf] %v1353
        %s1356 = sld [smem:[#allocation10 + $0x17]]
        %v1357 = vstv %s1356
        %v1358 = vadd.f32 %v1357, 0.0
        %s1359 = sld [smem:[#allocation9 + $0x45]]
        %v1360 = vstv %s1359
        %v1361 = vmul.f32 %v959, %v1360
        %v1362 = vadd.f32 %v1358, %v1361
        %s1363 = sld [smem:[#allocation9 + $0x46]]
        %v1364 = vstv %s1363
        %v1365 = vmul.f32 %v962, %v1364
        %v1366 = vadd.f32 %v1362, %v1365
        %s1367 = sld [smem:[#allocation9 + $0x47]]
        %v1368 = vstv %s1367
        %v1369 = vmul.f32 %v965, %v1368
        %v1370 = vadd.f32 %v1366, %v1369
        %s1371 = scalar_lea.vmem %s294, 92 [#allocation12]
        %1372 = vst [vmem:[%s1371] sm:$0xf] %v1370
        %s1373 = sand.u32 %s143, 1
        %s1374 = scalar_lea.sflag [#allocation4], %s1373
        %s1375 = sand.u32 %s143, 1
        %s1376 = smul.addr %s1375, 96
        %s1377 = scalar_lea.vmem [#allocation12], %s1376
        // Predicated region
        $region61: #{tpu_custom_call.1} parent=39 // pred_check
          %p1378 = pneg %p153
        $region62: #{tpu_custom_call.1} parent=39 // pred_check_branch
          %1380 = sbr.rel (%p1378) target = $region64
        $region63: #{tpu_custom_call.1} parent=39 // pred_region
          %s1382 = ssub.s32 1536, 1536
          %1383 = vsyncadd %s1374, %s1382
          %s1384 = smul.addr %s25, 24
          %s1385 = smul.addr %s1384, 64
          %s1386 = scalar_lea.hbm %s5, %s1385
          %s1387 = sshll.u32 %s1377, 4
          %s1388 = int_to_ptr.vmem [resolvable:$true] %s1387
          %1393 = dma.vmem_to_hbm [thread:$0]  %s1388, 1536, %s1386, %s1374, 64, 64, 4
        $region64: #{tpu_custom_call.1} parent=39 // pred_fallthru
          _
      $region40: #{tpu_custom_call.1} parent=5 // pred_fallthru
        _
      %p1394 = scmp.le.s32.totalorder 2, %s20
      // Predicated region
      $region65: #{tpu_custom_call.1} parent=5 // pred_check
        %p1395 = pneg %p1394
      $region66: #{tpu_custom_call.1} parent=5 // pred_check_branch
        %1397 = sbr.rel (%p1395) target = $region68
      $region67: #{tpu_custom_call.1} parent=5 // pred_region
        %s1398 = ssub.s32 %s20, 2
        // Predicated region
        $region69: #{tpu_custom_call.1} parent=67 // pred_check
          %p1399 = pneg %p159
        $region70: #{tpu_custom_call.1} parent=67 // pred_check_branch
          %1401 = sbr.rel (%p1399) target = $region72
        $region71: #{tpu_custom_call.1} parent=67 // pred_region
          %s1402 = sand.u32 %s144, 1
          %s1403 = scalar_lea.sflag [#allocation4], %s1402
          %s1404 = sand.u32 %s144, 1
          %s1405 = smul.addr %s1404, 96
          %s1406 = scalar_lea.vmem [#allocation12], %s1405
          %1407 = dma.done %s1403, 1536
        $region72: #{tpu_custom_call.1} parent=67 // pred_fallthru
          _
      $region68: #{tpu_custom_call.1} parent=5 // pred_fallthru
        _
    $region6: #{tpu_custom_call.1} parent=1 // loop_footer
      %s24 = sadd.s32 1, %s20
    $region7: #{tpu_custom_call.1} parent=1 // loop_footer_branch
      %19 = sbr.rel target = $region3
    $region8: #{tpu_custom_call.1} parent=1 // loop_exit
      _
    %1408 = vsyncpa [#allocation3], 1
    %s1409 = scalar_lea.sflag [#allocation3], 1
    %1410 = vsyncpa %s1409, 1
    %1411 = vsyncpa [#allocation4], 1
    %s1412 = scalar_lea.sflag [#allocation4], 1
    %1413 = vsyncpa %s1412, 1
    %1414 = vsyncpa [#allocation5], 1
    %s1415 = scalar_lea.sflag [#allocation5], 1
    %1416 = vsyncpa %s1415, 1
    %1417 = vsyncpa [#allocation8], 1
    %1418 = vsyncpa [#allocation11], 1

</llo_original>
